<compile_context>
chip_gen: v6e
topology: v6e:2x2x1
jax: 0.10.0
libtpu: 0.0.40
codegen_flags: <defaults>
</compile_context>

<pallas_src>
import functools

import jax
import jax.numpy as jnp
import numpy as np
from jax.experimental import pallas as pl
from jax.experimental.pallas import tpu as pltpu


# --------------------------------------------------------------------------
# helpers
# --------------------------------------------------------------------------
def _round_up(x, m):
    return ((x + m - 1) // m) * m


def _pick_tm(m):
    if m >= 4096:
        return 512
    if m >= 256:
        return 256
    return _round_up(m, 8)


_VMEM_LIMIT = 32 * 1024 * 1024  # safe scoped-VMEM limit on v5e / v6e / v7x


# --------------------------------------------------------------------------
# Pallas kernel 1: matmul (bf16 x bf16 -> f32 accum), optional bias+tanh epilogue
# --------------------------------------------------------------------------
def _mm_kernel(x_ref, w_ref, o_ref):
    o_ref[...] = jnp.dot(x_ref[...], w_ref[...], preferred_element_type=jnp.float32)


def _mm_bias_tanh_kernel(x_ref, w_ref, b_ref, o_ref):
    acc = jnp.dot(x_ref[...], w_ref[...], preferred_element_type=jnp.float32)
    o_ref[...] = jnp.tanh(acc + b_ref[...])


def matmul_pallas(x, w_padded, bias_padded=None, fuse_tanh=False):
    """x: (M, K) float; w_padded: (Kp, Np) bf16 (pre-padded to 128 multiples);
    bias_padded: (1, Np) f32 or None.  Returns f32 (M, Np)."""
    M, K = x.shape
    Kp, Np = w_padded.shape
    TM = _pick_tm(M)
    Mp = _round_up(M, TM)
    xp = x.astype(jnp.bfloat16)
    if (Mp, Kp) != (M, K):
        xp = jnp.pad(xp, ((0, Mp - M), (0, Kp - K)))

    cparams = pltpu.CompilerParams(
        dimension_semantics=("parallel",), vmem_limit_bytes=_VMEM_LIMIT)

    if bias_padded is None:
        out = pl.pallas_call(
            _mm_kernel,
            out_shape=jax.ShapeDtypeStruct((Mp, Np), jnp.float32),
            grid=(Mp // TM,),
            in_specs=[pl.BlockSpec((TM, Kp), lambda i: (i, 0)),
                      pl.BlockSpec((Kp, Np), lambda i: (0, 0))],
            out_specs=pl.BlockSpec((TM, Np), lambda i: (i, 0)),
            compiler_params=cparams,
        )(xp, w_padded)
    else:
        assert fuse_tanh, "bias is only used by the fused tanh (layer4) path"
        out = pl.pallas_call(
            _mm_bias_tanh_kernel,
            out_shape=jax.ShapeDtypeStruct((Mp, Np), jnp.float32),
            grid=(Mp // TM,),
            in_specs=[pl.BlockSpec((TM, Kp), lambda i: (i, 0)),
                      pl.BlockSpec((Kp, Np), lambda i: (0, 0)),
                      pl.BlockSpec((1, Np), lambda i: (0, 0))],
            out_specs=pl.BlockSpec((TM, Np), lambda i: (i, 0)),
            compiler_params=cparams,
        )(xp, w_padded, bias_padded)
    return out[:M]


# --------------------------------------------------------------------------
# Pallas kernel 2: fused per-channel (scale * y + shift) + activation
# --------------------------------------------------------------------------
def _scale_act_kernel(y_ref, s_ref, t_ref, o_ref, *, act):
    y = y_ref[...] * s_ref[...] + t_ref[...]
    if act == "relu":
        y = jnp.maximum(y, 0.0)
    elif act == "lrelu":
        y = jnp.where(y > 0, y, 0.2 * y)
    o_ref[...] = y.astype(o_ref.dtype)


def scale_shift_act(y, scale, shift, act, out_dtype=jnp.bfloat16):
    """y: (M, C) f32, scale/shift: (C,) -> act(y * scale + shift) in out_dtype."""
    M, C = y.shape
    Cp = _round_up(C, 128)
    TM = _pick_tm(M)
    Mp = _round_up(M, TM)
    if (Mp, Cp) != (M, C):
        y = jnp.pad(y, ((0, Mp - M), (0, Cp - C)))
    sp = jnp.pad(scale.astype(jnp.float32), (0, Cp - C)).reshape(1, Cp)
    tp = jnp.pad(shift.astype(jnp.float32), (0, Cp - C)).reshape(1, Cp)

    out = pl.pallas_call(
        functools.partial(_scale_act_kernel, act=act),
        out_shape=jax.ShapeDtypeStruct((Mp, Cp), out_dtype),
        grid=(Mp // TM,),
        in_specs=[pl.BlockSpec((TM, Cp), lambda i: (i, 0)),
                  pl.BlockSpec((1, Cp), lambda i: (0, 0)),
                  pl.BlockSpec((1, Cp), lambda i: (0, 0))],
        out_specs=pl.BlockSpec((TM, Cp), lambda i: (i, 0)),
        compiler_params=pltpu.CompilerParams(
            dimension_semantics=("parallel",), vmem_limit_bytes=_VMEM_LIMIT),
    )(y, sp, tp)
    return out[:M, :C]


# --------------------------------------------------------------------------
# BatchNorm (training mode) helpers — stats via small XLA reductions
# --------------------------------------------------------------------------
def _bn_scale_shift(rows_f32, gamma, beta, eps=1e-5):
    mean = jnp.mean(rows_f32, axis=0)
    var = jnp.mean(jnp.square(rows_f32 - mean), axis=0)  # biased, as PyTorch normalizes
    scale = gamma * jax.lax.rsqrt(var + eps)
    shift = beta - mean * scale
    return scale, shift


def batchnorm_act_rows(y, gamma, beta, act, out_dtype=jnp.bfloat16):
    scale, shift = _bn_scale_shift(y, gamma, beta)
    return scale_shift_act(y, scale, shift, act, out_dtype)


def batchnorm_act_nhwc(x, gamma, beta, act, out_dtype=jnp.bfloat16):
    B, H, W, C = x.shape
    scale, shift = _bn_scale_shift(x.reshape(-1, C), gamma, beta)
    # fold W into the lane axis so the elementwise kernel is lane-dense (W*C >= 128)
    y2 = x.reshape(B * H, W * C)
    out2 = scale_shift_act(y2, jnp.tile(scale, W), jnp.tile(shift, W), act, out_dtype)
    return out2.reshape(B, H, W, C)


# --------------------------------------------------------------------------
# Phase-decomposed ConvTranspose2d(k=4, s=2, p=1) glue (pure data movement)
# --------------------------------------------------------------------------
def im2col_2x2(x_nhwc):
    """x: (B,H,W,C) -> (B*(H+1)*(W+1), 4*C); 2x2 window taps ordered
    (wy,wx) = (0,0),(0,1),(1,0),(1,1) with channels innermost."""
    B, H, W, C = x_nhwc.shape
    xp = jnp.pad(x_nhwc, ((0, 0), (1, 1), (1, 1), (0, 0)))
    cols = [xp[:, wy:wy + H + 1, wx:wx + W + 1, :] for wy in (0, 1) for wx in (0, 1)]
    z = jnp.concatenate(cols, axis=-1)
    return z.reshape(B * (H + 1) * (W + 1), 4 * C)


def phase_to_nhwc(y_phase, B, H, W, Cout):
    """y_phase: (B*(H+1)*(W+1), >=4*Cout), columns ordered (dy,dx,cout).
    Window (i,j), phase (dy,dx) holds output pixel (2i-1+dy, 2j-1+dx);
    reassemble and drop the out-of-range border entries -> (B, 2H, 2W, Cout)."""
    y = y_phase[:, :4 * Cout].reshape(B, H + 1, W + 1, 2, 2, Cout)
    y = y.transpose(0, 1, 3, 2, 4, 5).reshape(B, 2 * H + 2, 2 * W + 2, Cout)
    return y[:, 1:2 * H + 1, 1:2 * W + 1, :]


def _phase_weight(w):
    """PyTorch ConvTranspose2d weight (Cin, Cout, 4, 4) -> (4*Cin, 4*Cout) so that
    im2col_2x2(x) @ result is the phase-layout transposed-conv output.
    Tap (wy,wx) of phase (dy,dx) uses kernel element (2+dy-2*wy, 2+dx-2*wx)."""
    cin, cout = w.shape[0], w.shape[1]
    wm = jnp.zeros((2, 2, cin, 2, 2, cout), w.dtype)
    for wy in range(2):
        for wx in range(2):
            for dy in range(2):
                for dx in range(2):
                    wm = wm.at[wy, wx, :, dy, dx, :].set(
                        w[:, :, 2 + dy - 2 * wy, 2 + dx - 2 * wx])
    return wm.reshape(4 * cin, 4 * cout)


def _pad_kn(w2d):
    k, n = w2d.shape
    return jnp.pad(w2d, ((0, _round_up(k, 128) - k), (0, _round_up(n, 128) - n)))


# --------------------------------------------------------------------------
# Parameters
# --------------------------------------------------------------------------
def init_params(key, nz=100, nch_g=16, nch=3, embed_dim=768, proj_dim=128):
    """PyTorch-layout parameters (mirrors the nn.Module)."""
    ks = jax.random.split(key, 32)
    it = iter(ks)
    nrm = lambda k, shape, s=0.02: s * jax.random.normal(k, shape, jnp.float32)

    latent = nz + proj_dim
    chans = [latent, nch_g * 8, nch_g * 4, nch_g * 2, nch_g, nch]

    p = {
        "proj_w": nrm(next(it), (embed_dim, proj_dim)),
        "proj_b": nrm(next(it), (proj_dim,), 0.01),  # cancelled by train-mode BN
        "proj_g": 1.0 + nrm(next(it), (proj_dim,)),
        "proj_be": nrm(next(it), (proj_dim,), 0.01),
    }
    for li in range(5):
        cin, cout = chans[li], chans[li + 1]
        p[f"w{li}"] = nrm(next(it), (cin, cout, 4, 4))      # PyTorch ConvT layout
        p[f"b{li}"] = nrm(next(it), (cout,), 0.01)          # only b4 is consumed
        if li < 4:  # layer4 has no BatchNorm
            p[f"g{li}"] = 1.0 + nrm(next(it), (cout,))
            p[f"be{li}"] = nrm(next(it), (cout,), 0.01)
    return p


def prepare_params(params):
    """One-time (outside the jitted hot path) conversion to matmul-ready,
    128-padded, bf16 weight matrices.  Biases preceding training-mode BatchNorm
    are dropped (exact cancellation by the batch-mean subtraction)."""
    pr = {}
    pr["proj_w"] = _pad_kn(params["proj_w"]).astype(jnp.bfloat16)       # (768, 128)
    pr["proj_g"], pr["proj_be"] = params["proj_g"], params["proj_be"]

    w0 = params["w0"]                                                   # (latent, C0, 4, 4)
    latent, c0 = w0.shape[0], w0.shape[1]
    w0m = w0.transpose(0, 2, 3, 1).reshape(latent, 16 * c0)             # cols = (oy, ox, cout)
    pr["w0"] = _pad_kn(w0m).astype(jnp.bfloat16)
    pr["g0"], pr["be0"] = params["g0"], params["be0"]

    for li in (1, 2, 3, 4):
        wm = _phase_weight(params[f"w{li}"])
        pr[f"w{li}"] = _pad_kn(wm).astype(jnp.bfloat16)
        if li < 4:
            pr[f"g{li}"], pr[f"be{li}"] = params[f"g{li}"], params[f"be{li}"]

    cout4 = params["w4"].shape[1]
    np4 = pr["w4"].shape[1]
    b4 = jnp.tile(params["b4"], 4)                                      # one copy per phase
    pr["b4"] = jnp.pad(b4, (0, np4 - 4 * cout4)).reshape(1, np4).astype(jnp.float32)
    return pr


# --------------------------------------------------------------------------
# Forward
# --------------------------------------------------------------------------
def generator_forward(prepared, embed_vector, z, *, nch_g=64, nch=3):
    """embed_vector: (B, 768); z: (B, nz, 1, 1) NCHW.  Returns (B, nch, 64, 64)."""
    B = embed_vector.shape[0]

    # projection: Linear (bias cancelled by BN) -> BatchNorm1d -> LeakyReLU(0.2)
    h = matmul_pallas(embed_vector, prepared["proj_w"])                  # (B, 128) f32
    h = batchnorm_act_rows(h, prepared["proj_g"], prepared["proj_be"], "lrelu")

    # cat([projected_embed, z], dim=1) on the channel axis
    latent = jnp.concatenate([h.astype(jnp.float32), z.reshape(B, -1)], axis=1)

    # layer0: ConvT(latent, 8g, k4, s1, p0) == matmul to (B, 4, 4, 8g) NHWC, + BN + ReLU
    c0 = nch_g * 8
    y0 = matmul_pallas(latent, prepared["w0"])[:, :16 * c0]
    x = batchnorm_act_nhwc(y0.reshape(B, 4, 4, c0),
                           prepared["g0"], prepared["be0"], "relu")

    # layers 1-3: phase-decomposed ConvT(k4, s2, p1) + BN + ReLU  (4->8->16->32)
    for li, cout in ((1, nch_g * 4), (2, nch_g * 2), (3, nch_g)):
        Bv, H, W, _ = x.shape
        yph = matmul_pallas(im2col_2x2(x), prepared[f"w{li}"])
        xo = phase_to_nhwc(yph, Bv, H, W, cout)                          # f32 NHWC
        x = batchnorm_act_nhwc(xo, prepared[f"g{li}"], prepared[f"be{li}"], "relu")

    # layer4: phase-decomposed ConvT(k4, s2, p1) with bias + tanh fused in the epilogue
    Bv, H, W, _ = x.shape
    yph = matmul_pallas(im2col_2x2(x), prepared["w4"],
                        bias_padded=prepared["b4"], fuse_tanh=True)
    out = phase_to_nhwc(yph, Bv, H, W, nch)                              # (B, 64, 64, nch)
    return out.transpose(0, 3, 1, 2)                                     # single NCHW transpose


# --------------------------------------------------------------------------
# self-check of the phase decomposition (host f32 math vs. direct loops)
# --------------------------------------------------------------------------
def _self_check_phase_decomposition():
    rng = np.random.RandomState(0)
    B, Cin, Cout, H, W = 1, 3, 2, 3, 2
    x = rng.randn(B, H, W, Cin).astype(np.float32)
    wt = rng.randn(Cin, Cout, 4, 4).astype(np.float32)
    ref = np.zeros((B, 2 * H, 2 * W, Cout), np.float32)
    for b in range(B):
        for iy in range(H):
            for ix in range(W):
                for ky in range(4):
                    for kx in range(4):
                        oy, ox = 2 * iy - 1 + ky, 2 * ix - 1 + kx
                        if 0 <= oy < 2 * H and 0 <= ox < 2 * W:
                            ref[b, oy, ox, :] += x[b, iy, ix, :] @ wt[:, :, ky, kx]
    z = np.asarray(im2col_2x2(jnp.asarray(x)), np.float32)
    wm = np.asarray(_phase_weight(jnp.asarray(wt)), np.float32)
    got = np.asarray(phase_to_nhwc(jnp.asarray(z @ wm), B, H, W, Cout))
    assert np.allclose(got, ref, atol=1e-3, rtol=1e-3), float(np.abs(got - ref).max())


# --------------------------------------------------------------------------
if __name__ == "__main__":
    _self_check_phase_decomposition()

    key = jax.random.PRNGKey(0)
    k_par, k_emb, k_z = jax.random.split(key, 3)

    B, NZ, NCH_G, NCH, EMBED = 2, 100, 16, 3, 768  # small but shape-consistent

    params = init_params(k_par, nz=NZ, nch_g=NCH_G, nch=NCH, embed_dim=EMBED)
    prepared = prepare_params(params)              # weight prep outside the jitted forward

    embed_vector = jax.random.normal(k_emb, (B, EMBED), jnp.float32)
    z = jax.random.normal(k_z, (B, NZ, 1, 1), jnp.float32)

    fwd = jax.jit(functools.partial(generator_forward, nch_g=NCH_G, nch=NCH))
    out = fwd(prepared, embed_vector, z)
    out = jax.block_until_ready(out)

    assert out.shape == (B, NCH, 64, 64), out.shape
    assert bool(jnp.all(jnp.isfinite(out)))
    assert bool(jnp.all(jnp.abs(out) <= 1.0 + 1e-6))  # tanh range
    print("KERNEL_OK")
</pallas_src>

<mosaic_0001>
module attributes {stable_mosaic.version = 11 : i64} {
  func.func @_mm_kernel(%arg0: i32, %arg1: memref<8x768xbf16, #tpu.memory_space<vmem>>, %arg2: memref<768x128xbf16, #tpu.memory_space<vmem>>, %arg3: memref<8x128xf32, #tpu.memory_space<vmem>>) attributes {dimension_semantics = [#tpu.dimension_semantics<parallel>], iteration_bounds = array<i64: 1>, scalar_prefetch = 0 : i64, scratch_operands = 0 : i64, tpu.core_type = #tpu.core_type<tc>, window_params = [{transform_indices = @transform_0, window_bounds = array<i64: 8, 768>}, {pipeline_mode = #tpu.pipeline_mode<synchronous>, transform_indices = @transform_1, window_bounds = array<i64: 768, 128>}, {transform_indices = @transform_2, window_bounds = array<i64: 8, 128>}]} {
    %c0 = arith.constant 0 : index
    %c0_0 = arith.constant 0 : index
    %0 = vector.load %arg1[%c0, %c0_0] : memref<8x768xbf16, #tpu.memory_space<vmem>>, vector<8x768xbf16>
    %c0_1 = arith.constant 0 : index
    %c0_2 = arith.constant 0 : index
    %1 = vector.load %arg2[%c0_1, %c0_2] : memref<768x128xbf16, #tpu.memory_space<vmem>>, vector<768x128xbf16>
    %cst = arith.constant dense<0.000000e+00> : vector<8x128xf32>
    %2 = tpu.matmul %0, %1, %cst {dimension_numbers = #tpu.dot_dimension_numbers<[1], [0], [0], [1], [0, 0, 1, 1], [], []>} : vector<8x768xbf16>, vector<768x128xbf16>, vector<8x128xf32> -> vector<8x128xf32>
    %c0_3 = arith.constant 0 : index
    %c0_4 = arith.constant 0 : index
    %3 = vector.load %arg3[%c0_3, %c0_4] : memref<8x128xf32, #tpu.memory_space<vmem>>, vector<8x128xf32>
    tpu.vector_store %arg3[%c0_3, %c0_4], %2 {strides = array<i32>} : memref<8x128xf32, #tpu.memory_space<vmem>>, vector<8x128xf32>,
    return
  }
  func.func @transform_0(%arg0: i32) -> (i32, i32) {
    %c0_i32 = arith.constant 0 : i32
    %c0_i32_0 = arith.constant 0 : i32
    return %arg0, %c0_i32 : i32, i32
  }
  func.func @transform_1(%arg0: i32) -> (i32, i32) {
    %c0_i32 = arith.constant 0 : i32
    %c0_i32_0 = arith.constant 0 : i32
    %c0_i32_1 = arith.constant 0 : i32
    return %c0_i32, %c0_i32_0 : i32, i32
  }
  func.func @transform_2(%arg0: i32) -> (i32, i32) {
    %c0_i32 = arith.constant 0 : i32
    %c0_i32_0 = arith.constant 0 : i32
    return %arg0, %c0_i32 : i32, i32
  }
}

module attributes {stable_mosaic.version = 11 : i64} {
  func.func @_scale_act_kernel(%arg0: i32, %arg1: memref<8x128xf32, #tpu.memory_space<vmem>>, %arg2: memref<1x128xf32, #tpu.memory_space<vmem>>, %arg3: memref<1x128xf32, #tpu.memory_space<vmem>>, %arg4: memref<8x128xbf16, #tpu.memory_space<vmem>>) attributes {dimension_semantics = [#tpu.dimension_semantics<parallel>], iteration_bounds = array<i64: 1>, scalar_prefetch = 0 : i64, scratch_operands = 0 : i64, tpu.core_type = #tpu.core_type<tc>, window_params = [{transform_indices = @transform_0, window_bounds = array<i64: 8, 128>}, {pipeline_mode = #tpu.pipeline_mode<synchronous>, transform_indices = @transform_1, window_bounds = array<i64: 1, 128>}, {pipeline_mode = #tpu.pipeline_mode<synchronous>, transform_indices = @transform_2, window_bounds = array<i64: 1, 128>}, {transform_indices = @transform_3, window_bounds = array<i64: 8, 128>}]} {
    %c0 = arith.constant 0 : index
    %c0_0 = arith.constant 0 : index
    %0 = vector.load %arg1[%c0, %c0_0] : memref<8x128xf32, #tpu.memory_space<vmem>>, vector<8x128xf32>
    %c0_1 = arith.constant 0 : index
    %c0_2 = arith.constant 0 : index
    %1 = vector.load %arg2[%c0_1, %c0_2] : memref<1x128xf32, #tpu.memory_space<vmem>>, vector<1x128xf32>
    %2 = vector.broadcast %1 : vector<1x128xf32> to vector<8x128xf32>
    %3 = arith.mulf %0, %2 : vector<8x128xf32>
    %c0_3 = arith.constant 0 : index
    %c0_4 = arith.constant 0 : index
    %4 = vector.load %arg3[%c0_3, %c0_4] : memref<1x128xf32, #tpu.memory_space<vmem>>, vector<1x128xf32>
    %5 = vector.broadcast %4 : vector<1x128xf32> to vector<8x128xf32>
    %6 = arith.addf %3, %5 : vector<8x128xf32>
    %cst = arith.constant 0.000000e+00 : f32
    %7 = vector.broadcast %cst : f32 to vector<8x128xf32>
    %8 = arith.cmpf ogt, %6, %7 : vector<8x128xf32>
    %cst_5 = arith.constant 2.000000e-01 : f32
    %9 = vector.broadcast %cst_5 : f32 to vector<8x128xf32>
    %10 = arith.mulf %9, %6 : vector<8x128xf32>
    %11 = arith.select %8, %6, %10 : vector<8x128xi1>, vector<8x128xf32>
    %12 = arith.truncf %11 : vector<8x128xf32> to vector<8x128xbf16>
    %c0_6 = arith.constant 0 : index
    %c0_7 = arith.constant 0 : index
    %13 = vector.load %arg4[%c0_6, %c0_7] : memref<8x128xbf16, #tpu.memory_space<vmem>>, vector<8x128xbf16>
    tpu.vector_store %arg4[%c0_6, %c0_7], %12 {strides = array<i32>} : memref<8x128xbf16, #tpu.memory_space<vmem>>, vector<8x128xbf16>,
    return
  }
  func.func @transform_0(%arg0: i32) -> (i32, i32) {
    %c0_i32 = arith.constant 0 : i32
    %c0_i32_0 = arith.constant 0 : i32
    return %arg0, %c0_i32 : i32, i32
  }
  func.func @transform_1(%arg0: i32) -> (i32, i32) {
    %c0_i32 = arith.constant 0 : i32
    %c0_i32_0 = arith.constant 0 : i32
    %c0_i32_1 = arith.constant 0 : i32
    return %c0_i32, %c0_i32_0 : i32, i32
  }
  func.func @transform_2(%arg0: i32) -> (i32, i32) {
    %c0_i32 = arith.constant 0 : i32
    %c0_i32_0 = arith.constant 0 : i32
    %c0_i32_1 = arith.constant 0 : i32
    return %c0_i32, %c0_i32_0 : i32, i32
  }
  func.func @transform_3(%arg0: i32) -> (i32, i32) {
    %c0_i32 = arith.constant 0 : i32
    %c0_i32_0 = arith.constant 0 : i32
    return %arg0, %c0_i32 : i32, i32
  }
}

module attributes {stable_mosaic.version = 11 : i64} {
  func.func @_mm_kernel(%arg0: i32, %arg1: memref<8x256xbf16, #tpu.memory_space<vmem>>, %arg2: memref<256x2048xbf16, #tpu.memory_space<vmem>>, %arg3: memref<8x2048xf32, #tpu.memory_space<vmem>>) attributes {dimension_semantics = [#tpu.dimension_semantics<parallel>], iteration_bounds = array<i64: 1>, scalar_prefetch = 0 : i64, scratch_operands = 0 : i64, tpu.core_type = #tpu.core_type<tc>, window_params = [{transform_indices = @transform_0, window_bounds = array<i64: 8, 256>}, {pipeline_mode = #tpu.pipeline_mode<synchronous>, transform_indices = @transform_1, window_bounds = array<i64: 256, 2048>}, {transform_indices = @transform_2, window_bounds = array<i64: 8, 2048>}]} {
    %c0 = arith.constant 0 : index
    %c0_0 = arith.constant 0 : index
    %0 = vector.load %arg1[%c0, %c0_0] : memref<8x256xbf16, #tpu.memory_space<vmem>>, vector<8x256xbf16>
    %c0_1 = arith.constant 0 : index
    %c0_2 = arith.constant 0 : index
    %1 = vector.load %arg2[%c0_1, %c0_2] : memref<256x2048xbf16, #tpu.memory_space<vmem>>, vector<256x2048xbf16>
    %cst = arith.constant dense<0.000000e+00> : vector<8x2048xf32>
    %2 = tpu.matmul %0, %1, %cst {dimension_numbers = #tpu.dot_dimension_numbers<[1], [0], [0], [1], [0, 0, 1, 1], [], []>} : vector<8x256xbf16>, vector<256x2048xbf16>, vector<8x2048xf32> -> vector<8x2048xf32>
    %c0_3 = arith.constant 0 : index
    %c0_4 = arith.constant 0 : index
    %3 = vector.load %arg3[%c0_3, %c0_4] : memref<8x2048xf32, #tpu.memory_space<vmem>>, vector<8x2048xf32>
    tpu.vector_store %arg3[%c0_3, %c0_4], %2 {strides = array<i32>} : memref<8x2048xf32, #tpu.memory_space<vmem>>, vector<8x2048xf32>,
    return
  }
  func.func @transform_0(%arg0: i32) -> (i32, i32) {
    %c0_i32 = arith.constant 0 : i32
    %c0_i32_0 = arith.constant 0 : i32
    return %arg0, %c0_i32 : i32, i32
  }
  func.func @transform_1(%arg0: i32) -> (i32, i32) {
    %c0_i32 = arith.constant 0 : i32
    %c0_i32_0 = arith.constant 0 : i32
    %c0_i32_1 = arith.constant 0 : i32
    return %c0_i32, %c0_i32_0 : i32, i32
  }
  func.func @transform_2(%arg0: i32) -> (i32, i32) {
    %c0_i32 = arith.constant 0 : i32
    %c0_i32_0 = arith.constant 0 : i32
    return %arg0, %c0_i32 : i32, i32
  }
}

module attributes {stable_mosaic.version = 11 : i64} {
  func.func @_scale_act_kernel(%arg0: i32, %arg1: memref<8x512xf32, #tpu.memory_space<vmem>>, %arg2: memref<1x512xf32, #tpu.memory_space<vmem>>, %arg3: memref<1x512xf32, #tpu.memory_space<vmem>>, %arg4: memref<8x512xbf16, #tpu.memory_space<vmem>>) attributes {dimension_semantics = [#tpu.dimension_semantics<parallel>], iteration_bounds = array<i64: 1>, scalar_prefetch = 0 : i64, scratch_operands = 0 : i64, tpu.core_type = #tpu.core_type<tc>, window_params = [{transform_indices = @transform_0, window_bounds = array<i64: 8, 512>}, {pipeline_mode = #tpu.pipeline_mode<synchronous>, transform_indices = @transform_1, window_bounds = array<i64: 1, 512>}, {pipeline_mode = #tpu.pipeline_mode<synchronous>, transform_indices = @transform_2, window_bounds = array<i64: 1, 512>}, {transform_indices = @transform_3, window_bounds = array<i64: 8, 512>}]} {
    %c0 = arith.constant 0 : index
    %c0_0 = arith.constant 0 : index
    %0 = vector.load %arg1[%c0, %c0_0] : memref<8x512xf32, #tpu.memory_space<vmem>>, vector<8x512xf32>
    %c0_1 = arith.constant 0 : index
    %c0_2 = arith.constant 0 : index
    %1 = vector.load %arg2[%c0_1, %c0_2] : memref<1x512xf32, #tpu.memory_space<vmem>>, vector<1x512xf32>
    %2 = vector.broadcast %1 : vector<1x512xf32> to vector<8x512xf32>
    %3 = arith.mulf %0, %2 : vector<8x512xf32>
    %c0_3 = arith.constant 0 : index
    %c0_4 = arith.constant 0 : index
    %4 = vector.load %arg3[%c0_3, %c0_4] : memref<1x512xf32, #tpu.memory_space<vmem>>, vector<1x512xf32>
    %5 = vector.broadcast %4 : vector<1x512xf32> to vector<8x512xf32>
    %6 = arith.addf %3, %5 : vector<8x512xf32>
    %cst = arith.constant 0.000000e+00 : f32
    %7 = vector.broadcast %cst : f32 to vector<8x512xf32>
    %8 = arith.maximumf %6, %7 : vector<8x512xf32>
    %9 = arith.truncf %8 : vector<8x512xf32> to vector<8x512xbf16>
    %c0_5 = arith.constant 0 : index
    %c0_6 = arith.constant 0 : index
    %10 = vector.load %arg4[%c0_5, %c0_6] : memref<8x512xbf16, #tpu.memory_space<vmem>>, vector<8x512xbf16>
    tpu.vector_store %arg4[%c0_5, %c0_6], %9 {strides = array<i32>} : memref<8x512xbf16, #tpu.memory_space<vmem>>, vector<8x512xbf16>,
    return
  }
  func.func @transform_0(%arg0: i32) -> (i32, i32) {
    %c0_i32 = arith.constant 0 : i32
    %c0_i32_0 = arith.constant 0 : i32
    return %arg0, %c0_i32 : i32, i32
  }
  func.func @transform_1(%arg0: i32) -> (i32, i32) {
    %c0_i32 = arith.constant 0 : i32
    %c0_i32_0 = arith.constant 0 : i32
    %c0_i32_1 = arith.constant 0 : i32
    return %c0_i32, %c0_i32_0 : i32, i32
  }
  func.func @transform_2(%arg0: i32) -> (i32, i32) {
    %c0_i32 = arith.constant 0 : i32
    %c0_i32_0 = arith.constant 0 : i32
    %c0_i32_1 = arith.constant 0 : i32
    return %c0_i32, %c0_i32_0 : i32, i32
  }
  func.func @transform_3(%arg0: i32) -> (i32, i32) {
    %c0_i32 = arith.constant 0 : i32
    %c0_i32_0 = arith.constant 0 : i32
    return %arg0, %c0_i32 : i32, i32
  }
}

module attributes {stable_mosaic.version = 11 : i64} {
  func.func @_mm_kernel(%arg0: i32, %arg1: memref<56x512xbf16, #tpu.memory_space<vmem>>, %arg2: memref<512x256xbf16, #tpu.memory_space<vmem>>, %arg3: memref<56x256xf32, #tpu.memory_space<vmem>>) attributes {dimension_semantics = [#tpu.dimension_semantics<parallel>], iteration_bounds = array<i64: 1>, scalar_prefetch = 0 : i64, scratch_operands = 0 : i64, tpu.core_type = #tpu.core_type<tc>, window_params = [{transform_indices = @transform_0, window_bounds = array<i64: 56, 512>}, {pipeline_mode = #tpu.pipeline_mode<synchronous>, transform_indices = @transform_1, window_bounds = array<i64: 512, 256>}, {transform_indices = @transform_2, window_bounds = array<i64: 56, 256>}]} {
    %c0 = arith.constant 0 : index
    %c0_0 = arith.constant 0 : index
    %0 = vector.load %arg1[%c0, %c0_0] : memref<56x512xbf16, #tpu.memory_space<vmem>>, vector<56x512xbf16>
    %c0_1 = arith.constant 0 : index
    %c0_2 = arith.constant 0 : index
    %1 = vector.load %arg2[%c0_1, %c0_2] : memref<512x256xbf16, #tpu.memory_space<vmem>>, vector<512x256xbf16>
    %cst = arith.constant dense<0.000000e+00> : vector<56x256xf32>
    %2 = tpu.matmul %0, %1, %cst {dimension_numbers = #tpu.dot_dimension_numbers<[1], [0], [0], [1], [0, 0, 1, 1], [], []>} : vector<56x512xbf16>, vector<512x256xbf16>, vector<56x256xf32> -> vector<56x256xf32>
    %c0_3 = arith.constant 0 : index
    %c0_4 = arith.constant 0 : index
    %3 = vector.load %arg3[%c0_3, %c0_4] : memref<56x256xf32, #tpu.memory_space<vmem>>, vector<56x256xf32>
    tpu.vector_store %arg3[%c0_3, %c0_4], %2 {strides = array<i32>} : memref<56x256xf32, #tpu.memory_space<vmem>>, vector<56x256xf32>,
    return
  }
  func.func @transform_0(%arg0: i32) -> (i32, i32) {
    %c0_i32 = arith.constant 0 : i32
    %c0_i32_0 = arith.constant 0 : i32
    return %arg0, %c0_i32 : i32, i32
  }
  func.func @transform_1(%arg0: i32) -> (i32, i32) {
    %c0_i32 = arith.constant 0 : i32
    %c0_i32_0 = arith.constant 0 : i32
    %c0_i32_1 = arith.constant 0 : i32
    return %c0_i32, %c0_i32_0 : i32, i32
  }
  func.func @transform_2(%arg0: i32) -> (i32, i32) {
    %c0_i32 = arith.constant 0 : i32
    %c0_i32_0 = arith.constant 0 : i32
    return %arg0, %c0_i32 : i32, i32
  }
}

module attributes {stable_mosaic.version = 11 : i64} {
  func.func @_scale_act_kernel(%arg0: i32, %arg1: memref<16x512xf32, #tpu.memory_space<vmem>>, %arg2: memref<1x512xf32, #tpu.memory_space<vmem>>, %arg3: memref<1x512xf32, #tpu.memory_space<vmem>>, %arg4: memref<16x512xbf16, #tpu.memory_space<vmem>>) attributes {dimension_semantics = [#tpu.dimension_semantics<parallel>], iteration_bounds = array<i64: 1>, scalar_prefetch = 0 : i64, scratch_operands = 0 : i64, tpu.core_type = #tpu.core_type<tc>, window_params = [{transform_indices = @transform_0, window_bounds = array<i64: 16, 512>}, {pipeline_mode = #tpu.pipeline_mode<synchronous>, transform_indices = @transform_1, window_bounds = array<i64: 1, 512>}, {pipeline_mode = #tpu.pipeline_mode<synchronous>, transform_indices = @transform_2, window_bounds = array<i64: 1, 512>}, {transform_indices = @transform_3, window_bounds = array<i64: 16, 512>}]} {
    %c0 = arith.constant 0 : index
    %c0_0 = arith.constant 0 : index
    %0 = vector.load %arg1[%c0, %c0_0] : memref<16x512xf32, #tpu.memory_space<vmem>>, vector<16x512xf32>
    %c0_1 = arith.constant 0 : index
    %c0_2 = arith.constant 0 : index
    %1 = vector.load %arg2[%c0_1, %c0_2] : memref<1x512xf32, #tpu.memory_space<vmem>>, vector<1x512xf32>
    %2 = vector.broadcast %1 : vector<1x512xf32> to vector<16x512xf32>
    %3 = arith.mulf %0, %2 : vector<16x512xf32>
    %c0_3 = arith.constant 0 : index
    %c0_4 = arith.constant 0 : index
    %4 = vector.load %arg3[%c0_3, %c0_4] : memref<1x512xf32, #tpu.memory_space<vmem>>, vector<1x512xf32>
    %5 = vector.broadcast %4 : vector<1x512xf32> to vector<16x512xf32>
    %6 = arith.addf %3, %5 : vector<16x512xf32>
    %cst = arith.constant 0.000000e+00 : f32
    %7 = vector.broadcast %cst : f32 to vector<16x512xf32>
    %8 = arith.maximumf %6, %7 : vector<16x512xf32>
    %9 = arith.truncf %8 : vector<16x512xf32> to vector<16x512xbf16>
    %c0_5 = arith.constant 0 : index
    %c0_6 = arith.constant 0 : index
    %10 = vector.load %arg4[%c0_5, %c0_6] : memref<16x512xbf16, #tpu.memory_space<vmem>>, vector<16x512xbf16>
    tpu.vector_store %arg4[%c0_5, %c0_6], %9 {strides = array<i32>} : memref<16x512xbf16, #tpu.memory_space<vmem>>, vector<16x512xbf16>,
    return
  }
  func.func @transform_0(%arg0: i32) -> (i32, i32) {
    %c0_i32 = arith.constant 0 : i32
    %c0_i32_0 = arith.constant 0 : i32
    return %arg0, %c0_i32 : i32, i32
  }
  func.func @transform_1(%arg0: i32) -> (i32, i32) {
    %c0_i32 = arith.constant 0 : i32
    %c0_i32_0 = arith.constant 0 : i32
    %c0_i32_1 = arith.constant 0 : i32
    return %c0_i32, %c0_i32_0 : i32, i32
  }
  func.func @transform_2(%arg0: i32) -> (i32, i32) {
    %c0_i32 = arith.constant 0 : i32
    %c0_i32_0 = arith.constant 0 : i32
    %c0_i32_1 = arith.constant 0 : i32
    return %c0_i32, %c0_i32_0 : i32, i32
  }
  func.func @transform_3(%arg0: i32) -> (i32, i32) {
    %c0_i32 = arith.constant 0 : i32
    %c0_i32_0 = arith.constant 0 : i32
    return %arg0, %c0_i32 : i32, i32
  }
}

module attributes {stable_mosaic.version = 11 : i64} {
  func.func @_mm_kernel(%arg0: i32, %arg1: memref<168x256xbf16, #tpu.memory_space<vmem>>, %arg2: memref<256x128xbf16, #tpu.memory_space<vmem>>, %arg3: memref<168x128xf32, #tpu.memory_space<vmem>>) attributes {dimension_semantics = [#tpu.dimension_semantics<parallel>], iteration_bounds = array<i64: 1>, scalar_prefetch = 0 : i64, scratch_operands = 0 : i64, tpu.core_type = #tpu.core_type<tc>, window_params = [{transform_indices = @transform_0, window_bounds = array<i64: 168, 256>}, {pipeline_mode = #tpu.pipeline_mode<synchronous>, transform_indices = @transform_1, window_bounds = array<i64: 256, 128>}, {transform_indices = @transform_2, window_bounds = array<i64: 168, 128>}]} {
    %c0 = arith.constant 0 : index
    %c0_0 = arith.constant 0 : index
    %0 = vector.load %arg1[%c0, %c0_0] : memref<168x256xbf16, #tpu.memory_space<vmem>>, vector<168x256xbf16>
    %c0_1 = arith.constant 0 : index
    %c0_2 = arith.constant 0 : index
    %1 = vector.load %arg2[%c0_1, %c0_2] : memref<256x128xbf16, #tpu.memory_space<vmem>>, vector<256x128xbf16>
    %cst = arith.constant dense<0.000000e+00> : vector<168x128xf32>
    %2 = tpu.matmul %0, %1, %cst {dimension_numbers = #tpu.dot_dimension_numbers<[1], [0], [0], [1], [0, 0, 1, 1], [], []>} : vector<168x256xbf16>, vector<256x128xbf16>, vector<168x128xf32> -> vector<168x128xf32>
    %c0_3 = arith.constant 0 : index
    %c0_4 = arith.constant 0 : index
    %3 = vector.load %arg3[%c0_3, %c0_4] : memref<168x128xf32, #tpu.memory_space<vmem>>, vector<168x128xf32>
    tpu.vector_store %arg3[%c0_3, %c0_4], %2 {strides = array<i32>} : memref<168x128xf32, #tpu.memory_space<vmem>>, vector<168x128xf32>,
    return
  }
  func.func @transform_0(%arg0: i32) -> (i32, i32) {
    %c0_i32 = arith.constant 0 : i32
    %c0_i32_0 = arith.constant 0 : i32
    return %arg0, %c0_i32 : i32, i32
  }
  func.func @transform_1(%arg0: i32) -> (i32, i32) {
    %c0_i32 = arith.constant 0 : i32
    %c0_i32_0 = arith.constant 0 : i32
    %c0_i32_1 = arith.constant 0 : i32
    return %c0_i32, %c0_i32_0 : i32, i32
  }
  func.func @transform_2(%arg0: i32) -> (i32, i32) {
    %c0_i32 = arith.constant 0 : i32
    %c0_i32_0 = arith.constant 0 : i32
    return %arg0, %c0_i32 : i32, i32
  }
}

module attributes {stable_mosaic.version = 11 : i64} {
  func.func @_scale_act_kernel(%arg0: i32, %arg1: memref<32x512xf32, #tpu.memory_space<vmem>>, %arg2: memref<1x512xf32, #tpu.memory_space<vmem>>, %arg3: memref<1x512xf32, #tpu.memory_space<vmem>>, %arg4: memref<32x512xbf16, #tpu.memory_space<vmem>>) attributes {dimension_semantics = [#tpu.dimension_semantics<parallel>], iteration_bounds = array<i64: 1>, scalar_prefetch = 0 : i64, scratch_operands = 0 : i64, tpu.core_type = #tpu.core_type<tc>, window_params = [{transform_indices = @transform_0, window_bounds = array<i64: 32, 512>}, {pipeline_mode = #tpu.pipeline_mode<synchronous>, transform_indices = @transform_1, window_bounds = array<i64: 1, 512>}, {pipeline_mode = #tpu.pipeline_mode<synchronous>, transform_indices = @transform_2, window_bounds = array<i64: 1, 512>}, {transform_indices = @transform_3, window_bounds = array<i64: 32, 512>}]} {
    %c0 = arith.constant 0 : index
    %c0_0 = arith.constant 0 : index
    %0 = vector.load %arg1[%c0, %c0_0] : memref<32x512xf32, #tpu.memory_space<vmem>>, vector<32x512xf32>
    %c0_1 = arith.constant 0 : index
    %c0_2 = arith.constant 0 : index
    %1 = vector.load %arg2[%c0_1, %c0_2] : memref<1x512xf32, #tpu.memory_space<vmem>>, vector<1x512xf32>
    %2 = vector.broadcast %1 : vector<1x512xf32> to vector<32x512xf32>
    %3 = arith.mulf %0, %2 : vector<32x512xf32>
    %c0_3 = arith.constant 0 : index
    %c0_4 = arith.constant 0 : index
    %4 = vector.load %arg3[%c0_3, %c0_4] : memref<1x512xf32, #tpu.memory_space<vmem>>, vector<1x512xf32>
    %5 = vector.broadcast %4 : vector<1x512xf32> to vector<32x512xf32>
    %6 = arith.addf %3, %5 : vector<32x512xf32>
    %cst = arith.constant 0.000000e+00 : f32
    %7 = vector.broadcast %cst : f32 to vector<32x512xf32>
    %8 = arith.maximumf %6, %7 : vector<32x512xf32>
    %9 = arith.truncf %8 : vector<32x512xf32> to vector<32x512xbf16>
    %c0_5 = arith.constant 0 : index
    %c0_6 = arith.constant 0 : index
    %10 = vector.load %arg4[%c0_5, %c0_6] : memref<32x512xbf16, #tpu.memory_space<vmem>>, vector<32x512xbf16>
    tpu.vector_store %arg4[%c0_5, %c0_6], %9 {strides = array<i32>} : memref<32x512xbf16, #tpu.memory_space<vmem>>, vector<32x512xbf16>,
    return
  }
  func.func @transform_0(%arg0: i32) -> (i32, i32) {
    %c0_i32 = arith.constant 0 : i32
    %c0_i32_0 = arith.constant 0 : i32
    return %arg0, %c0_i32 : i32, i32
  }
  func.func @transform_1(%arg0: i32) -> (i32, i32) {
    %c0_i32 = arith.constant 0 : i32
    %c0_i32_0 = arith.constant 0 : i32
    %c0_i32_1 = arith.constant 0 : i32
    return %c0_i32, %c0_i32_0 : i32, i32
  }
  func.func @transform_2(%arg0: i32) -> (i32, i32) {
    %c0_i32 = arith.constant 0 : i32
    %c0_i32_0 = arith.constant 0 : i32
    %c0_i32_1 = arith.constant 0 : i32
    return %c0_i32, %c0_i32_0 : i32, i32
  }
  func.func @transform_3(%arg0: i32) -> (i32, i32) {
    %c0_i32 = arith.constant 0 : i32
    %c0_i32_0 = arith.constant 0 : i32
    return %arg0, %c0_i32 : i32, i32
  }
}

module attributes {stable_mosaic.version = 11 : i64} {
  func.func @_mm_kernel(%arg0: i32, %arg1: memref<256x128xbf16, #tpu.memory_space<vmem>>, %arg2: memref<128x128xbf16, #tpu.memory_space<vmem>>, %arg3: memref<256x128xf32, #tpu.memory_space<vmem>>) attributes {dimension_semantics = [#tpu.dimension_semantics<parallel>], iteration_bounds = array<i64: 3>, scalar_prefetch = 0 : i64, scratch_operands = 0 : i64, tpu.core_type = #tpu.core_type<tc>, window_params = [{transform_indices = @transform_0, window_bounds = array<i64: 256, 128>}, {pipeline_mode = #tpu.pipeline_mode<synchronous>, transform_indices = @transform_1, window_bounds = array<i64: 128, 128>}, {transform_indices = @transform_2, window_bounds = array<i64: 256, 128>}]} {
    %c0 = arith.constant 0 : index
    %c0_0 = arith.constant 0 : index
    %0 = vector.load %arg1[%c0, %c0_0] : memref<256x128xbf16, #tpu.memory_space<vmem>>, vector<256x128xbf16>
    %c0_1 = arith.constant 0 : index
    %c0_2 = arith.constant 0 : index
    %1 = vector.load %arg2[%c0_1, %c0_2] : memref<128x128xbf16, #tpu.memory_space<vmem>>, vector<128x128xbf16>
    %cst = arith.constant dense<0.000000e+00> : vector<256x128xf32>
    %2 = tpu.matmul %0, %1, %cst {dimension_numbers = #tpu.dot_dimension_numbers<[1], [0], [0], [1], [0, 0, 1, 1], [], []>} : vector<256x128xbf16>, vector<128x128xbf16>, vector<256x128xf32> -> vector<256x128xf32>
    %c0_3 = arith.constant 0 : index
    %c0_4 = arith.constant 0 : index
    %3 = vector.load %arg3[%c0_3, %c0_4] : memref<256x128xf32, #tpu.memory_space<vmem>>, vector<256x128xf32>
    tpu.vector_store %arg3[%c0_3, %c0_4], %2 {strides = array<i32>} : memref<256x128xf32, #tpu.memory_space<vmem>>, vector<256x128xf32>,
    return
  }
  func.func @transform_0(%arg0: i32) -> (i32, i32) {
    %c0_i32 = arith.constant 0 : i32
    %c0_i32_0 = arith.constant 0 : i32
    return %arg0, %c0_i32 : i32, i32
  }
  func.func @transform_1(%arg0: i32) -> (i32, i32) {
    %c0_i32 = arith.constant 0 : i32
    %c0_i32_0 = arith.constant 0 : i32
    %c0_i32_1 = arith.constant 0 : i32
    return %c0_i32, %c0_i32_0 : i32, i32
  }
  func.func @transform_2(%arg0: i32) -> (i32, i32) {
    %c0_i32 = arith.constant 0 : i32
    %c0_i32_0 = arith.constant 0 : i32
    return %arg0, %c0_i32 : i32, i32
  }
}

module attributes {stable_mosaic.version = 11 : i64} {
  func.func @_scale_act_kernel(%arg0: i32, %arg1: memref<64x512xf32, #tpu.memory_space<vmem>>, %arg2: memref<1x512xf32, #tpu.memory_space<vmem>>, %arg3: memref<1x512xf32, #tpu.memory_space<vmem>>, %arg4: memref<64x512xbf16, #tpu.memory_space<vmem>>) attributes {dimension_semantics = [#tpu.dimension_semantics<parallel>], iteration_bounds = array<i64: 1>, scalar_prefetch = 0 : i64, scratch_operands = 0 : i64, tpu.core_type = #tpu.core_type<tc>, window_params = [{transform_indices = @transform_0, window_bounds = array<i64: 64, 512>}, {pipeline_mode = #tpu.pipeline_mode<synchronous>, transform_indices = @transform_1, window_bounds = array<i64: 1, 512>}, {pipeline_mode = #tpu.pipeline_mode<synchronous>, transform_indices = @transform_2, window_bounds = array<i64: 1, 512>}, {transform_indices = @transform_3, window_bounds = array<i64: 64, 512>}]} {
    %c0 = arith.constant 0 : index
    %c0_0 = arith.constant 0 : index
    %0 = vector.load %arg1[%c0, %c0_0] : memref<64x512xf32, #tpu.memory_space<vmem>>, vector<64x512xf32>
    %c0_1 = arith.constant 0 : index
    %c0_2 = arith.constant 0 : index
    %1 = vector.load %arg2[%c0_1, %c0_2] : memref<1x512xf32, #tpu.memory_space<vmem>>, vector<1x512xf32>
    %2 = vector.broadcast %1 : vector<1x512xf32> to vector<64x512xf32>
    %3 = arith.mulf %0, %2 : vector<64x512xf32>
    %c0_3 = arith.constant 0 : index
    %c0_4 = arith.constant 0 : index
    %4 = vector.load %arg3[%c0_3, %c0_4] : memref<1x512xf32, #tpu.memory_space<vmem>>, vector<1x512xf32>
    %5 = vector.broadcast %4 : vector<1x512xf32> to vector<64x512xf32>
    %6 = arith.addf %3, %5 : vector<64x512xf32>
    %cst = arith.constant 0.000000e+00 : f32
    %7 = vector.broadcast %cst : f32 to vector<64x512xf32>
    %8 = arith.maximumf %6, %7 : vector<64x512xf32>
    %9 = arith.truncf %8 : vector<64x512xf32> to vector<64x512xbf16>
    %c0_5 = arith.constant 0 : index
    %c0_6 = arith.constant 0 : index
    %10 = vector.load %arg4[%c0_5, %c0_6] : memref<64x512xbf16, #tpu.memory_space<vmem>>, vector<64x512xbf16>
    tpu.vector_store %arg4[%c0_5, %c0_6], %9 {strides = array<i32>} : memref<64x512xbf16, #tpu.memory_space<vmem>>, vector<64x512xbf16>,
    return
  }
  func.func @transform_0(%arg0: i32) -> (i32, i32) {
    %c0_i32 = arith.constant 0 : i32
    %c0_i32_0 = arith.constant 0 : i32
    return %arg0, %c0_i32 : i32, i32
  }
  func.func @transform_1(%arg0: i32) -> (i32, i32) {
    %c0_i32 = arith.constant 0 : i32
    %c0_i32_0 = arith.constant 0 : i32
    %c0_i32_1 = arith.constant 0 : i32
    return %c0_i32, %c0_i32_0 : i32, i32
  }
  func.func @transform_2(%arg0: i32) -> (i32, i32) {
    %c0_i32 = arith.constant 0 : i32
    %c0_i32_0 = arith.constant 0 : i32
    %c0_i32_1 = arith.constant 0 : i32
    return %c0_i32, %c0_i32_0 : i32, i32
  }
  func.func @transform_3(%arg0: i32) -> (i32, i32) {
    %c0_i32 = arith.constant 0 : i32
    %c0_i32_0 = arith.constant 0 : i32
    return %arg0, %c0_i32 : i32, i32
  }
}

module attributes {stable_mosaic.version = 11 : i64} {
  func.func @_mm_bias_tanh_kernel(%arg0: i32, %arg1: memref<256x128xbf16, #tpu.memory_space<vmem>>, %arg2: memref<128x128xbf16, #tpu.memory_space<vmem>>, %arg3: memref<1x128xf32, #tpu.memory_space<vmem>>, %arg4: memref<256x128xf32, #tpu.memory_space<vmem>>) attributes {dimension_semantics = [#tpu.dimension_semantics<parallel>], iteration_bounds = array<i64: 9>, scalar_prefetch = 0 : i64, scratch_operands = 0 : i64, tpu.core_type = #tpu.core_type<tc>, window_params = [{transform_indices = @transform_0, window_bounds = array<i64: 256, 128>}, {pipeline_mode = #tpu.pipeline_mode<synchronous>, transform_indices = @transform_1, window_bounds = array<i64: 128, 128>}, {pipeline_mode = #tpu.pipeline_mode<synchronous>, transform_indices = @transform_2, window_bounds = array<i64: 1, 128>}, {transform_indices = @transform_3, window_bounds = array<i64: 256, 128>}]} {
    %c0 = arith.constant 0 : index
    %c0_0 = arith.constant 0 : index
    %0 = vector.load %arg1[%c0, %c0_0] : memref<256x128xbf16, #tpu.memory_space<vmem>>, vector<256x128xbf16>
    %c0_1 = arith.constant 0 : index
    %c0_2 = arith.constant 0 : index
    %1 = vector.load %arg2[%c0_1, %c0_2] : memref<128x128xbf16, #tpu.memory_space<vmem>>, vector<128x128xbf16>
    %cst = arith.constant dense<0.000000e+00> : vector<256x128xf32>
    %2 = tpu.matmul %0, %1, %cst {dimension_numbers = #tpu.dot_dimension_numbers<[1], [0], [0], [1], [0, 0, 1, 1], [], []>} : vector<256x128xbf16>, vector<128x128xbf16>, vector<256x128xf32> -> vector<256x128xf32>
    %c0_3 = arith.constant 0 : index
    %c0_4 = arith.constant 0 : index
    %3 = vector.load %arg3[%c0_3, %c0_4] : memref<1x128xf32, #tpu.memory_space<vmem>>, vector<1x128xf32>
    %4 = vector.broadcast %3 : vector<1x128xf32> to vector<256x128xf32>
    %5 = arith.addf %2, %4 : vector<256x128xf32>
    %6 = math.tanh %5 : vector<256x128xf32>
    %c0_5 = arith.constant 0 : index
    %c0_6 = arith.constant 0 : index
    %7 = vector.load %arg4[%c0_5, %c0_6] : memref<256x128xf32, #tpu.memory_space<vmem>>, vector<256x128xf32>
    tpu.vector_store %arg4[%c0_5, %c0_6], %6 {strides = array<i32>} : memref<256x128xf32, #tpu.memory_space<vmem>>, vector<256x128xf32>,
    return
  }
  func.func @transform_0(%arg0: i32) -> (i32, i32) {
    %c0_i32 = arith.constant 0 : i32
    %c0_i32_0 = arith.constant 0 : i32
    return %arg0, %c0_i32 : i32, i32
  }
  func.func @transform_1(%arg0: i32) -> (i32, i32) {
    %c0_i32 = arith.constant 0 : i32
    %c0_i32_0 = arith.constant 0 : i32
    %c0_i32_1 = arith.constant 0 : i32
    return %c0_i32, %c0_i32_0 : i32, i32
  }
  func.func @transform_2(%arg0: i32) -> (i32, i32) {
    %c0_i32 = arith.constant 0 : i32
    %c0_i32_0 = arith.constant 0 : i32
    %c0_i32_1 = arith.constant 0 : i32
    return %c0_i32, %c0_i32_0 : i32, i32
  }
  func.func @transform_3(%arg0: i32) -> (i32, i32) {
    %c0_i32 = arith.constant 0 : i32
    %c0_i32_0 = arith.constant 0 : i32
    return %arg0, %c0_i32 : i32, i32
  }
}

</mosaic_0001>

<llo_original>
// kernel: tile.48
$region0: #{tile.48}
  #allocation0 [shape = 's32[1]{0}', space=sflag, size = 0x4, scoped, tag = 'scoped memory for tile.48']
  %s0 = inlined_call_operand.vmem [shape: f32[128], index: 0, kind: input, shape index: {}]
  %s1 = inlined_call_operand.vmem [shape: f32[4,128], index: 1, kind: output, shape index: {}]
  // Predicated region
  $region2: #{tile.48} parent=0 // pred_check
    _
  $region3: #{tile.48} parent=0 // pred_check_branch
    %3 = sbr.rel (0) target = $region5
  $region4: #{tile.48} parent=0 // pred_region
    _
  $region5: #{tile.48} parent=0 // pred_fallthru
    _
  %v4 = vld [vmem:[%s0] ss:$0 sm:$0xff]
  %5 = vst [vmem:[%s1] sm:$0xf] %v4

// kernel: generator_forward.12
$region0: #{generator_forward.12}
  #allocation0 [shape = 'u32[]', space=smem, size = 0x4, offset = 0x4, fixed_abs, tag = 'smem constant byte address 0x4 - core index']
  #allocation1 [shape = 'u32[144,128]{1,0:T(1,128)}', space=vmem, size = 0x12000, scoped, tag = 'internal scratch']
  %s0 = inlined_call_operand.vmem [shape: f32[8,128], index: 0, kind: input, shape index: {}]
  %s1 = inlined_call_operand.vmem [shape: f32[1,128], index: 1, kind: input, shape index: {}]
  %s2 = inlined_call_operand.vmem [shape: f32[1,128], index: 2, kind: input, shape index: {}]
  %s3 = inlined_call_operand.vmem [shape: bf16[8,128], index: 3, kind: output, shape index: {}]
  %s4 = sld [smem:[#allocation0]]
  $region22: #{generator_forward.12} parent=0
    _
  %s6 = ssub.s32 1, %s4
  %s7 = scalar_select 0, %s6, %s4
  // Predicated region
  $region2: #{generator_forward.12} parent=0 // pred_check
    _
  $region3: #{generator_forward.12} parent=0 // pred_check_branch
    %9 = sbr.rel (0) target = $region5
  $region4: #{generator_forward.12} parent=0 // pred_region
    _
  $region5: #{generator_forward.12} parent=0 // pred_fallthru
    _
  // Predicated region
  $region6: #{generator_forward.12} parent=0 // pred_check
    _
  $region7: #{generator_forward.12} parent=0 // pred_check_branch
    %11 = sbr.rel (0) target = $region9
  $region8: #{generator_forward.12} parent=0 // pred_region
    _
  $region9: #{generator_forward.12} parent=0 // pred_fallthru
    _
  // Predicated region
  $region10: #{generator_forward.12} parent=0 // pred_check
    _
  $region11: #{generator_forward.12} parent=0 // pred_check_branch
    %13 = sbr.rel (0) target = $region13
  $region12: #{generator_forward.12} parent=0 // pred_region
    _
  $region13: #{generator_forward.12} parent=0 // pred_fallthru
    _
  %v14 = vld [vmem:[%s0] sm:$0xff]
  %v15 = vld [vmem:[%s1] sm:$0x1]
  %v17 = vlaneseq
  %v18 = vshrl.u32 %v17, 7
  %v19 = vsub.s32 0, %v18
  %v20 = vrot.slane %v15, %v19
  %v22 = vmul.f32 %v14, %v20
  %v23 = vld [vmem:[%s2] sm:$0x1]
  %v25 = vlaneseq
  %v26 = vshrl.u32 %v25, 7
  %v27 = vsub.s32 0, %v26
  %v28 = vrot.slane %v23, %v27
  %v30 = vadd.f32 %v22, %v28
  %vm31 = vcmp.gt.f32.partialorder %v30, 0.0
  %v32 = vmul.f32 %v30, 0.2
  %v33 = vsel %vm31, %v30, %v32
  %v34 = vpack.c.bf16 %v33, %v33
  %35 = vst [vmem:[%s3] sm:$0xf] %v34
  // Predicated region
  $region14: #{generator_forward.12} parent=0 // pred_check
    _
  $region15: #{generator_forward.12} parent=0 // pred_check_branch
    %37 = sbr.rel (0) target = $region17
  $region16: #{generator_forward.12} parent=0 // pred_region
    _
  $region17: #{generator_forward.12} parent=0 // pred_fallthru
    _
  // Predicated region
  $region18: #{generator_forward.12} parent=0 // pred_check
    _
  $region19: #{generator_forward.12} parent=0 // pred_check_branch
    %39 = sbr.rel (0) target = $region21
  $region20: #{generator_forward.12} parent=0 // pred_region
    _
  $region21: #{generator_forward.12} parent=0 // pred_fallthru
    _

// kernel: generator_forward.11
$region0: #{generator_forward.11}
  #allocation0 [shape = 'u32[]', space=smem, size = 0x4, offset = 0x4, fixed_abs, tag = 'smem constant byte address 0x4 - core index']
  #allocation1 [shape = 'u32[144,128]{1,0:T(1,128)}', space=vmem, size = 0x12000, scoped, tag = 'internal scratch']
  %s0 = inlined_call_operand.vmem [shape: bf16[8,768], index: 0, kind: input, shape index: {}]
  %s1 = inlined_call_operand.hbm [shape: bf16[768,128], index: 1, kind: input, shape index: {}]
  %s2 = inlined_call_operand.vmem [shape: f32[8,128], index: 2, kind: output, shape index: {}]
  %s3 = sld [smem:[#allocation0]]
  $region22: #{generator_forward.11} parent=0
    _
  %s5 = ssub.s32 1, %s3
  %s6 = scalar_select 0, %s5, %s3
  $region1: #{generator_forward.11} parent=0
    #allocation2 [shape = 'u8[196608]{0}', space=vmem, size = 0x30000, scoped, tag = 'input window, operand 1, single buffered']
    #allocation3 [shape = 's32[1]{0}', space=sflag, size = 0x4, scoped, tag = 'scoped memory for generator_forward.11']
    %7 = vsyncpa [#allocation3], 0
    // Predicated region
    $region2: #{generator_forward.11} parent=1 // pred_check
      _
    $region3: #{generator_forward.11} parent=1 // pred_check_branch
      %9 = sbr.rel (0) target = $region5
    $region4: #{generator_forward.11} parent=1 // pred_region
      _
    $region5: #{generator_forward.11} parent=1 // pred_fallthru
      _
    // Predicated region
    $region6: #{generator_forward.11} parent=1 // pred_check
      _
    $region7: #{generator_forward.11} parent=1 // pred_check_branch
      %11 = sbr.rel (0) target = $region9
    $region8: #{generator_forward.11} parent=1 // pred_region
      %s13 = ssub.s32 6144, 6144
      %14 = vsyncadd [#allocation3], %s13
      %s15 = sshll.u32 [#allocation2], 4
      %s16 = int_to_ptr.vmem [resolvable:$true] %s15
      %21 = dma.hbm_to_vmem [thread:$0]  %s1, 6144, %s16, [#allocation3], 64, 64, 4
    $region9: #{generator_forward.11} parent=1 // pred_fallthru
      _
    // Predicated region
    $region10: #{generator_forward.11} parent=1 // pred_check
      _
    $region11: #{generator_forward.11} parent=1 // pred_check_branch
      %23 = sbr.rel (0) target = $region13
    $region12: #{generator_forward.11} parent=1 // pred_region
      %24 = dma.done [#allocation3], 6144
    $region13: #{generator_forward.11} parent=1 // pred_fallthru
      _
    %v26 = vld [vmem:[%s0] sm:$0xff]
    %v27 = vld [vmem:[%s0 + $0x8] sm:$0xff]
    %v28 = vld [vmem:[%s0 + $0x10] sm:$0xff]
    %v29 = vld [vmem:[#allocation2] sm:$0xf]
    %v30 = vld [vmem:[#allocation2 + $0x4] sm:$0xf]
    %v31 = vld [vmem:[#allocation2 + $0x8] sm:$0xf]
    %v32 = vld [vmem:[#allocation2 + $0xc] sm:$0xf]
    %v33 = vld [vmem:[#allocation2 + $0x10] sm:$0xf]
    %v34 = vld [vmem:[#allocation2 + $0x14] sm:$0xf]
    %v35 = vld [vmem:[#allocation2 + $0x18] sm:$0xf]
    %v36 = vld [vmem:[#allocation2 + $0x1c] sm:$0xf]
    %v37 = vld [vmem:[#allocation2 + $0x20] sm:$0xf]
    %v38 = vld [vmem:[#allocation2 + $0x24] sm:$0xf]
    %v39 = vld [vmem:[#allocation2 + $0x28] sm:$0xf]
    %v40 = vld [vmem:[#allocation2 + $0x2c] sm:$0xf]
    %v41 = vld [vmem:[#allocation2 + $0x30] sm:$0xf]
    %v42 = vld [vmem:[#allocation2 + $0x34] sm:$0xf]
    %v43 = vld [vmem:[#allocation2 + $0x38] sm:$0xf]
    %v44 = vld [vmem:[#allocation2 + $0x3c] sm:$0xf]
    %v45 = vld [vmem:[#allocation2 + $0x40] sm:$0xf]
    %v46 = vld [vmem:[#allocation2 + $0x44] sm:$0xf]
    %v47 = vld [vmem:[#allocation2 + $0x48] sm:$0xf]
    %v48 = vld [vmem:[#allocation2 + $0x4c] sm:$0xf]
    %v49 = vld [vmem:[#allocation2 + $0x50] sm:$0xf]
    %v50 = vld [vmem:[#allocation2 + $0x54] sm:$0xf]
    %v51 = vld [vmem:[#allocation2 + $0x58] sm:$0xf]
    %v52 = vld [vmem:[#allocation2 + $0x5c] sm:$0xf]
    %v53 = vld [vmem:[#allocation2 + $0x60] sm:$0xf]
    %v54 = vld [vmem:[#allocation2 + $0x64] sm:$0xf]
    %v55 = vld [vmem:[#allocation2 + $0x68] sm:$0xf]
    %v56 = vld [vmem:[#allocation2 + $0x6c] sm:$0xf]
    %v57 = vld [vmem:[#allocation2 + $0x70] sm:$0xf]
    %v58 = vld [vmem:[#allocation2 + $0x74] sm:$0xf]
    %v59 = vld [vmem:[#allocation2 + $0x78] sm:$0xf]
    %v60 = vld [vmem:[#allocation2 + $0x7c] sm:$0xf]
    %v61 = vld [vmem:[#allocation2 + $0x80] sm:$0xf]
    %v62 = vld [vmem:[#allocation2 + $0x84] sm:$0xf]
    %v63 = vld [vmem:[#allocation2 + $0x88] sm:$0xf]
    %v64 = vld [vmem:[#allocation2 + $0x8c] sm:$0xf]
    %v65 = vld [vmem:[#allocation2 + $0x90] sm:$0xf]
    %v66 = vld [vmem:[#allocation2 + $0x94] sm:$0xf]
    %v67 = vld [vmem:[#allocation2 + $0x98] sm:$0xf]
    %v68 = vld [vmem:[#allocation2 + $0x9c] sm:$0xf]
    %v69 = vld [vmem:[#allocation2 + $0xa0] sm:$0xf]
    %v70 = vld [vmem:[#allocation2 + $0xa4] sm:$0xf]
    %v71 = vld [vmem:[#allocation2 + $0xa8] sm:$0xf]
    %v72 = vld [vmem:[#allocation2 + $0xac] sm:$0xf]
    %v73 = vld [vmem:[#allocation2 + $0xb0] sm:$0xf]
    %v74 = vld [vmem:[#allocation2 + $0xb4] sm:$0xf]
    %v75 = vld [vmem:[#allocation2 + $0xb8] sm:$0xf]
    %v76 = vld [vmem:[#allocation2 + $0xbc] sm:$0xf]
    %v77 = vld [vmem:[#allocation2 + $0xc0] sm:$0xf]
    %v78 = vld [vmem:[#allocation2 + $0xc4] sm:$0xf]
    %v79 = vld [vmem:[#allocation2 + $0xc8] sm:$0xf]
    %v80 = vld [vmem:[#allocation2 + $0xcc] sm:$0xf]
    %v81 = vld [vmem:[#allocation2 + $0xd0] sm:$0xf]
    %v82 = vld [vmem:[#allocation2 + $0xd4] sm:$0xf]
    %v83 = vld [vmem:[#allocation2 + $0xd8] sm:$0xf]
    %v84 = vld [vmem:[#allocation2 + $0xdc] sm:$0xf]
    %v85 = vld [vmem:[#allocation2 + $0xe0] sm:$0xf]
    %v86 = vld [vmem:[#allocation2 + $0xe4] sm:$0xf]
    %v87 = vld [vmem:[#allocation2 + $0xe8] sm:$0xf]
    %v88 = vld [vmem:[#allocation2 + $0xec] sm:$0xf]
    %v89 = vld [vmem:[#allocation2 + $0xf0] sm:$0xf]
    %v90 = vld [vmem:[#allocation2 + $0xf4] sm:$0xf]
    %v91 = vld [vmem:[#allocation2 + $0xf8] sm:$0xf]
    %v92 = vld [vmem:[#allocation2 + $0xfc] sm:$0xf]
    %v93 = vld [vmem:[#allocation2 + $0x100] sm:$0xf]
    %v94 = vld [vmem:[#allocation2 + $0x104] sm:$0xf]
    %v95 = vld [vmem:[#allocation2 + $0x108] sm:$0xf]
    %v96 = vld [vmem:[#allocation2 + $0x10c] sm:$0xf]
    %v97 = vld [vmem:[#allocation2 + $0x110] sm:$0xf]
    %v98 = vld [vmem:[#allocation2 + $0x114] sm:$0xf]
    %v99 = vld [vmem:[#allocation2 + $0x118] sm:$0xf]
    %v100 = vld [vmem:[#allocation2 + $0x11c] sm:$0xf]
    %v101 = vld [vmem:[#allocation2 + $0x120] sm:$0xf]
    %v102 = vld [vmem:[#allocation2 + $0x124] sm:$0xf]
    %v103 = vld [vmem:[#allocation2 + $0x128] sm:$0xf]
    %v104 = vld [vmem:[#allocation2 + $0x12c] sm:$0xf]
    %v105 = vld [vmem:[#allocation2 + $0x130] sm:$0xf]
    %v106 = vld [vmem:[#allocation2 + $0x134] sm:$0xf]
    %v107 = vld [vmem:[#allocation2 + $0x138] sm:$0xf]
    %v108 = vld [vmem:[#allocation2 + $0x13c] sm:$0xf]
    %v109 = vld [vmem:[#allocation2 + $0x140] sm:$0xf]
    %v110 = vld [vmem:[#allocation2 + $0x144] sm:$0xf]
    %v111 = vld [vmem:[#allocation2 + $0x148] sm:$0xf]
    %v112 = vld [vmem:[#allocation2 + $0x14c] sm:$0xf]
    %v113 = vld [vmem:[#allocation2 + $0x150] sm:$0xf]
    %v114 = vld [vmem:[#allocation2 + $0x154] sm:$0xf]
    %v115 = vld [vmem:[#allocation2 + $0x158] sm:$0xf]
    %v116 = vld [vmem:[#allocation2 + $0x15c] sm:$0xf]
    %v117 = vld [vmem:[#allocation2 + $0x160] sm:$0xf]
    %v118 = vld [vmem:[#allocation2 + $0x164] sm:$0xf]
    %v119 = vld [vmem:[#allocation2 + $0x168] sm:$0xf]
    %v120 = vld [vmem:[#allocation2 + $0x16c] sm:$0xf]
    %v121 = vld [vmem:[#allocation2 + $0x170] sm:$0xf]
    %v122 = vld [vmem:[#allocation2 + $0x174] sm:$0xf]
    %v123 = vld [vmem:[#allocation2 + $0x178] sm:$0xf]
    %v124 = vld [vmem:[#allocation2 + $0x17c] sm:$0xf]
    %v128 = vunpack.c.l.b16 %v26
    %v129 = vunpack.c.h.b16 %v26
    %v130 = vunpack.c.l.b16 %v27
    %v131 = vunpack.c.h.b16 %v27
    %v132 = vunpack.c.l.b16 %v28
    %v133 = vunpack.c.h.b16 %v28
    %v134 = vpack.c.b16 %v128, %v128
    %v135 = vpack.c.b16 %v129, %v129
    %v136 = vpack.c.b16 %v130, %v130
    %v137 = vpack.c.b16 %v131, %v131
    %v138 = vpack.c.b16 %v132, %v132
    %v139 = vpack.c.b16 %v133, %v133
    %v242 = vunpack.c.l.b16 %v29
    %v243 = vunpack.c.l.b16 %v30
    %v244 = vunpack.c.l.b16 %v31
    %v245 = vunpack.c.l.b16 %v32
    %v246 = vunpack.c.l.b16 %v33
    %v247 = vunpack.c.l.b16 %v34
    %v248 = vunpack.c.l.b16 %v35
    %v249 = vunpack.c.l.b16 %v36
    %v250 = vunpack.c.l.b16 %v37
    %v251 = vunpack.c.l.b16 %v38
    %v252 = vunpack.c.l.b16 %v39
    %v253 = vunpack.c.l.b16 %v40
    %v254 = vunpack.c.l.b16 %v41
    %v255 = vunpack.c.l.b16 %v42
    %v256 = vunpack.c.l.b16 %v43
    %v257 = vunpack.c.l.b16 %v44
    %v258 = vunpack.c.l.b16 %v45
    %v259 = vunpack.c.l.b16 %v46
    %v260 = vunpack.c.l.b16 %v47
    %v261 = vunpack.c.l.b16 %v48
    %v262 = vunpack.c.l.b16 %v49
    %v263 = vunpack.c.l.b16 %v50
    %v264 = vunpack.c.l.b16 %v51
    %v265 = vunpack.c.l.b16 %v52
    %v266 = vunpack.c.l.b16 %v53
    %v267 = vunpack.c.l.b16 %v54
    %v268 = vunpack.c.l.b16 %v55
    %v269 = vunpack.c.l.b16 %v56
    %v270 = vunpack.c.l.b16 %v57
    %v271 = vunpack.c.l.b16 %v58
    %v272 = vunpack.c.l.b16 %v59
    %v273 = vunpack.c.l.b16 %v60
    %v274 = vunpack.c.l.b16 %v61
    %v275 = vunpack.c.l.b16 %v62
    %v276 = vunpack.c.l.b16 %v63
    %v277 = vunpack.c.l.b16 %v64
    %v278 = vunpack.c.l.b16 %v65
    %v279 = vunpack.c.l.b16 %v66
    %v280 = vunpack.c.l.b16 %v67
    %v281 = vunpack.c.l.b16 %v68
    %v282 = vunpack.c.l.b16 %v69
    %v283 = vunpack.c.l.b16 %v70
    %v284 = vunpack.c.l.b16 %v71
    %v285 = vunpack.c.l.b16 %v72
    %v286 = vunpack.c.l.b16 %v73
    %v287 = vunpack.c.l.b16 %v74
    %v288 = vunpack.c.l.b16 %v75
    %v289 = vunpack.c.l.b16 %v76
    %v290 = vunpack.c.l.b16 %v77
    %v291 = vunpack.c.l.b16 %v78
    %v292 = vunpack.c.l.b16 %v79
    %v293 = vunpack.c.l.b16 %v80
    %v294 = vunpack.c.l.b16 %v81
    %v295 = vunpack.c.l.b16 %v82
    %v296 = vunpack.c.l.b16 %v83
    %v297 = vunpack.c.l.b16 %v84
    %v298 = vunpack.c.l.b16 %v85
    %v299 = vunpack.c.l.b16 %v86
    %v300 = vunpack.c.l.b16 %v87
    %v301 = vunpack.c.l.b16 %v88
    %v302 = vunpack.c.l.b16 %v89
    %v303 = vunpack.c.l.b16 %v90
    %v304 = vunpack.c.l.b16 %v91
    %v305 = vunpack.c.l.b16 %v92
    %v306 = vunpack.c.l.b16 %v93
    %v307 = vunpack.c.l.b16 %v94
    %v308 = vunpack.c.l.b16 %v95
    %v309 = vunpack.c.l.b16 %v96
    %v310 = vunpack.c.l.b16 %v97
    %v311 = vunpack.c.l.b16 %v98
    %v312 = vunpack.c.l.b16 %v99
    %v313 = vunpack.c.l.b16 %v100
    %v314 = vunpack.c.l.b16 %v101
    %v315 = vunpack.c.l.b16 %v102
    %v316 = vunpack.c.l.b16 %v103
    %v317 = vunpack.c.l.b16 %v104
    %v318 = vunpack.c.l.b16 %v105
    %v319 = vunpack.c.l.b16 %v106
    %v320 = vunpack.c.l.b16 %v107
    %v321 = vunpack.c.l.b16 %v108
    %v322 = vunpack.c.l.b16 %v109
    %v323 = vunpack.c.l.b16 %v110
    %v324 = vunpack.c.l.b16 %v111
    %v325 = vunpack.c.l.b16 %v112
    %v326 = vunpack.c.l.b16 %v113
    %v327 = vunpack.c.l.b16 %v114
    %v328 = vunpack.c.l.b16 %v115
    %v329 = vunpack.c.l.b16 %v116
    %v330 = vunpack.c.l.b16 %v117
    %v331 = vunpack.c.l.b16 %v118
    %v332 = vunpack.c.l.b16 %v119
    %v333 = vunpack.c.l.b16 %v120
    %v334 = vunpack.c.l.b16 %v121
    %v335 = vunpack.c.l.b16 %v122
    %v336 = vunpack.c.l.b16 %v123
    %v337 = vunpack.c.l.b16 %v124
    %v338 = vpack.c.b16 %v243, %v242
    %v339 = vpack.c.b16 %v245, %v244
    %v340 = vpack.c.b16 %v247, %v246
    %v341 = vpack.c.b16 %v249, %v248
    %v342 = vpack.c.b16 %v251, %v250
    %v343 = vpack.c.b16 %v253, %v252
    %v344 = vpack.c.b16 %v255, %v254
    %v345 = vpack.c.b16 %v257, %v256
    %v346 = vpack.c.b16 %v259, %v258
    %v347 = vpack.c.b16 %v261, %v260
    %v348 = vpack.c.b16 %v263, %v262
    %v349 = vpack.c.b16 %v265, %v264
    %v350 = vpack.c.b16 %v267, %v266
    %v351 = vpack.c.b16 %v269, %v268
    %v352 = vpack.c.b16 %v271, %v270
    %v353 = vpack.c.b16 %v273, %v272
    %v354 = vpack.c.b16 %v275, %v274
    %v355 = vpack.c.b16 %v277, %v276
    %v356 = vpack.c.b16 %v279, %v278
    %v357 = vpack.c.b16 %v281, %v280
    %v358 = vpack.c.b16 %v283, %v282
    %v359 = vpack.c.b16 %v285, %v284
    %v360 = vpack.c.b16 %v287, %v286
    %v361 = vpack.c.b16 %v289, %v288
    %v362 = vpack.c.b16 %v291, %v290
    %v363 = vpack.c.b16 %v293, %v292
    %v364 = vpack.c.b16 %v295, %v294
    %v365 = vpack.c.b16 %v297, %v296
    %v366 = vpack.c.b16 %v299, %v298
    %v367 = vpack.c.b16 %v301, %v300
    %v368 = vpack.c.b16 %v303, %v302
    %v369 = vpack.c.b16 %v305, %v304
    %v370 = vpack.c.b16 %v307, %v306
    %v371 = vpack.c.b16 %v309, %v308
    %v372 = vpack.c.b16 %v311, %v310
    %v373 = vpack.c.b16 %v313, %v312
    %v374 = vpack.c.b16 %v315, %v314
    %v375 = vpack.c.b16 %v317, %v316
    %v376 = vpack.c.b16 %v319, %v318
    %v377 = vpack.c.b16 %v321, %v320
    %v378 = vpack.c.b16 %v323, %v322
    %v379 = vpack.c.b16 %v325, %v324
    %v380 = vpack.c.b16 %v327, %v326
    %v381 = vpack.c.b16 %v329, %v328
    %v382 = vpack.c.b16 %v331, %v330
    %v383 = vpack.c.b16 %v333, %v332
    %v384 = vpack.c.b16 %v335, %v334
    %v385 = vpack.c.b16 %v337, %v336
    %434 = vmatprep.subr.bf16.mxu0 0
    %435 = vmatpush1.bf16.msra.mxu0 %v345
    %436 = vmatprep.subr.bf16.mxu0 0
    %437 = vmatpush1.bf16.msra.mxu0 %v344
    %438 = vmatprep.subr.bf16.mxu0 0
    %439 = vmatpush1.bf16.msra.mxu0 %v343
    %440 = vmatprep.subr.bf16.mxu0 0
    %441 = vmatpush1.bf16.msra.mxu0 %v342
    %442 = vmatprep.subr.bf16.mxu0 0
    %443 = vmatpush1.bf16.msra.mxu0 %v341
    %444 = vmatprep.subr.bf16.mxu0 0
    %445 = vmatpush1.bf16.msra.mxu0 %v340
    %446 = vmatprep.subr.bf16.mxu0 0
    %447 = vmatpush1.bf16.msra.mxu0 %v339
    %448 = vmatprep.subr.bf16.mxu0 0
    %449 = vmatpush1.bf16.msra.mxu0 %v338
    %450 = vmatprep.subr.bf16.mxu0 0
    %451 = vmatpush2.bf16.msra.mxu0 %v353
    %452 = vmatprep.subr.bf16.mxu0 0
    %453 = vmatpush2.bf16.msra.mxu0 %v352
    %454 = vmatprep.subr.bf16.mxu0 0
    %455 = vmatpush2.bf16.msra.mxu0 %v351
    %456 = vmatprep.subr.bf16.mxu0 0
    %457 = vmatpush2.bf16.msra.mxu0 %v350
    %458 = vmatprep.subr.bf16.mxu0 0
    %459 = vmatpush2.bf16.msra.mxu0 %v349
    %460 = vmatprep.subr.bf16.mxu0 0
    %461 = vmatpush2.bf16.msra.mxu0 %v348
    %462 = vmatprep.subr.bf16.mxu0 0
    %463 = vmatpush2.bf16.msra.mxu0 %v347
    %464 = vmatprep.subr.bf16.mxu0 0
    %465 = vmatpush2.bf16.msra.mxu0 %v346
    %466 = vmatprep.mubr.bf16.mxu0 %v135
    %467 = vmatmul.mubr.bf16.gmra.mxu0 %v134
    %v468 = vpop.f32.mrf.mxu0
    %v469 = vadd.f32 0.0, %v468
    %v470 = vpop.f32.mrf.mxu0
    %v471 = vpop.f32.mrf.mxu0
    %v472 = vpop.f32.mrf.mxu0
    %473 = vdwg.mxu0
    %474 = vmatprep.subr.bf16.mxu0 0
    %475 = vmatpush1.bf16.msra.mxu0 %v361
    %476 = vmatprep.subr.bf16.mxu0 0
    %477 = vmatpush1.bf16.msra.mxu0 %v360
    %478 = vmatprep.subr.bf16.mxu0 0
    %479 = vmatpush1.bf16.msra.mxu0 %v359
    %480 = vmatprep.subr.bf16.mxu0 0
    %481 = vmatpush1.bf16.msra.mxu0 %v358
    %482 = vmatprep.subr.bf16.mxu0 0
    %483 = vmatpush1.bf16.msra.mxu0 %v357
    %484 = vmatprep.subr.bf16.mxu0 0
    %485 = vmatpush1.bf16.msra.mxu0 %v356
    %486 = vmatprep.subr.bf16.mxu0 0
    %487 = vmatpush1.bf16.msra.mxu0 %v355
    %488 = vmatprep.subr.bf16.mxu0 0
    %489 = vmatpush1.bf16.msra.mxu0 %v354
    %490 = vmatprep.subr.bf16.mxu0 0
    %491 = vmatpush2.bf16.msra.mxu0 %v369
    %492 = vmatprep.subr.bf16.mxu0 0
    %493 = vmatpush2.bf16.msra.mxu0 %v368
    %494 = vmatprep.subr.bf16.mxu0 0
    %495 = vmatpush2.bf16.msra.mxu0 %v367
    %496 = vmatprep.subr.bf16.mxu0 0
    %497 = vmatpush2.bf16.msra.mxu0 %v366
    %498 = vmatprep.subr.bf16.mxu0 0
    %499 = vmatpush2.bf16.msra.mxu0 %v365
    %500 = vmatprep.subr.bf16.mxu0 0
    %501 = vmatpush2.bf16.msra.mxu0 %v364
    %502 = vmatprep.subr.bf16.mxu0 0
    %503 = vmatpush2.bf16.msra.mxu0 %v363
    %504 = vmatprep.subr.bf16.mxu0 0
    %505 = vmatpush2.bf16.msra.mxu0 %v362
    %506 = vmatprep.mubr.bf16.mxu0 %v137
    %507 = vmatmul.mubr.bf16.gmra.mxu0 %v136
    %v508 = vpop.f32.mrf.mxu0
    %v509 = vadd.f32 %v469, %v508
    %v510 = vpop.f32.mrf.mxu0
    %v511 = vpop.f32.mrf.mxu0
    %v512 = vpop.f32.mrf.mxu0
    %513 = vdwg.mxu0
    %514 = vmatprep.subr.bf16.mxu0 0
    %515 = vmatpush1.bf16.msra.mxu0 %v377
    %516 = vmatprep.subr.bf16.mxu0 0
    %517 = vmatpush1.bf16.msra.mxu0 %v376
    %518 = vmatprep.subr.bf16.mxu0 0
    %519 = vmatpush1.bf16.msra.mxu0 %v375
    %520 = vmatprep.subr.bf16.mxu0 0
    %521 = vmatpush1.bf16.msra.mxu0 %v374
    %522 = vmatprep.subr.bf16.mxu0 0
    %523 = vmatpush1.bf16.msra.mxu0 %v373
    %524 = vmatprep.subr.bf16.mxu0 0
    %525 = vmatpush1.bf16.msra.mxu0 %v372
    %526 = vmatprep.subr.bf16.mxu0 0
    %527 = vmatpush1.bf16.msra.mxu0 %v371
    %528 = vmatprep.subr.bf16.mxu0 0
    %529 = vmatpush1.bf16.msra.mxu0 %v370
    %530 = vmatprep.subr.bf16.mxu0 0
    %531 = vmatpush2.bf16.msra.mxu0 %v385
    %532 = vmatprep.subr.bf16.mxu0 0
    %533 = vmatpush2.bf16.msra.mxu0 %v384
    %534 = vmatprep.subr.bf16.mxu0 0
    %535 = vmatpush2.bf16.msra.mxu0 %v383
    %536 = vmatprep.subr.bf16.mxu0 0
    %537 = vmatpush2.bf16.msra.mxu0 %v382
    %538 = vmatprep.subr.bf16.mxu0 0
    %539 = vmatpush2.bf16.msra.mxu0 %v381
    %540 = vmatprep.subr.bf16.mxu0 0
    %541 = vmatpush2.bf16.msra.mxu0 %v380
    %542 = vmatprep.subr.bf16.mxu0 0
    %543 = vmatpush2.bf16.msra.mxu0 %v379
    %544 = vmatprep.subr.bf16.mxu0 0
    %545 = vmatpush2.bf16.msra.mxu0 %v378
    %546 = vmatprep.mubr.bf16.mxu0 %v139
    %547 = vmatmul.mubr.bf16.gmra.mxu0 %v138
    %v548 = vpop.f32.mrf.mxu0
    %v549 = vadd.f32 %v509, %v548
    %v550 = vpop.f32.mrf.mxu0
    %v551 = vpop.f32.mrf.mxu0
    %v552 = vpop.f32.mrf.mxu0
    %553 = vdwg.mxu0
    %554 = vst [vmem:[%s2] sm:$0xff] %v549
    // Predicated region
    $region14: #{generator_forward.11} parent=1 // pred_check
      _
    $region15: #{generator_forward.11} parent=1 // pred_check_branch
      %556 = sbr.rel (0) target = $region17
    $region16: #{generator_forward.11} parent=1 // pred_region
      _
    $region17: #{generator_forward.11} parent=1 // pred_fallthru
      _
    // Predicated region
    $region18: #{generator_forward.11} parent=1 // pred_check
      _
    $region19: #{generator_forward.11} parent=1 // pred_check_branch
      %558 = sbr.rel (0) target = $region21
    $region20: #{generator_forward.11} parent=1 // pred_region
      _
    $region21: #{generator_forward.11} parent=1 // pred_fallthru
      _
    %559 = vsyncpa [#allocation3], 1

// kernel: generator_forward.14
$region0: #{generator_forward.14}
  #allocation0 [shape = 'u32[]', space=smem, size = 0x4, offset = 0x4, fixed_abs, tag = 'smem constant byte address 0x4 - core index']
  #allocation1 [shape = 'u32[144,128]{1,0:T(1,128)}', space=vmem, size = 0x12000, scoped, tag = 'internal scratch']
  %s0 = inlined_call_operand.vmem [shape: f32[8,512], index: 0, kind: input, shape index: {}]
  %s1 = inlined_call_operand.vmem [shape: f32[1,512], index: 1, kind: input, shape index: {}]
  %s2 = inlined_call_operand.vmem [shape: f32[1,512], index: 2, kind: input, shape index: {}]
  %s3 = inlined_call_operand.vmem [shape: bf16[8,512], index: 3, kind: output, shape index: {}]
  %s4 = sld [smem:[#allocation0]]
  $region22: #{generator_forward.14} parent=0
    _
  %s6 = ssub.s32 1, %s4
  %s7 = scalar_select 0, %s6, %s4
  // Predicated region
  $region2: #{generator_forward.14} parent=0 // pred_check
    _
  $region3: #{generator_forward.14} parent=0 // pred_check_branch
    %9 = sbr.rel (0) target = $region5
  $region4: #{generator_forward.14} parent=0 // pred_region
    _
  $region5: #{generator_forward.14} parent=0 // pred_fallthru
    _
  // Predicated region
  $region6: #{generator_forward.14} parent=0 // pred_check
    _
  $region7: #{generator_forward.14} parent=0 // pred_check_branch
    %11 = sbr.rel (0) target = $region9
  $region8: #{generator_forward.14} parent=0 // pred_region
    _
  $region9: #{generator_forward.14} parent=0 // pred_fallthru
    _
  // Predicated region
  $region10: #{generator_forward.14} parent=0 // pred_check
    _
  $region11: #{generator_forward.14} parent=0 // pred_check_branch
    %13 = sbr.rel (0) target = $region13
  $region12: #{generator_forward.14} parent=0 // pred_region
    _
  $region13: #{generator_forward.14} parent=0 // pred_fallthru
    _
  %v14 = vld [vmem:[%s0] sm:$0xff]
  %v15 = vld [vmem:[%s0 + $0x8] sm:$0xff]
  %v16 = vld [vmem:[%s0 + $0x10] sm:$0xff]
  %v17 = vld [vmem:[%s0 + $0x18] sm:$0xff]
  %v18 = vld [vmem:[%s1] sm:$0xf]
  %v20 = vlaneseq
  %v21 = vshrl.u32 %v20, 7
  %v22 = vsub.s32 0, %v21
  %v23 = vrot.slane %v18, %v22
  %v24 = vlaneseq
  %v25 = vshrl.u32 %v24, 7
  %v26 = vsub.s32 1, %v25
  %v27 = vrot.slane %v18, %v26
  %v28 = vlaneseq
  %v29 = vshrl.u32 %v28, 7
  %v30 = vsub.s32 2, %v29
  %v31 = vrot.slane %v18, %v30
  %v32 = vlaneseq
  %v33 = vshrl.u32 %v32, 7
  %v34 = vsub.s32 3, %v33
  %v35 = vrot.slane %v18, %v34
  %v40 = vmul.f32 %v14, %v23
  %v41 = vmul.f32 %v15, %v27
  %v42 = vmul.f32 %v16, %v31
  %v43 = vmul.f32 %v17, %v35
  %v44 = vld [vmem:[%s2] sm:$0xf]
  %v46 = vlaneseq
  %v47 = vshrl.u32 %v46, 7
  %v48 = vsub.s32 0, %v47
  %v49 = vrot.slane %v44, %v48
  %v50 = vlaneseq
  %v51 = vshrl.u32 %v50, 7
  %v52 = vsub.s32 1, %v51
  %v53 = vrot.slane %v44, %v52
  %v54 = vlaneseq
  %v55 = vshrl.u32 %v54, 7
  %v56 = vsub.s32 2, %v55
  %v57 = vrot.slane %v44, %v56
  %v58 = vlaneseq
  %v59 = vshrl.u32 %v58, 7
  %v60 = vsub.s32 3, %v59
  %v61 = vrot.slane %v44, %v60
  %v66 = vadd.f32 %v40, %v49
  %v67 = vadd.f32 %v41, %v53
  %v68 = vadd.f32 %v42, %v57
  %v69 = vadd.f32 %v43, %v61
  %v70 = vmax.f32 %v66, 0.0
  %v71 = vmax.f32 %v67, 0.0
  %v72 = vmax.f32 %v68, 0.0
  %v73 = vmax.f32 %v69, 0.0
  %v74 = vpack.c.bf16 %v70, %v70
  %v75 = vpack.c.bf16 %v71, %v71
  %v76 = vpack.c.bf16 %v72, %v72
  %v77 = vpack.c.bf16 %v73, %v73
  %v82 = vunpack.c.l.b16 %v74
  %v83 = vunpack.c.l.b16 %v75
  %v84 = vunpack.c.l.b16 %v76
  %v85 = vunpack.c.l.b16 %v77
  %v86 = vpack.c.b16 %v83, %v82
  %v87 = vpack.c.b16 %v85, %v84
  %90 = vst [vmem:[%s3] sm:$0xff] %v86
  %91 = vst [vmem:[%s3 + $0x8] sm:$0xff] %v87
  // Predicated region
  $region14: #{generator_forward.14} parent=0 // pred_check
    _
  $region15: #{generator_forward.14} parent=0 // pred_check_branch
    %93 = sbr.rel (0) target = $region17
  $region16: #{generator_forward.14} parent=0 // pred_region
    _
  $region17: #{generator_forward.14} parent=0 // pred_fallthru
    _
  // Predicated region
  $region18: #{generator_forward.14} parent=0 // pred_check
    _
  $region19: #{generator_forward.14} parent=0 // pred_check_branch
    %95 = sbr.rel (0) target = $region21
  $region20: #{generator_forward.14} parent=0 // pred_region
    _
  $region21: #{generator_forward.14} parent=0 // pred_fallthru
    _

// kernel: generator_forward.13
$region0: #{generator_forward.13}
  #allocation0 [shape = 'u32[]', space=smem, size = 0x4, offset = 0x4, fixed_abs, tag = 'smem constant byte address 0x4 - core index']
  #allocation1 [shape = 'u32[144,128]{1,0:T(1,128)}', space=vmem, size = 0x12000, scoped, tag = 'internal scratch']
  %s0 = inlined_call_operand.vmem [shape: bf16[8,256], index: 0, kind: input, shape index: {}]
  %s1 = inlined_call_operand.hbm [shape: bf16[256,2048], index: 1, kind: input, shape index: {}]
  %s2 = inlined_call_operand.vmem [shape: f32[8,2048], index: 2, kind: output, shape index: {}]
  %s3 = sld [smem:[#allocation0]]
  $region22: #{generator_forward.13} parent=0
    _
  %s5 = ssub.s32 1, %s3
  %s6 = scalar_select 0, %s5, %s3
  $region1: #{generator_forward.13} parent=0
    #allocation2 [shape = 'u8[1048576]{0}', space=vmem, size = 0x100000, scoped, tag = 'input window, operand 1, single buffered']
    #allocation3 [shape = 's32[1]{0}', space=sflag, size = 0x4, scoped, tag = 'scoped memory for generator_forward.13']
    %7 = vsyncpa [#allocation3], 0
    // Predicated region
    $region2: #{generator_forward.13} parent=1 // pred_check
      _
    $region3: #{generator_forward.13} parent=1 // pred_check_branch
      %9 = sbr.rel (0) target = $region5
    $region4: #{generator_forward.13} parent=1 // pred_region
      _
    $region5: #{generator_forward.13} parent=1 // pred_fallthru
      _
    // Predicated region
    $region6: #{generator_forward.13} parent=1 // pred_check
      _
    $region7: #{generator_forward.13} parent=1 // pred_check_branch
      %11 = sbr.rel (0) target = $region9
    $region8: #{generator_forward.13} parent=1 // pred_region
      %s13 = ssub.s32 32768, 32768
      %14 = vsyncadd [#allocation3], %s13
      %s15 = sshll.u32 [#allocation2], 4
      %s16 = int_to_ptr.vmem [resolvable:$true] %s15
      %21 = dma.hbm_to_vmem [thread:$0]  %s1, 32768, %s16, [#allocation3], 1024, 1024, 64
    $region9: #{generator_forward.13} parent=1 // pred_fallthru
      _
    // Predicated region
    $region10: #{generator_forward.13} parent=1 // pred_check
      _
    $region11: #{generator_forward.13} parent=1 // pred_check_branch
      %23 = sbr.rel (0) target = $region13
    $region12: #{generator_forward.13} parent=1 // pred_region
      %24 = dma.done [#allocation3], 32768
    $region13: #{generator_forward.13} parent=1 // pred_fallthru
      _
    %v25 = vld [vmem:[%s0] sm:$0xff]
    %v26 = vld [vmem:[#allocation2] sm:$0xff]
    %v27 = vld [vmem:[#allocation2 + $0x8] sm:$0xff]
    %v28 = vld [vmem:[#allocation2 + $0x10] sm:$0xff]
    %v29 = vld [vmem:[#allocation2 + $0x18] sm:$0xff]
    %v30 = vld [vmem:[#allocation2 + $0x20] sm:$0xff]
    %v31 = vld [vmem:[#allocation2 + $0x28] sm:$0xff]
    %v32 = vld [vmem:[#allocation2 + $0x30] sm:$0xff]
    %v33 = vld [vmem:[#allocation2 + $0x38] sm:$0xff]
    %v34 = vld [vmem:[#allocation2 + $0x40] sm:$0xff]
    %v35 = vld [vmem:[#allocation2 + $0x48] sm:$0xff]
    %v36 = vld [vmem:[#allocation2 + $0x50] sm:$0xff]
    %v37 = vld [vmem:[#allocation2 + $0x58] sm:$0xff]
    %v38 = vld [vmem:[#allocation2 + $0x60] sm:$0xff]
    %v39 = vld [vmem:[#allocation2 + $0x68] sm:$0xff]
    %v40 = vld [vmem:[#allocation2 + $0x70] sm:$0xff]
    %v41 = vld [vmem:[#allocation2 + $0x78] sm:$0xff]
    %v42 = vld [vmem:[#allocation2 + $0x80] sm:$0xff]
    %v43 = vld [vmem:[#allocation2 + $0x88] sm:$0xff]
    %v44 = vld [vmem:[#allocation2 + $0x90] sm:$0xff]
    %v45 = vld [vmem:[#allocation2 + $0x98] sm:$0xff]
    %v46 = vld [vmem:[#allocation2 + $0xa0] sm:$0xff]
    %v47 = vld [vmem:[#allocation2 + $0xa8] sm:$0xff]
    %v48 = vld [vmem:[#allocation2 + $0xb0] sm:$0xff]
    %v49 = vld [vmem:[#allocation2 + $0xb8] sm:$0xff]
    %v50 = vld [vmem:[#allocation2 + $0xc0] sm:$0xff]
    %v51 = vld [vmem:[#allocation2 + $0xc8] sm:$0xff]
    %v52 = vld [vmem:[#allocation2 + $0xd0] sm:$0xff]
    %v53 = vld [vmem:[#allocation2 + $0xd8] sm:$0xff]
    %v54 = vld [vmem:[#allocation2 + $0xe0] sm:$0xff]
    %v55 = vld [vmem:[#allocation2 + $0xe8] sm:$0xff]
    %v56 = vld [vmem:[#allocation2 + $0xf0] sm:$0xff]
    %v57 = vld [vmem:[#allocation2 + $0xf8] sm:$0xff]
    %v58 = vld [vmem:[#allocation2 + $0x100] sm:$0xff]
    %v59 = vld [vmem:[#allocation2 + $0x108] sm:$0xff]
    %v60 = vld [vmem:[#allocation2 + $0x110] sm:$0xff]
    %v61 = vld [vmem:[#allocation2 + $0x118] sm:$0xff]
    %v62 = vld [vmem:[#allocation2 + $0x120] sm:$0xff]
    %v63 = vld [vmem:[#allocation2 + $0x128] sm:$0xff]
    %v64 = vld [vmem:[#allocation2 + $0x130] sm:$0xff]
    %v65 = vld [vmem:[#allocation2 + $0x138] sm:$0xff]
    %v66 = vld [vmem:[#allocation2 + $0x140] sm:$0xff]
    %v67 = vld [vmem:[#allocation2 + $0x148] sm:$0xff]
    %v68 = vld [vmem:[#allocation2 + $0x150] sm:$0xff]
    %v69 = vld [vmem:[#allocation2 + $0x158] sm:$0xff]
    %v70 = vld [vmem:[#allocation2 + $0x160] sm:$0xff]
    %v71 = vld [vmem:[#allocation2 + $0x168] sm:$0xff]
    %v72 = vld [vmem:[#allocation2 + $0x170] sm:$0xff]
    %v73 = vld [vmem:[#allocation2 + $0x178] sm:$0xff]
    %v74 = vld [vmem:[#allocation2 + $0x180] sm:$0xff]
    %v75 = vld [vmem:[#allocation2 + $0x188] sm:$0xff]
    %v76 = vld [vmem:[#allocation2 + $0x190] sm:$0xff]
    %v77 = vld [vmem:[#allocation2 + $0x198] sm:$0xff]
    %v78 = vld [vmem:[#allocation2 + $0x1a0] sm:$0xff]
    %v79 = vld [vmem:[#allocation2 + $0x1a8] sm:$0xff]
    %v80 = vld [vmem:[#allocation2 + $0x1b0] sm:$0xff]
    %v81 = vld [vmem:[#allocation2 + $0x1b8] sm:$0xff]
    %v82 = vld [vmem:[#allocation2 + $0x1c0] sm:$0xff]
    %v83 = vld [vmem:[#allocation2 + $0x1c8] sm:$0xff]
    %v84 = vld [vmem:[#allocation2 + $0x1d0] sm:$0xff]
    %v85 = vld [vmem:[#allocation2 + $0x1d8] sm:$0xff]
    %v86 = vld [vmem:[#allocation2 + $0x1e0] sm:$0xff]
    %v87 = vld [vmem:[#allocation2 + $0x1e8] sm:$0xff]
    %v88 = vld [vmem:[#allocation2 + $0x1f0] sm:$0xff]
    %v89 = vld [vmem:[#allocation2 + $0x1f8] sm:$0xff]
    %v90 = vld [vmem:[#allocation2 + $0x200] sm:$0xff]
    %v91 = vld [vmem:[#allocation2 + $0x208] sm:$0xff]
    %v92 = vld [vmem:[#allocation2 + $0x210] sm:$0xff]
    %v93 = vld [vmem:[#allocation2 + $0x218] sm:$0xff]
    %v94 = vld [vmem:[#allocation2 + $0x220] sm:$0xff]
    %v95 = vld [vmem:[#allocation2 + $0x228] sm:$0xff]
    %v96 = vld [vmem:[#allocation2 + $0x230] sm:$0xff]
    %v97 = vld [vmem:[#allocation2 + $0x238] sm:$0xff]
    %v98 = vld [vmem:[#allocation2 + $0x240] sm:$0xff]
    %v99 = vld [vmem:[#allocation2 + $0x248] sm:$0xff]
    %v100 = vld [vmem:[#allocation2 + $0x250] sm:$0xff]
    %v101 = vld [vmem:[#allocation2 + $0x258] sm:$0xff]
    %v102 = vld [vmem:[#allocation2 + $0x260] sm:$0xff]
    %v103 = vld [vmem:[#allocation2 + $0x268] sm:$0xff]
    %v104 = vld [vmem:[#allocation2 + $0x270] sm:$0xff]
    %v105 = vld [vmem:[#allocation2 + $0x278] sm:$0xff]
    %v106 = vld [vmem:[#allocation2 + $0x280] sm:$0xff]
    %v107 = vld [vmem:[#allocation2 + $0x288] sm:$0xff]
    %v108 = vld [vmem:[#allocation2 + $0x290] sm:$0xff]
    %v109 = vld [vmem:[#allocation2 + $0x298] sm:$0xff]
    %v110 = vld [vmem:[#allocation2 + $0x2a0] sm:$0xff]
    %v111 = vld [vmem:[#allocation2 + $0x2a8] sm:$0xff]
    %v112 = vld [vmem:[#allocation2 + $0x2b0] sm:$0xff]
    %v113 = vld [vmem:[#allocation2 + $0x2b8] sm:$0xff]
    %v114 = vld [vmem:[#allocation2 + $0x2c0] sm:$0xff]
    %v115 = vld [vmem:[#allocation2 + $0x2c8] sm:$0xff]
    %v116 = vld [vmem:[#allocation2 + $0x2d0] sm:$0xff]
    %v117 = vld [vmem:[#allocation2 + $0x2d8] sm:$0xff]
    %v118 = vld [vmem:[#allocation2 + $0x2e0] sm:$0xff]
    %v119 = vld [vmem:[#allocation2 + $0x2e8] sm:$0xff]
    %v120 = vld [vmem:[#allocation2 + $0x2f0] sm:$0xff]
    %v121 = vld [vmem:[#allocation2 + $0x2f8] sm:$0xff]
    %v122 = vld [vmem:[#allocation2 + $0x300] sm:$0xff]
    %v123 = vld [vmem:[#allocation2 + $0x308] sm:$0xff]
    %v124 = vld [vmem:[#allocation2 + $0x310] sm:$0xff]
    %v125 = vld [vmem:[#allocation2 + $0x318] sm:$0xff]
    %v126 = vld [vmem:[#allocation2 + $0x320] sm:$0xff]
    %v127 = vld [vmem:[#allocation2 + $0x328] sm:$0xff]
    %v128 = vld [vmem:[#allocation2 + $0x330] sm:$0xff]
    %v129 = vld [vmem:[#allocation2 + $0x338] sm:$0xff]
    %v130 = vld [vmem:[#allocation2 + $0x340] sm:$0xff]
    %v131 = vld [vmem:[#allocation2 + $0x348] sm:$0xff]
    %v132 = vld [vmem:[#allocation2 + $0x350] sm:$0xff]
    %v133 = vld [vmem:[#allocation2 + $0x358] sm:$0xff]
    %v134 = vld [vmem:[#allocation2 + $0x360] sm:$0xff]
    %v135 = vld [vmem:[#allocation2 + $0x368] sm:$0xff]
    %v136 = vld [vmem:[#allocation2 + $0x370] sm:$0xff]
    %v137 = vld [vmem:[#allocation2 + $0x378] sm:$0xff]
    %v138 = vld [vmem:[#allocation2 + $0x380] sm:$0xff]
    %v139 = vld [vmem:[#allocation2 + $0x388] sm:$0xff]
    %v140 = vld [vmem:[#allocation2 + $0x390] sm:$0xff]
    %v141 = vld [vmem:[#allocation2 + $0x398] sm:$0xff]
    %v142 = vld [vmem:[#allocation2 + $0x3a0] sm:$0xff]
    %v143 = vld [vmem:[#allocation2 + $0x3a8] sm:$0xff]
    %v144 = vld [vmem:[#allocation2 + $0x3b0] sm:$0xff]
    %v145 = vld [vmem:[#allocation2 + $0x3b8] sm:$0xff]
    %v146 = vld [vmem:[#allocation2 + $0x3c0] sm:$0xff]
    %v147 = vld [vmem:[#allocation2 + $0x3c8] sm:$0xff]
    %v148 = vld [vmem:[#allocation2 + $0x3d0] sm:$0xff]
    %v149 = vld [vmem:[#allocation2 + $0x3d8] sm:$0xff]
    %v150 = vld [vmem:[#allocation2 + $0x3e0] sm:$0xff]
    %v151 = vld [vmem:[#allocation2 + $0x3e8] sm:$0xff]
    %v152 = vld [vmem:[#allocation2 + $0x3f0] sm:$0xff]
    %v153 = vld [vmem:[#allocation2 + $0x3f8] sm:$0xff]
    %v154 = vld [vmem:[#allocation2 + $0x400] sm:$0xff]
    %v155 = vld [vmem:[#allocation2 + $0x408] sm:$0xff]
    %v156 = vld [vmem:[#allocation2 + $0x410] sm:$0xff]
    %v157 = vld [vmem:[#allocation2 + $0x418] sm:$0xff]
    %v158 = vld [vmem:[#allocation2 + $0x420] sm:$0xff]
    %v159 = vld [vmem:[#allocation2 + $0x428] sm:$0xff]
    %v160 = vld [vmem:[#allocation2 + $0x430] sm:$0xff]
    %v161 = vld [vmem:[#allocation2 + $0x438] sm:$0xff]
    %v162 = vld [vmem:[#allocation2 + $0x440] sm:$0xff]
    %v163 = vld [vmem:[#allocation2 + $0x448] sm:$0xff]
    %v164 = vld [vmem:[#allocation2 + $0x450] sm:$0xff]
    %v165 = vld [vmem:[#allocation2 + $0x458] sm:$0xff]
    %v166 = vld [vmem:[#allocation2 + $0x460] sm:$0xff]
    %v167 = vld [vmem:[#allocation2 + $0x468] sm:$0xff]
    %v168 = vld [vmem:[#allocation2 + $0x470] sm:$0xff]
    %v169 = vld [vmem:[#allocation2 + $0x478] sm:$0xff]
    %v170 = vld [vmem:[#allocation2 + $0x480] sm:$0xff]
    %v171 = vld [vmem:[#allocation2 + $0x488] sm:$0xff]
    %v172 = vld [vmem:[#allocation2 + $0x490] sm:$0xff]
    %v173 = vld [vmem:[#allocation2 + $0x498] sm:$0xff]
    %v174 = vld [vmem:[#allocation2 + $0x4a0] sm:$0xff]
    %v175 = vld [vmem:[#allocation2 + $0x4a8] sm:$0xff]
    %v176 = vld [vmem:[#allocation2 + $0x4b0] sm:$0xff]
    %v177 = vld [vmem:[#allocation2 + $0x4b8] sm:$0xff]
    %v178 = vld [vmem:[#allocation2 + $0x4c0] sm:$0xff]
    %v179 = vld [vmem:[#allocation2 + $0x4c8] sm:$0xff]
    %v180 = vld [vmem:[#allocation2 + $0x4d0] sm:$0xff]
    %v181 = vld [vmem:[#allocation2 + $0x4d8] sm:$0xff]
    %v182 = vld [vmem:[#allocation2 + $0x4e0] sm:$0xff]
    %v183 = vld [vmem:[#allocation2 + $0x4e8] sm:$0xff]
    %v184 = vld [vmem:[#allocation2 + $0x4f0] sm:$0xff]
    %v185 = vld [vmem:[#allocation2 + $0x4f8] sm:$0xff]
    %v186 = vld [vmem:[#allocation2 + $0x500] sm:$0xff]
    %v187 = vld [vmem:[#allocation2 + $0x508] sm:$0xff]
    %v188 = vld [vmem:[#allocation2 + $0x510] sm:$0xff]
    %v189 = vld [vmem:[#allocation2 + $0x518] sm:$0xff]
    %v190 = vld [vmem:[#allocation2 + $0x520] sm:$0xff]
    %v191 = vld [vmem:[#allocation2 + $0x528] sm:$0xff]
    %v192 = vld [vmem:[#allocation2 + $0x530] sm:$0xff]
    %v193 = vld [vmem:[#allocation2 + $0x538] sm:$0xff]
    %v194 = vld [vmem:[#allocation2 + $0x540] sm:$0xff]
    %v195 = vld [vmem:[#allocation2 + $0x548] sm:$0xff]
    %v196 = vld [vmem:[#allocation2 + $0x550] sm:$0xff]
    %v197 = vld [vmem:[#allocation2 + $0x558] sm:$0xff]
    %v198 = vld [vmem:[#allocation2 + $0x560] sm:$0xff]
    %v199 = vld [vmem:[#allocation2 + $0x568] sm:$0xff]
    %v200 = vld [vmem:[#allocation2 + $0x570] sm:$0xff]
    %v201 = vld [vmem:[#allocation2 + $0x578] sm:$0xff]
    %v202 = vld [vmem:[#allocation2 + $0x580] sm:$0xff]
    %v203 = vld [vmem:[#allocation2 + $0x588] sm:$0xff]
    %v204 = vld [vmem:[#allocation2 + $0x590] sm:$0xff]
    %v205 = vld [vmem:[#allocation2 + $0x598] sm:$0xff]
    %v206 = vld [vmem:[#allocation2 + $0x5a0] sm:$0xff]
    %v207 = vld [vmem:[#allocation2 + $0x5a8] sm:$0xff]
    %v208 = vld [vmem:[#allocation2 + $0x5b0] sm:$0xff]
    %v209 = vld [vmem:[#allocation2 + $0x5b8] sm:$0xff]
    %v210 = vld [vmem:[#allocation2 + $0x5c0] sm:$0xff]
    %v211 = vld [vmem:[#allocation2 + $0x5c8] sm:$0xff]
    %v212 = vld [vmem:[#allocation2 + $0x5d0] sm:$0xff]
    %v213 = vld [vmem:[#allocation2 + $0x5d8] sm:$0xff]
    %v214 = vld [vmem:[#allocation2 + $0x5e0] sm:$0xff]
    %v215 = vld [vmem:[#allocation2 + $0x5e8] sm:$0xff]
    %v216 = vld [vmem:[#allocation2 + $0x5f0] sm:$0xff]
    %v217 = vld [vmem:[#allocation2 + $0x5f8] sm:$0xff]
    %v218 = vld [vmem:[#allocation2 + $0x600] sm:$0xff]
    %v219 = vld [vmem:[#allocation2 + $0x608] sm:$0xff]
    %v220 = vld [vmem:[#allocation2 + $0x610] sm:$0xff]
    %v221 = vld [vmem:[#allocation2 + $0x618] sm:$0xff]
    %v222 = vld [vmem:[#allocation2 + $0x620] sm:$0xff]
    %v223 = vld [vmem:[#allocation2 + $0x628] sm:$0xff]
    %v224 = vld [vmem:[#allocation2 + $0x630] sm:$0xff]
    %v225 = vld [vmem:[#allocation2 + $0x638] sm:$0xff]
    %v226 = vld [vmem:[#allocation2 + $0x640] sm:$0xff]
    %v227 = vld [vmem:[#allocation2 + $0x648] sm:$0xff]
    %v228 = vld [vmem:[#allocation2 + $0x650] sm:$0xff]
    %v229 = vld [vmem:[#allocation2 + $0x658] sm:$0xff]
    %v230 = vld [vmem:[#allocation2 + $0x660] sm:$0xff]
    %v231 = vld [vmem:[#allocation2 + $0x668] sm:$0xff]
    %v232 = vld [vmem:[#allocation2 + $0x670] sm:$0xff]
    %v233 = vld [vmem:[#allocation2 + $0x678] sm:$0xff]
    %v234 = vld [vmem:[#allocation2 + $0x680] sm:$0xff]
    %v235 = vld [vmem:[#allocation2 + $0x688] sm:$0xff]
    %v236 = vld [vmem:[#allocation2 + $0x690] sm:$0xff]
    %v237 = vld [vmem:[#allocation2 + $0x698] sm:$0xff]
    %v238 = vld [vmem:[#allocation2 + $0x6a0] sm:$0xff]
    %v239 = vld [vmem:[#allocation2 + $0x6a8] sm:$0xff]
    %v240 = vld [vmem:[#allocation2 + $0x6b0] sm:$0xff]
    %v241 = vld [vmem:[#allocation2 + $0x6b8] sm:$0xff]
    %v242 = vld [vmem:[#allocation2 + $0x6c0] sm:$0xff]
    %v243 = vld [vmem:[#allocation2 + $0x6c8] sm:$0xff]
    %v244 = vld [vmem:[#allocation2 + $0x6d0] sm:$0xff]
    %v245 = vld [vmem:[#allocation2 + $0x6d8] sm:$0xff]
    %v246 = vld [vmem:[#allocation2 + $0x6e0] sm:$0xff]
    %v247 = vld [vmem:[#allocation2 + $0x6e8] sm:$0xff]
    %v248 = vld [vmem:[#allocation2 + $0x6f0] sm:$0xff]
    %v249 = vld [vmem:[#allocation2 + $0x6f8] sm:$0xff]
    %v250 = vld [vmem:[#allocation2 + $0x700] sm:$0xff]
    %v251 = vld [vmem:[#allocation2 + $0x708] sm:$0xff]
    %v252 = vld [vmem:[#allocation2 + $0x710] sm:$0xff]
    %v253 = vld [vmem:[#allocation2 + $0x718] sm:$0xff]
    %v254 = vld [vmem:[#allocation2 + $0x720] sm:$0xff]
    %v255 = vld [vmem:[#allocation2 + $0x728] sm:$0xff]
    %v256 = vld [vmem:[#allocation2 + $0x730] sm:$0xff]
    %v257 = vld [vmem:[#allocation2 + $0x738] sm:$0xff]
    %v258 = vld [vmem:[#allocation2 + $0x740] sm:$0xff]
    %v259 = vld [vmem:[#allocation2 + $0x748] sm:$0xff]
    %v260 = vld [vmem:[#allocation2 + $0x750] sm:$0xff]
    %v261 = vld [vmem:[#allocation2 + $0x758] sm:$0xff]
    %v262 = vld [vmem:[#allocation2 + $0x760] sm:$0xff]
    %v263 = vld [vmem:[#allocation2 + $0x768] sm:$0xff]
    %v264 = vld [vmem:[#allocation2 + $0x770] sm:$0xff]
    %v265 = vld [vmem:[#allocation2 + $0x778] sm:$0xff]
    %v266 = vld [vmem:[#allocation2 + $0x780] sm:$0xff]
    %v267 = vld [vmem:[#allocation2 + $0x788] sm:$0xff]
    %v268 = vld [vmem:[#allocation2 + $0x790] sm:$0xff]
    %v269 = vld [vmem:[#allocation2 + $0x798] sm:$0xff]
    %v270 = vld [vmem:[#allocation2 + $0x7a0] sm:$0xff]
    %v271 = vld [vmem:[#allocation2 + $0x7a8] sm:$0xff]
    %v272 = vld [vmem:[#allocation2 + $0x7b0] sm:$0xff]
    %v273 = vld [vmem:[#allocation2 + $0x7b8] sm:$0xff]
    %v274 = vld [vmem:[#allocation2 + $0x7c0] sm:$0xff]
    %v275 = vld [vmem:[#allocation2 + $0x7c8] sm:$0xff]
    %v276 = vld [vmem:[#allocation2 + $0x7d0] sm:$0xff]
    %v277 = vld [vmem:[#allocation2 + $0x7d8] sm:$0xff]
    %v278 = vld [vmem:[#allocation2 + $0x7e0] sm:$0xff]
    %v279 = vld [vmem:[#allocation2 + $0x7e8] sm:$0xff]
    %v280 = vld [vmem:[#allocation2 + $0x7f0] sm:$0xff]
    %v281 = vld [vmem:[#allocation2 + $0x7f8] sm:$0xff]
    %v283 = vunpack.c.l.b16 %v25
    %v284 = vunpack.c.h.b16 %v25
    %v285 = vpack.c.b16 %v283, %v283
    %v286 = vpack.c.b16 %v284, %v284
    %v545 = vunpack.c.l.b16 %v26
    %v546 = vunpack.c.h.b16 %v26
    %v547 = vunpack.c.l.b16 %v27
    %v548 = vunpack.c.h.b16 %v27
    %v549 = vunpack.c.l.b16 %v28
    %v550 = vunpack.c.h.b16 %v28
    %v551 = vunpack.c.l.b16 %v29
    %v552 = vunpack.c.h.b16 %v29
    %v553 = vunpack.c.l.b16 %v30
    %v554 = vunpack.c.h.b16 %v30
    %v555 = vunpack.c.l.b16 %v31
    %v556 = vunpack.c.h.b16 %v31
    %v557 = vunpack.c.l.b16 %v32
    %v558 = vunpack.c.h.b16 %v32
    %v559 = vunpack.c.l.b16 %v33
    %v560 = vunpack.c.h.b16 %v33
    %v561 = vunpack.c.l.b16 %v34
    %v562 = vunpack.c.h.b16 %v34
    %v563 = vunpack.c.l.b16 %v35
    %v564 = vunpack.c.h.b16 %v35
    %v565 = vunpack.c.l.b16 %v36
    %v566 = vunpack.c.h.b16 %v36
    %v567 = vunpack.c.l.b16 %v37
    %v568 = vunpack.c.h.b16 %v37
    %v569 = vunpack.c.l.b16 %v38
    %v570 = vunpack.c.h.b16 %v38
    %v571 = vunpack.c.l.b16 %v39
    %v572 = vunpack.c.h.b16 %v39
    %v573 = vunpack.c.l.b16 %v40
    %v574 = vunpack.c.h.b16 %v40
    %v575 = vunpack.c.l.b16 %v41
    %v576 = vunpack.c.h.b16 %v41
    %v577 = vunpack.c.l.b16 %v42
    %v578 = vunpack.c.h.b16 %v42
    %v579 = vunpack.c.l.b16 %v43
    %v580 = vunpack.c.h.b16 %v43
    %v581 = vunpack.c.l.b16 %v44
    %v582 = vunpack.c.h.b16 %v44
    %v583 = vunpack.c.l.b16 %v45
    %v584 = vunpack.c.h.b16 %v45
    %v585 = vunpack.c.l.b16 %v46
    %v586 = vunpack.c.h.b16 %v46
    %v587 = vunpack.c.l.b16 %v47
    %v588 = vunpack.c.h.b16 %v47
    %v589 = vunpack.c.l.b16 %v48
    %v590 = vunpack.c.h.b16 %v48
    %v591 = vunpack.c.l.b16 %v49
    %v592 = vunpack.c.h.b16 %v49
    %v593 = vunpack.c.l.b16 %v50
    %v594 = vunpack.c.h.b16 %v50
    %v595 = vunpack.c.l.b16 %v51
    %v596 = vunpack.c.h.b16 %v51
    %v597 = vunpack.c.l.b16 %v52
    %v598 = vunpack.c.h.b16 %v52
    %v599 = vunpack.c.l.b16 %v53
    %v600 = vunpack.c.h.b16 %v53
    %v601 = vunpack.c.l.b16 %v54
    %v602 = vunpack.c.h.b16 %v54
    %v603 = vunpack.c.l.b16 %v55
    %v604 = vunpack.c.h.b16 %v55
    %v605 = vunpack.c.l.b16 %v56
    %v606 = vunpack.c.h.b16 %v56
    %v607 = vunpack.c.l.b16 %v57
    %v608 = vunpack.c.h.b16 %v57
    %v609 = vunpack.c.l.b16 %v58
    %v610 = vunpack.c.h.b16 %v58
    %v611 = vunpack.c.l.b16 %v59
    %v612 = vunpack.c.h.b16 %v59
    %v613 = vunpack.c.l.b16 %v60
    %v614 = vunpack.c.h.b16 %v60
    %v615 = vunpack.c.l.b16 %v61
    %v616 = vunpack.c.h.b16 %v61
    %v617 = vunpack.c.l.b16 %v62
    %v618 = vunpack.c.h.b16 %v62
    %v619 = vunpack.c.l.b16 %v63
    %v620 = vunpack.c.h.b16 %v63
    %v621 = vunpack.c.l.b16 %v64
    %v622 = vunpack.c.h.b16 %v64
    %v623 = vunpack.c.l.b16 %v65
    %v624 = vunpack.c.h.b16 %v65
    %v625 = vunpack.c.l.b16 %v66
    %v626 = vunpack.c.h.b16 %v66
    %v627 = vunpack.c.l.b16 %v67
    %v628 = vunpack.c.h.b16 %v67
    %v629 = vunpack.c.l.b16 %v68
    %v630 = vunpack.c.h.b16 %v68
    %v631 = vunpack.c.l.b16 %v69
    %v632 = vunpack.c.h.b16 %v69
    %v633 = vunpack.c.l.b16 %v70
    %v634 = vunpack.c.h.b16 %v70
    %v635 = vunpack.c.l.b16 %v71
    %v636 = vunpack.c.h.b16 %v71
    %v637 = vunpack.c.l.b16 %v72
    %v638 = vunpack.c.h.b16 %v72
    %v639 = vunpack.c.l.b16 %v73
    %v640 = vunpack.c.h.b16 %v73
    %v641 = vunpack.c.l.b16 %v74
    %v642 = vunpack.c.h.b16 %v74
    %v643 = vunpack.c.l.b16 %v75
    %v644 = vunpack.c.h.b16 %v75
    %v645 = vunpack.c.l.b16 %v76
    %v646 = vunpack.c.h.b16 %v76
    %v647 = vunpack.c.l.b16 %v77
    %v648 = vunpack.c.h.b16 %v77
    %v649 = vunpack.c.l.b16 %v78
    %v650 = vunpack.c.h.b16 %v78
    %v651 = vunpack.c.l.b16 %v79
    %v652 = vunpack.c.h.b16 %v79
    %v653 = vunpack.c.l.b16 %v80
    %v654 = vunpack.c.h.b16 %v80
    %v655 = vunpack.c.l.b16 %v81
    %v656 = vunpack.c.h.b16 %v81
    %v657 = vunpack.c.l.b16 %v82
    %v658 = vunpack.c.h.b16 %v82
    %v659 = vunpack.c.l.b16 %v83
    %v660 = vunpack.c.h.b16 %v83
    %v661 = vunpack.c.l.b16 %v84
    %v662 = vunpack.c.h.b16 %v84
    %v663 = vunpack.c.l.b16 %v85
    %v664 = vunpack.c.h.b16 %v85
    %v665 = vunpack.c.l.b16 %v86
    %v666 = vunpack.c.h.b16 %v86
    %v667 = vunpack.c.l.b16 %v87
    %v668 = vunpack.c.h.b16 %v87
    %v669 = vunpack.c.l.b16 %v88
    %v670 = vunpack.c.h.b16 %v88
    %v671 = vunpack.c.l.b16 %v89
    %v672 = vunpack.c.h.b16 %v89
    %v673 = vunpack.c.l.b16 %v90
    %v674 = vunpack.c.h.b16 %v90
    %v675 = vunpack.c.l.b16 %v91
    %v676 = vunpack.c.h.b16 %v91
    %v677 = vunpack.c.l.b16 %v92
    %v678 = vunpack.c.h.b16 %v92
    %v679 = vunpack.c.l.b16 %v93
    %v680 = vunpack.c.h.b16 %v93
    %v681 = vunpack.c.l.b16 %v94
    %v682 = vunpack.c.h.b16 %v94
    %v683 = vunpack.c.l.b16 %v95
    %v684 = vunpack.c.h.b16 %v95
    %v685 = vunpack.c.l.b16 %v96
    %v686 = vunpack.c.h.b16 %v96
    %v687 = vunpack.c.l.b16 %v97
    %v688 = vunpack.c.h.b16 %v97
    %v689 = vunpack.c.l.b16 %v98
    %v690 = vunpack.c.h.b16 %v98
    %v691 = vunpack.c.l.b16 %v99
    %v692 = vunpack.c.h.b16 %v99
    %v693 = vunpack.c.l.b16 %v100
    %v694 = vunpack.c.h.b16 %v100
    %v695 = vunpack.c.l.b16 %v101
    %v696 = vunpack.c.h.b16 %v101
    %v697 = vunpack.c.l.b16 %v102
    %v698 = vunpack.c.h.b16 %v102
    %v699 = vunpack.c.l.b16 %v103
    %v700 = vunpack.c.h.b16 %v103
    %v701 = vunpack.c.l.b16 %v104
    %v702 = vunpack.c.h.b16 %v104
    %v703 = vunpack.c.l.b16 %v105
    %v704 = vunpack.c.h.b16 %v105
    %v705 = vunpack.c.l.b16 %v106
    %v706 = vunpack.c.h.b16 %v106
    %v707 = vunpack.c.l.b16 %v107
    %v708 = vunpack.c.h.b16 %v107
    %v709 = vunpack.c.l.b16 %v108
    %v710 = vunpack.c.h.b16 %v108
    %v711 = vunpack.c.l.b16 %v109
    %v712 = vunpack.c.h.b16 %v109
    %v713 = vunpack.c.l.b16 %v110
    %v714 = vunpack.c.h.b16 %v110
    %v715 = vunpack.c.l.b16 %v111
    %v716 = vunpack.c.h.b16 %v111
    %v717 = vunpack.c.l.b16 %v112
    %v718 = vunpack.c.h.b16 %v112
    %v719 = vunpack.c.l.b16 %v113
    %v720 = vunpack.c.h.b16 %v113
    %v721 = vunpack.c.l.b16 %v114
    %v722 = vunpack.c.h.b16 %v114
    %v723 = vunpack.c.l.b16 %v115
    %v724 = vunpack.c.h.b16 %v115
    %v725 = vunpack.c.l.b16 %v116
    %v726 = vunpack.c.h.b16 %v116
    %v727 = vunpack.c.l.b16 %v117
    %v728 = vunpack.c.h.b16 %v117
    %v729 = vunpack.c.l.b16 %v118
    %v730 = vunpack.c.h.b16 %v118
    %v731 = vunpack.c.l.b16 %v119
    %v732 = vunpack.c.h.b16 %v119
    %v733 = vunpack.c.l.b16 %v120
    %v734 = vunpack.c.h.b16 %v120
    %v735 = vunpack.c.l.b16 %v121
    %v736 = vunpack.c.h.b16 %v121
    %v737 = vunpack.c.l.b16 %v122
    %v738 = vunpack.c.h.b16 %v122
    %v739 = vunpack.c.l.b16 %v123
    %v740 = vunpack.c.h.b16 %v123
    %v741 = vunpack.c.l.b16 %v124
    %v742 = vunpack.c.h.b16 %v124
    %v743 = vunpack.c.l.b16 %v125
    %v744 = vunpack.c.h.b16 %v125
    %v745 = vunpack.c.l.b16 %v126
    %v746 = vunpack.c.h.b16 %v126
    %v747 = vunpack.c.l.b16 %v127
    %v748 = vunpack.c.h.b16 %v127
    %v749 = vunpack.c.l.b16 %v128
    %v750 = vunpack.c.h.b16 %v128
    %v751 = vunpack.c.l.b16 %v129
    %v752 = vunpack.c.h.b16 %v129
    %v753 = vunpack.c.l.b16 %v130
    %v754 = vunpack.c.h.b16 %v130
    %v755 = vunpack.c.l.b16 %v131
    %v756 = vunpack.c.h.b16 %v131
    %v757 = vunpack.c.l.b16 %v132
    %v758 = vunpack.c.h.b16 %v132
    %v759 = vunpack.c.l.b16 %v133
    %v760 = vunpack.c.h.b16 %v133
    %v761 = vunpack.c.l.b16 %v134
    %v762 = vunpack.c.h.b16 %v134
    %v763 = vunpack.c.l.b16 %v135
    %v764 = vunpack.c.h.b16 %v135
    %v765 = vunpack.c.l.b16 %v136
    %v766 = vunpack.c.h.b16 %v136
    %v767 = vunpack.c.l.b16 %v137
    %v768 = vunpack.c.h.b16 %v137
    %v769 = vunpack.c.l.b16 %v138
    %v770 = vunpack.c.h.b16 %v138
    %v771 = vunpack.c.l.b16 %v139
    %v772 = vunpack.c.h.b16 %v139
    %v773 = vunpack.c.l.b16 %v140
    %v774 = vunpack.c.h.b16 %v140
    %v775 = vunpack.c.l.b16 %v141
    %v776 = vunpack.c.h.b16 %v141
    %v777 = vunpack.c.l.b16 %v142
    %v778 = vunpack.c.h.b16 %v142
    %v779 = vunpack.c.l.b16 %v143
    %v780 = vunpack.c.h.b16 %v143
    %v781 = vunpack.c.l.b16 %v144
    %v782 = vunpack.c.h.b16 %v144
    %v783 = vunpack.c.l.b16 %v145
    %v784 = vunpack.c.h.b16 %v145
    %v785 = vunpack.c.l.b16 %v146
    %v786 = vunpack.c.h.b16 %v146
    %v787 = vunpack.c.l.b16 %v147
    %v788 = vunpack.c.h.b16 %v147
    %v789 = vunpack.c.l.b16 %v148
    %v790 = vunpack.c.h.b16 %v148
    %v791 = vunpack.c.l.b16 %v149
    %v792 = vunpack.c.h.b16 %v149
    %v793 = vunpack.c.l.b16 %v150
    %v794 = vunpack.c.h.b16 %v150
    %v795 = vunpack.c.l.b16 %v151
    %v796 = vunpack.c.h.b16 %v151
    %v797 = vunpack.c.l.b16 %v152
    %v798 = vunpack.c.h.b16 %v152
    %v799 = vunpack.c.l.b16 %v153
    %v800 = vunpack.c.h.b16 %v153
    %v801 = vunpack.c.l.b16 %v154
    %v802 = vunpack.c.h.b16 %v154
    %v803 = vunpack.c.l.b16 %v155
    %v804 = vunpack.c.h.b16 %v155
    %v805 = vunpack.c.l.b16 %v156
    %v806 = vunpack.c.h.b16 %v156
    %v807 = vunpack.c.l.b16 %v157
    %v808 = vunpack.c.h.b16 %v157
    %v809 = vunpack.c.l.b16 %v158
    %v810 = vunpack.c.h.b16 %v158
    %v811 = vunpack.c.l.b16 %v159
    %v812 = vunpack.c.h.b16 %v159
    %v813 = vunpack.c.l.b16 %v160
    %v814 = vunpack.c.h.b16 %v160
    %v815 = vunpack.c.l.b16 %v161
    %v816 = vunpack.c.h.b16 %v161
    %v817 = vunpack.c.l.b16 %v162
    %v818 = vunpack.c.h.b16 %v162
    %v819 = vunpack.c.l.b16 %v163
    %v820 = vunpack.c.h.b16 %v163
    %v821 = vunpack.c.l.b16 %v164
    %v822 = vunpack.c.h.b16 %v164
    %v823 = vunpack.c.l.b16 %v165
    %v824 = vunpack.c.h.b16 %v165
    %v825 = vunpack.c.l.b16 %v166
    %v826 = vunpack.c.h.b16 %v166
    %v827 = vunpack.c.l.b16 %v167
    %v828 = vunpack.c.h.b16 %v167
    %v829 = vunpack.c.l.b16 %v168
    %v830 = vunpack.c.h.b16 %v168
    %v831 = vunpack.c.l.b16 %v169
    %v832 = vunpack.c.h.b16 %v169
    %v833 = vunpack.c.l.b16 %v170
    %v834 = vunpack.c.h.b16 %v170
    %v835 = vunpack.c.l.b16 %v171
    %v836 = vunpack.c.h.b16 %v171
    %v837 = vunpack.c.l.b16 %v172
    %v838 = vunpack.c.h.b16 %v172
    %v839 = vunpack.c.l.b16 %v173
    %v840 = vunpack.c.h.b16 %v173
    %v841 = vunpack.c.l.b16 %v174
    %v842 = vunpack.c.h.b16 %v174
    %v843 = vunpack.c.l.b16 %v175
    %v844 = vunpack.c.h.b16 %v175
    %v845 = vunpack.c.l.b16 %v176
    %v846 = vunpack.c.h.b16 %v176
    %v847 = vunpack.c.l.b16 %v177
    %v848 = vunpack.c.h.b16 %v177
    %v849 = vunpack.c.l.b16 %v178
    %v850 = vunpack.c.h.b16 %v178
    %v851 = vunpack.c.l.b16 %v179
    %v852 = vunpack.c.h.b16 %v179
    %v853 = vunpack.c.l.b16 %v180
    %v854 = vunpack.c.h.b16 %v180
    %v855 = vunpack.c.l.b16 %v181
    %v856 = vunpack.c.h.b16 %v181
    %v857 = vunpack.c.l.b16 %v182
    %v858 = vunpack.c.h.b16 %v182
    %v859 = vunpack.c.l.b16 %v183
    %v860 = vunpack.c.h.b16 %v183
    %v861 = vunpack.c.l.b16 %v184
    %v862 = vunpack.c.h.b16 %v184
    %v863 = vunpack.c.l.b16 %v185
    %v864 = vunpack.c.h.b16 %v185
    %v865 = vunpack.c.l.b16 %v186
    %v866 = vunpack.c.h.b16 %v186
    %v867 = vunpack.c.l.b16 %v187
    %v868 = vunpack.c.h.b16 %v187
    %v869 = vunpack.c.l.b16 %v188
    %v870 = vunpack.c.h.b16 %v188
    %v871 = vunpack.c.l.b16 %v189
    %v872 = vunpack.c.h.b16 %v189
    %v873 = vunpack.c.l.b16 %v190
    %v874 = vunpack.c.h.b16 %v190
    %v875 = vunpack.c.l.b16 %v191
    %v876 = vunpack.c.h.b16 %v191
    %v877 = vunpack.c.l.b16 %v192
    %v878 = vunpack.c.h.b16 %v192
    %v879 = vunpack.c.l.b16 %v193
    %v880 = vunpack.c.h.b16 %v193
    %v881 = vunpack.c.l.b16 %v194
    %v882 = vunpack.c.h.b16 %v194
    %v883 = vunpack.c.l.b16 %v195
    %v884 = vunpack.c.h.b16 %v195
    %v885 = vunpack.c.l.b16 %v196
    %v886 = vunpack.c.h.b16 %v196
    %v887 = vunpack.c.l.b16 %v197
    %v888 = vunpack.c.h.b16 %v197
    %v889 = vunpack.c.l.b16 %v198
    %v890 = vunpack.c.h.b16 %v198
    %v891 = vunpack.c.l.b16 %v199
    %v892 = vunpack.c.h.b16 %v199
    %v893 = vunpack.c.l.b16 %v200
    %v894 = vunpack.c.h.b16 %v200
    %v895 = vunpack.c.l.b16 %v201
    %v896 = vunpack.c.h.b16 %v201
    %v897 = vunpack.c.l.b16 %v202
    %v898 = vunpack.c.h.b16 %v202
    %v899 = vunpack.c.l.b16 %v203
    %v900 = vunpack.c.h.b16 %v203
    %v901 = vunpack.c.l.b16 %v204
    %v902 = vunpack.c.h.b16 %v204
    %v903 = vunpack.c.l.b16 %v205
    %v904 = vunpack.c.h.b16 %v205
    %v905 = vunpack.c.l.b16 %v206
    %v906 = vunpack.c.h.b16 %v206
    %v907 = vunpack.c.l.b16 %v207
    %v908 = vunpack.c.h.b16 %v207
    %v909 = vunpack.c.l.b16 %v208
    %v910 = vunpack.c.h.b16 %v208
    %v911 = vunpack.c.l.b16 %v209
    %v912 = vunpack.c.h.b16 %v209
    %v913 = vunpack.c.l.b16 %v210
    %v914 = vunpack.c.h.b16 %v210
    %v915 = vunpack.c.l.b16 %v211
    %v916 = vunpack.c.h.b16 %v211
    %v917 = vunpack.c.l.b16 %v212
    %v918 = vunpack.c.h.b16 %v212
    %v919 = vunpack.c.l.b16 %v213
    %v920 = vunpack.c.h.b16 %v213
    %v921 = vunpack.c.l.b16 %v214
    %v922 = vunpack.c.h.b16 %v214
    %v923 = vunpack.c.l.b16 %v215
    %v924 = vunpack.c.h.b16 %v215
    %v925 = vunpack.c.l.b16 %v216
    %v926 = vunpack.c.h.b16 %v216
    %v927 = vunpack.c.l.b16 %v217
    %v928 = vunpack.c.h.b16 %v217
    %v929 = vunpack.c.l.b16 %v218
    %v930 = vunpack.c.h.b16 %v218
    %v931 = vunpack.c.l.b16 %v219
    %v932 = vunpack.c.h.b16 %v219
    %v933 = vunpack.c.l.b16 %v220
    %v934 = vunpack.c.h.b16 %v220
    %v935 = vunpack.c.l.b16 %v221
    %v936 = vunpack.c.h.b16 %v221
    %v937 = vunpack.c.l.b16 %v222
    %v938 = vunpack.c.h.b16 %v222
    %v939 = vunpack.c.l.b16 %v223
    %v940 = vunpack.c.h.b16 %v223
    %v941 = vunpack.c.l.b16 %v224
    %v942 = vunpack.c.h.b16 %v224
    %v943 = vunpack.c.l.b16 %v225
    %v944 = vunpack.c.h.b16 %v225
    %v945 = vunpack.c.l.b16 %v226
    %v946 = vunpack.c.h.b16 %v226
    %v947 = vunpack.c.l.b16 %v227
    %v948 = vunpack.c.h.b16 %v227
    %v949 = vunpack.c.l.b16 %v228
    %v950 = vunpack.c.h.b16 %v228
    %v951 = vunpack.c.l.b16 %v229
    %v952 = vunpack.c.h.b16 %v229
    %v953 = vunpack.c.l.b16 %v230
    %v954 = vunpack.c.h.b16 %v230
    %v955 = vunpack.c.l.b16 %v231
    %v956 = vunpack.c.h.b16 %v231
    %v957 = vunpack.c.l.b16 %v232
    %v958 = vunpack.c.h.b16 %v232
    %v959 = vunpack.c.l.b16 %v233
    %v960 = vunpack.c.h.b16 %v233
    %v961 = vunpack.c.l.b16 %v234
    %v962 = vunpack.c.h.b16 %v234
    %v963 = vunpack.c.l.b16 %v235
    %v964 = vunpack.c.h.b16 %v235
    %v965 = vunpack.c.l.b16 %v236
    %v966 = vunpack.c.h.b16 %v236
    %v967 = vunpack.c.l.b16 %v237
    %v968 = vunpack.c.h.b16 %v237
    %v969 = vunpack.c.l.b16 %v238
    %v970 = vunpack.c.h.b16 %v238
    %v971 = vunpack.c.l.b16 %v239
    %v972 = vunpack.c.h.b16 %v239
    %v973 = vunpack.c.l.b16 %v240
    %v974 = vunpack.c.h.b16 %v240
    %v975 = vunpack.c.l.b16 %v241
    %v976 = vunpack.c.h.b16 %v241
    %v977 = vunpack.c.l.b16 %v242
    %v978 = vunpack.c.h.b16 %v242
    %v979 = vunpack.c.l.b16 %v243
    %v980 = vunpack.c.h.b16 %v243
    %v981 = vunpack.c.l.b16 %v244
    %v982 = vunpack.c.h.b16 %v244
    %v983 = vunpack.c.l.b16 %v245
    %v984 = vunpack.c.h.b16 %v245
    %v985 = vunpack.c.l.b16 %v246
    %v986 = vunpack.c.h.b16 %v246
    %v987 = vunpack.c.l.b16 %v247
    %v988 = vunpack.c.h.b16 %v247
    %v989 = vunpack.c.l.b16 %v248
    %v990 = vunpack.c.h.b16 %v248
    %v991 = vunpack.c.l.b16 %v249
    %v992 = vunpack.c.h.b16 %v249
    %v993 = vunpack.c.l.b16 %v250
    %v994 = vunpack.c.h.b16 %v250
    %v995 = vunpack.c.l.b16 %v251
    %v996 = vunpack.c.h.b16 %v251
    %v997 = vunpack.c.l.b16 %v252
    %v998 = vunpack.c.h.b16 %v252
    %v999 = vunpack.c.l.b16 %v253
    %v1000 = vunpack.c.h.b16 %v253
    %v1001 = vunpack.c.l.b16 %v254
    %v1002 = vunpack.c.h.b16 %v254
    %v1003 = vunpack.c.l.b16 %v255
    %v1004 = vunpack.c.h.b16 %v255
    %v1005 = vunpack.c.l.b16 %v256
    %v1006 = vunpack.c.h.b16 %v256
    %v1007 = vunpack.c.l.b16 %v257
    %v1008 = vunpack.c.h.b16 %v257
    %v1009 = vunpack.c.l.b16 %v258
    %v1010 = vunpack.c.h.b16 %v258
    %v1011 = vunpack.c.l.b16 %v259
    %v1012 = vunpack.c.h.b16 %v259
    %v1013 = vunpack.c.l.b16 %v260
    %v1014 = vunpack.c.h.b16 %v260
    %v1015 = vunpack.c.l.b16 %v261
    %v1016 = vunpack.c.h.b16 %v261
    %v1017 = vunpack.c.l.b16 %v262
    %v1018 = vunpack.c.h.b16 %v262
    %v1019 = vunpack.c.l.b16 %v263
    %v1020 = vunpack.c.h.b16 %v263
    %v1021 = vunpack.c.l.b16 %v264
    %v1022 = vunpack.c.h.b16 %v264
    %v1023 = vunpack.c.l.b16 %v265
    %v1024 = vunpack.c.h.b16 %v265
    %v1025 = vunpack.c.l.b16 %v266
    %v1026 = vunpack.c.h.b16 %v266
    %v1027 = vunpack.c.l.b16 %v267
    %v1028 = vunpack.c.h.b16 %v267
    %v1029 = vunpack.c.l.b16 %v268
    %v1030 = vunpack.c.h.b16 %v268
    %v1031 = vunpack.c.l.b16 %v269
    %v1032 = vunpack.c.h.b16 %v269
    %v1033 = vunpack.c.l.b16 %v270
    %v1034 = vunpack.c.h.b16 %v270
    %v1035 = vunpack.c.l.b16 %v271
    %v1036 = vunpack.c.h.b16 %v271
    %v1037 = vunpack.c.l.b16 %v272
    %v1038 = vunpack.c.h.b16 %v272
    %v1039 = vunpack.c.l.b16 %v273
    %v1040 = vunpack.c.h.b16 %v273
    %v1041 = vunpack.c.l.b16 %v274
    %v1042 = vunpack.c.h.b16 %v274
    %v1043 = vunpack.c.l.b16 %v275
    %v1044 = vunpack.c.h.b16 %v275
    %v1045 = vunpack.c.l.b16 %v276
    %v1046 = vunpack.c.h.b16 %v276
    %v1047 = vunpack.c.l.b16 %v277
    %v1048 = vunpack.c.h.b16 %v277
    %v1049 = vunpack.c.l.b16 %v278
    %v1050 = vunpack.c.h.b16 %v278
    %v1051 = vunpack.c.l.b16 %v279
    %v1052 = vunpack.c.h.b16 %v279
    %v1053 = vunpack.c.l.b16 %v280
    %v1054 = vunpack.c.h.b16 %v280
    %v1055 = vunpack.c.l.b16 %v281
    %v1056 = vunpack.c.h.b16 %v281
    %v1057 = vpack.c.b16 %v561, %v545
    %v1058 = vpack.c.b16 %v562, %v546
    %v1059 = vpack.c.b16 %v563, %v547
    %v1060 = vpack.c.b16 %v564, %v548
    %v1061 = vpack.c.b16 %v565, %v549
    %v1062 = vpack.c.b16 %v566, %v550
    %v1063 = vpack.c.b16 %v567, %v551
    %v1064 = vpack.c.b16 %v568, %v552
    %v1065 = vpack.c.b16 %v569, %v553
    %v1066 = vpack.c.b16 %v570, %v554
    %v1067 = vpack.c.b16 %v571, %v555
    %v1068 = vpack.c.b16 %v572, %v556
    %v1069 = vpack.c.b16 %v573, %v557
    %v1070 = vpack.c.b16 %v574, %v558
    %v1071 = vpack.c.b16 %v575, %v559
    %v1072 = vpack.c.b16 %v576, %v560
    %v1073 = vpack.c.b16 %v593, %v577
    %v1074 = vpack.c.b16 %v594, %v578
    %v1075 = vpack.c.b16 %v595, %v579
    %v1076 = vpack.c.b16 %v596, %v580
    %v1077 = vpack.c.b16 %v597, %v581
    %v1078 = vpack.c.b16 %v598, %v582
    %v1079 = vpack.c.b16 %v599, %v583
    %v1080 = vpack.c.b16 %v600, %v584
    %v1081 = vpack.c.b16 %v601, %v585
    %v1082 = vpack.c.b16 %v602, %v586
    %v1083 = vpack.c.b16 %v603, %v587
    %v1084 = vpack.c.b16 %v604, %v588
    %v1085 = vpack.c.b16 %v605, %v589
    %v1086 = vpack.c.b16 %v606, %v590
    %v1087 = vpack.c.b16 %v607, %v591
    %v1088 = vpack.c.b16 %v608, %v592
    %v1089 = vpack.c.b16 %v625, %v609
    %v1090 = vpack.c.b16 %v626, %v610
    %v1091 = vpack.c.b16 %v627, %v611
    %v1092 = vpack.c.b16 %v628, %v612
    %v1093 = vpack.c.b16 %v629, %v613
    %v1094 = vpack.c.b16 %v630, %v614
    %v1095 = vpack.c.b16 %v631, %v615
    %v1096 = vpack.c.b16 %v632, %v616
    %v1097 = vpack.c.b16 %v633, %v617
    %v1098 = vpack.c.b16 %v634, %v618
    %v1099 = vpack.c.b16 %v635, %v619
    %v1100 = vpack.c.b16 %v636, %v620
    %v1101 = vpack.c.b16 %v637, %v621
    %v1102 = vpack.c.b16 %v638, %v622
    %v1103 = vpack.c.b16 %v639, %v623
    %v1104 = vpack.c.b16 %v640, %v624
    %v1105 = vpack.c.b16 %v657, %v641
    %v1106 = vpack.c.b16 %v658, %v642
    %v1107 = vpack.c.b16 %v659, %v643
    %v1108 = vpack.c.b16 %v660, %v644
    %v1109 = vpack.c.b16 %v661, %v645
    %v1110 = vpack.c.b16 %v662, %v646
    %v1111 = vpack.c.b16 %v663, %v647
    %v1112 = vpack.c.b16 %v664, %v648
    %v1113 = vpack.c.b16 %v665, %v649
    %v1114 = vpack.c.b16 %v666, %v650
    %v1115 = vpack.c.b16 %v667, %v651
    %v1116 = vpack.c.b16 %v668, %v652
    %v1117 = vpack.c.b16 %v669, %v653
    %v1118 = vpack.c.b16 %v670, %v654
    %v1119 = vpack.c.b16 %v671, %v655
    %v1120 = vpack.c.b16 %v672, %v656
    %v1121 = vpack.c.b16 %v689, %v673
    %v1122 = vpack.c.b16 %v690, %v674
    %v1123 = vpack.c.b16 %v691, %v675
    %v1124 = vpack.c.b16 %v692, %v676
    %v1125 = vpack.c.b16 %v693, %v677
    %v1126 = vpack.c.b16 %v694, %v678
    %v1127 = vpack.c.b16 %v695, %v679
    %v1128 = vpack.c.b16 %v696, %v680
    %v1129 = vpack.c.b16 %v697, %v681
    %v1130 = vpack.c.b16 %v698, %v682
    %v1131 = vpack.c.b16 %v699, %v683
    %v1132 = vpack.c.b16 %v700, %v684
    %v1133 = vpack.c.b16 %v701, %v685
    %v1134 = vpack.c.b16 %v702, %v686
    %v1135 = vpack.c.b16 %v703, %v687
    %v1136 = vpack.c.b16 %v704, %v688
    %v1137 = vpack.c.b16 %v721, %v705
    %v1138 = vpack.c.b16 %v722, %v706
    %v1139 = vpack.c.b16 %v723, %v707
    %v1140 = vpack.c.b16 %v724, %v708
    %v1141 = vpack.c.b16 %v725, %v709
    %v1142 = vpack.c.b16 %v726, %v710
    %v1143 = vpack.c.b16 %v727, %v711
    %v1144 = vpack.c.b16 %v728, %v712
    %v1145 = vpack.c.b16 %v729, %v713
    %v1146 = vpack.c.b16 %v730, %v714
    %v1147 = vpack.c.b16 %v731, %v715
    %v1148 = vpack.c.b16 %v732, %v716
    %v1149 = vpack.c.b16 %v733, %v717
    %v1150 = vpack.c.b16 %v734, %v718
    %v1151 = vpack.c.b16 %v735, %v719
    %v1152 = vpack.c.b16 %v736, %v720
    %v1153 = vpack.c.b16 %v753, %v737
    %v1154 = vpack.c.b16 %v754, %v738
    %v1155 = vpack.c.b16 %v755, %v739
    %v1156 = vpack.c.b16 %v756, %v740
    %v1157 = vpack.c.b16 %v757, %v741
    %v1158 = vpack.c.b16 %v758, %v742
    %v1159 = vpack.c.b16 %v759, %v743
    %v1160 = vpack.c.b16 %v760, %v744
    %v1161 = vpack.c.b16 %v761, %v745
    %v1162 = vpack.c.b16 %v762, %v746
    %v1163 = vpack.c.b16 %v763, %v747
    %v1164 = vpack.c.b16 %v764, %v748
    %v1165 = vpack.c.b16 %v765, %v749
    %v1166 = vpack.c.b16 %v766, %v750
    %v1167 = vpack.c.b16 %v767, %v751
    %v1168 = vpack.c.b16 %v768, %v752
    %v1169 = vpack.c.b16 %v785, %v769
    %v1170 = vpack.c.b16 %v786, %v770
    %v1171 = vpack.c.b16 %v787, %v771
    %v1172 = vpack.c.b16 %v788, %v772
    %v1173 = vpack.c.b16 %v789, %v773
    %v1174 = vpack.c.b16 %v790, %v774
    %v1175 = vpack.c.b16 %v791, %v775
    %v1176 = vpack.c.b16 %v792, %v776
    %v1177 = vpack.c.b16 %v793, %v777
    %v1178 = vpack.c.b16 %v794, %v778
    %v1179 = vpack.c.b16 %v795, %v779
    %v1180 = vpack.c.b16 %v796, %v780
    %v1181 = vpack.c.b16 %v797, %v781
    %v1182 = vpack.c.b16 %v798, %v782
    %v1183 = vpack.c.b16 %v799, %v783
    %v1184 = vpack.c.b16 %v800, %v784
    %v1185 = vpack.c.b16 %v817, %v801
    %v1186 = vpack.c.b16 %v818, %v802
    %v1187 = vpack.c.b16 %v819, %v803
    %v1188 = vpack.c.b16 %v820, %v804
    %v1189 = vpack.c.b16 %v821, %v805
    %v1190 = vpack.c.b16 %v822, %v806
    %v1191 = vpack.c.b16 %v823, %v807
    %v1192 = vpack.c.b16 %v824, %v808
    %v1193 = vpack.c.b16 %v825, %v809
    %v1194 = vpack.c.b16 %v826, %v810
    %v1195 = vpack.c.b16 %v827, %v811
    %v1196 = vpack.c.b16 %v828, %v812
    %v1197 = vpack.c.b16 %v829, %v813
    %v1198 = vpack.c.b16 %v830, %v814
    %v1199 = vpack.c.b16 %v831, %v815
    %v1200 = vpack.c.b16 %v832, %v816
    %v1201 = vpack.c.b16 %v849, %v833
    %v1202 = vpack.c.b16 %v850, %v834
    %v1203 = vpack.c.b16 %v851, %v835
    %v1204 = vpack.c.b16 %v852, %v836
    %v1205 = vpack.c.b16 %v853, %v837
    %v1206 = vpack.c.b16 %v854, %v838
    %v1207 = vpack.c.b16 %v855, %v839
    %v1208 = vpack.c.b16 %v856, %v840
    %v1209 = vpack.c.b16 %v857, %v841
    %v1210 = vpack.c.b16 %v858, %v842
    %v1211 = vpack.c.b16 %v859, %v843
    %v1212 = vpack.c.b16 %v860, %v844
    %v1213 = vpack.c.b16 %v861, %v845
    %v1214 = vpack.c.b16 %v862, %v846
    %v1215 = vpack.c.b16 %v863, %v847
    %v1216 = vpack.c.b16 %v864, %v848
    %v1217 = vpack.c.b16 %v881, %v865
    %v1218 = vpack.c.b16 %v882, %v866
    %v1219 = vpack.c.b16 %v883, %v867
    %v1220 = vpack.c.b16 %v884, %v868
    %v1221 = vpack.c.b16 %v885, %v869
    %v1222 = vpack.c.b16 %v886, %v870
    %v1223 = vpack.c.b16 %v887, %v871
    %v1224 = vpack.c.b16 %v888, %v872
    %v1225 = vpack.c.b16 %v889, %v873
    %v1226 = vpack.c.b16 %v890, %v874
    %v1227 = vpack.c.b16 %v891, %v875
    %v1228 = vpack.c.b16 %v892, %v876
    %v1229 = vpack.c.b16 %v893, %v877
    %v1230 = vpack.c.b16 %v894, %v878
    %v1231 = vpack.c.b16 %v895, %v879
    %v1232 = vpack.c.b16 %v896, %v880
    %v1233 = vpack.c.b16 %v913, %v897
    %v1234 = vpack.c.b16 %v914, %v898
    %v1235 = vpack.c.b16 %v915, %v899
    %v1236 = vpack.c.b16 %v916, %v900
    %v1237 = vpack.c.b16 %v917, %v901
    %v1238 = vpack.c.b16 %v918, %v902
    %v1239 = vpack.c.b16 %v919, %v903
    %v1240 = vpack.c.b16 %v920, %v904
    %v1241 = vpack.c.b16 %v921, %v905
    %v1242 = vpack.c.b16 %v922, %v906
    %v1243 = vpack.c.b16 %v923, %v907
    %v1244 = vpack.c.b16 %v924, %v908
    %v1245 = vpack.c.b16 %v925, %v909
    %v1246 = vpack.c.b16 %v926, %v910
    %v1247 = vpack.c.b16 %v927, %v911
    %v1248 = vpack.c.b16 %v928, %v912
    %v1249 = vpack.c.b16 %v945, %v929
    %v1250 = vpack.c.b16 %v946, %v930
    %v1251 = vpack.c.b16 %v947, %v931
    %v1252 = vpack.c.b16 %v948, %v932
    %v1253 = vpack.c.b16 %v949, %v933
    %v1254 = vpack.c.b16 %v950, %v934
    %v1255 = vpack.c.b16 %v951, %v935
    %v1256 = vpack.c.b16 %v952, %v936
    %v1257 = vpack.c.b16 %v953, %v937
    %v1258 = vpack.c.b16 %v954, %v938
    %v1259 = vpack.c.b16 %v955, %v939
    %v1260 = vpack.c.b16 %v956, %v940
    %v1261 = vpack.c.b16 %v957, %v941
    %v1262 = vpack.c.b16 %v958, %v942
    %v1263 = vpack.c.b16 %v959, %v943
    %v1264 = vpack.c.b16 %v960, %v944
    %v1265 = vpack.c.b16 %v977, %v961
    %v1266 = vpack.c.b16 %v978, %v962
    %v1267 = vpack.c.b16 %v979, %v963
    %v1268 = vpack.c.b16 %v980, %v964
    %v1269 = vpack.c.b16 %v981, %v965
    %v1270 = vpack.c.b16 %v982, %v966
    %v1271 = vpack.c.b16 %v983, %v967
    %v1272 = vpack.c.b16 %v984, %v968
    %v1273 = vpack.c.b16 %v985, %v969
    %v1274 = vpack.c.b16 %v986, %v970
    %v1275 = vpack.c.b16 %v987, %v971
    %v1276 = vpack.c.b16 %v988, %v972
    %v1277 = vpack.c.b16 %v989, %v973
    %v1278 = vpack.c.b16 %v990, %v974
    %v1279 = vpack.c.b16 %v991, %v975
    %v1280 = vpack.c.b16 %v992, %v976
    %v1281 = vpack.c.b16 %v1009, %v993
    %v1282 = vpack.c.b16 %v1010, %v994
    %v1283 = vpack.c.b16 %v1011, %v995
    %v1284 = vpack.c.b16 %v1012, %v996
    %v1285 = vpack.c.b16 %v1013, %v997
    %v1286 = vpack.c.b16 %v1014, %v998
    %v1287 = vpack.c.b16 %v1015, %v999
    %v1288 = vpack.c.b16 %v1016, %v1000
    %v1289 = vpack.c.b16 %v1017, %v1001
    %v1290 = vpack.c.b16 %v1018, %v1002
    %v1291 = vpack.c.b16 %v1019, %v1003
    %v1292 = vpack.c.b16 %v1020, %v1004
    %v1293 = vpack.c.b16 %v1021, %v1005
    %v1294 = vpack.c.b16 %v1022, %v1006
    %v1295 = vpack.c.b16 %v1023, %v1007
    %v1296 = vpack.c.b16 %v1024, %v1008
    %v1297 = vpack.c.b16 %v1041, %v1025
    %v1298 = vpack.c.b16 %v1042, %v1026
    %v1299 = vpack.c.b16 %v1043, %v1027
    %v1300 = vpack.c.b16 %v1044, %v1028
    %v1301 = vpack.c.b16 %v1045, %v1029
    %v1302 = vpack.c.b16 %v1046, %v1030
    %v1303 = vpack.c.b16 %v1047, %v1031
    %v1304 = vpack.c.b16 %v1048, %v1032
    %v1305 = vpack.c.b16 %v1049, %v1033
    %v1306 = vpack.c.b16 %v1050, %v1034
    %v1307 = vpack.c.b16 %v1051, %v1035
    %v1308 = vpack.c.b16 %v1052, %v1036
    %v1309 = vpack.c.b16 %v1053, %v1037
    %v1310 = vpack.c.b16 %v1054, %v1038
    %v1311 = vpack.c.b16 %v1055, %v1039
    %v1312 = vpack.c.b16 %v1056, %v1040
    %1569 = vmatprep.subr.bf16.mxu0 %v1170
    %1570 = vmatpush1.bf16.msra.mxu0 %v1169
    %1571 = vmatprep.subr.bf16.mxu0 %v1154
    %1572 = vmatpush1.bf16.msra.mxu0 %v1153
    %1573 = vmatprep.subr.bf16.mxu0 %v1138
    %1574 = vmatpush1.bf16.msra.mxu0 %v1137
    %1575 = vmatprep.subr.bf16.mxu0 %v1122
    %1576 = vmatpush1.bf16.msra.mxu0 %v1121
    %1577 = vmatprep.subr.bf16.mxu0 %v1106
    %1578 = vmatpush1.bf16.msra.mxu0 %v1105
    %1579 = vmatprep.subr.bf16.mxu0 %v1090
    %1580 = vmatpush1.bf16.msra.mxu0 %v1089
    %1581 = vmatprep.subr.bf16.mxu0 %v1074
    %1582 = vmatpush1.bf16.msra.mxu0 %v1073
    %1583 = vmatprep.subr.bf16.mxu0 %v1058
    %1584 = vmatpush1.bf16.msra.mxu0 %v1057
    %1585 = vmatprep.subr.bf16.mxu0 %v1298
    %1586 = vmatpush2.bf16.msra.mxu0 %v1297
    %1587 = vmatprep.subr.bf16.mxu0 %v1282
    %1588 = vmatpush2.bf16.msra.mxu0 %v1281
    %1589 = vmatprep.subr.bf16.mxu0 %v1266
    %1590 = vmatpush2.bf16.msra.mxu0 %v1265
    %1591 = vmatprep.subr.bf16.mxu0 %v1250
    %1592 = vmatpush2.bf16.msra.mxu0 %v1249
    %1593 = vmatprep.subr.bf16.mxu0 %v1234
    %1594 = vmatpush2.bf16.msra.mxu0 %v1233
    %1595 = vmatprep.subr.bf16.mxu0 %v1218
    %1596 = vmatpush2.bf16.msra.mxu0 %v1217
    %1597 = vmatprep.subr.bf16.mxu0 %v1202
    %1598 = vmatpush2.bf16.msra.mxu0 %v1201
    %1599 = vmatprep.subr.bf16.mxu0 %v1186
    %1600 = vmatpush2.bf16.msra.mxu0 %v1185
    %1601 = vmatprep.mubr.bf16.mxu0 %v286
    %1602 = vmatmul.mubr.bf16.gmra.mxu0 %v285
    %v1603 = vpop.f32.mrf.mxu0
    %v1604 = vadd.f32 0.0, %v1603
    %v1605 = vpop.f32.mrf.mxu0
    %v1606 = vadd.f32 0.0, %v1605
    %v1607 = vpop.f32.mrf.mxu0
    %v1608 = vpop.f32.mrf.mxu0
    %1609 = vdwg.mxu0
    %1610 = vmatprep.subr.bf16.mxu0 %v1172
    %1611 = vmatpush1.bf16.msra.mxu0 %v1171
    %1612 = vmatprep.subr.bf16.mxu0 %v1156
    %1613 = vmatpush1.bf16.msra.mxu0 %v1155
    %1614 = vmatprep.subr.bf16.mxu0 %v1140
    %1615 = vmatpush1.bf16.msra.mxu0 %v1139
    %1616 = vmatprep.subr.bf16.mxu0 %v1124
    %1617 = vmatpush1.bf16.msra.mxu0 %v1123
    %1618 = vmatprep.subr.bf16.mxu0 %v1108
    %1619 = vmatpush1.bf16.msra.mxu0 %v1107
    %1620 = vmatprep.subr.bf16.mxu0 %v1092
    %1621 = vmatpush1.bf16.msra.mxu0 %v1091
    %1622 = vmatprep.subr.bf16.mxu0 %v1076
    %1623 = vmatpush1.bf16.msra.mxu0 %v1075
    %1624 = vmatprep.subr.bf16.mxu0 %v1060
    %1625 = vmatpush1.bf16.msra.mxu0 %v1059
    %1626 = vmatprep.subr.bf16.mxu0 %v1300
    %1627 = vmatpush2.bf16.msra.mxu0 %v1299
    %1628 = vmatprep.subr.bf16.mxu0 %v1284
    %1629 = vmatpush2.bf16.msra.mxu0 %v1283
    %1630 = vmatprep.subr.bf16.mxu0 %v1268
    %1631 = vmatpush2.bf16.msra.mxu0 %v1267
    %1632 = vmatprep.subr.bf16.mxu0 %v1252
    %1633 = vmatpush2.bf16.msra.mxu0 %v1251
    %1634 = vmatprep.subr.bf16.mxu0 %v1236
    %1635 = vmatpush2.bf16.msra.mxu0 %v1235
    %1636 = vmatprep.subr.bf16.mxu0 %v1220
    %1637 = vmatpush2.bf16.msra.mxu0 %v1219
    %1638 = vmatprep.subr.bf16.mxu0 %v1204
    %1639 = vmatpush2.bf16.msra.mxu0 %v1203
    %1640 = vmatprep.subr.bf16.mxu0 %v1188
    %1641 = vmatpush2.bf16.msra.mxu0 %v1187
    %1642 = vmatprep.mubr.bf16.mxu0 %v286
    %1643 = vmatmul.mubr.bf16.gmra.mxu0 %v285
    %v1644 = vpop.f32.mrf.mxu0
    %v1645 = vadd.f32 0.0, %v1644
    %v1646 = vpop.f32.mrf.mxu0
    %v1647 = vadd.f32 0.0, %v1646
    %v1648 = vpop.f32.mrf.mxu0
    %v1649 = vpop.f32.mrf.mxu0
    %1650 = vdwg.mxu0
    %1651 = vmatprep.subr.bf16.mxu0 %v1174
    %1652 = vmatpush1.bf16.msra.mxu0 %v1173
    %1653 = vmatprep.subr.bf16.mxu0 %v1158
    %1654 = vmatpush1.bf16.msra.mxu0 %v1157
    %1655 = vmatprep.subr.bf16.mxu0 %v1142
    %1656 = vmatpush1.bf16.msra.mxu0 %v1141
    %1657 = vmatprep.subr.bf16.mxu0 %v1126
    %1658 = vmatpush1.bf16.msra.mxu0 %v1125
    %1659 = vmatprep.subr.bf16.mxu0 %v1110
    %1660 = vmatpush1.bf16.msra.mxu0 %v1109
    %1661 = vmatprep.subr.bf16.mxu0 %v1094
    %1662 = vmatpush1.bf16.msra.mxu0 %v1093
    %1663 = vmatprep.subr.bf16.mxu0 %v1078
    %1664 = vmatpush1.bf16.msra.mxu0 %v1077
    %1665 = vmatprep.subr.bf16.mxu0 %v1062
    %1666 = vmatpush1.bf16.msra.mxu0 %v1061
    %1667 = vmatprep.subr.bf16.mxu0 %v1302
    %1668 = vmatpush2.bf16.msra.mxu0 %v1301
    %1669 = vmatprep.subr.bf16.mxu0 %v1286
    %1670 = vmatpush2.bf16.msra.mxu0 %v1285
    %1671 = vmatprep.subr.bf16.mxu0 %v1270
    %1672 = vmatpush2.bf16.msra.mxu0 %v1269
    %1673 = vmatprep.subr.bf16.mxu0 %v1254
    %1674 = vmatpush2.bf16.msra.mxu0 %v1253
    %1675 = vmatprep.subr.bf16.mxu0 %v1238
    %1676 = vmatpush2.bf16.msra.mxu0 %v1237
    %1677 = vmatprep.subr.bf16.mxu0 %v1222
    %1678 = vmatpush2.bf16.msra.mxu0 %v1221
    %1679 = vmatprep.subr.bf16.mxu0 %v1206
    %1680 = vmatpush2.bf16.msra.mxu0 %v1205
    %1681 = vmatprep.subr.bf16.mxu0 %v1190
    %1682 = vmatpush2.bf16.msra.mxu0 %v1189
    %1683 = vmatprep.mubr.bf16.mxu0 %v286
    %1684 = vmatmul.mubr.bf16.gmra.mxu0 %v285
    %v1685 = vpop.f32.mrf.mxu0
    %v1686 = vadd.f32 0.0, %v1685
    %v1687 = vpop.f32.mrf.mxu0
    %v1688 = vadd.f32 0.0, %v1687
    %v1689 = vpop.f32.mrf.mxu0
    %v1690 = vpop.f32.mrf.mxu0
    %1691 = vdwg.mxu0
    %1692 = vmatprep.subr.bf16.mxu0 %v1176
    %1693 = vmatpush1.bf16.msra.mxu0 %v1175
    %1694 = vmatprep.subr.bf16.mxu0 %v1160
    %1695 = vmatpush1.bf16.msra.mxu0 %v1159
    %1696 = vmatprep.subr.bf16.mxu0 %v1144
    %1697 = vmatpush1.bf16.msra.mxu0 %v1143
    %1698 = vmatprep.subr.bf16.mxu0 %v1128
    %1699 = vmatpush1.bf16.msra.mxu0 %v1127
    %1700 = vmatprep.subr.bf16.mxu0 %v1112
    %1701 = vmatpush1.bf16.msra.mxu0 %v1111
    %1702 = vmatprep.subr.bf16.mxu0 %v1096
    %1703 = vmatpush1.bf16.msra.mxu0 %v1095
    %1704 = vmatprep.subr.bf16.mxu0 %v1080
    %1705 = vmatpush1.bf16.msra.mxu0 %v1079
    %1706 = vmatprep.subr.bf16.mxu0 %v1064
    %1707 = vmatpush1.bf16.msra.mxu0 %v1063
    %1708 = vmatprep.subr.bf16.mxu0 %v1304
    %1709 = vmatpush2.bf16.msra.mxu0 %v1303
    %1710 = vmatprep.subr.bf16.mxu0 %v1288
    %1711 = vmatpush2.bf16.msra.mxu0 %v1287
    %1712 = vmatprep.subr.bf16.mxu0 %v1272
    %1713 = vmatpush2.bf16.msra.mxu0 %v1271
    %1714 = vmatprep.subr.bf16.mxu0 %v1256
    %1715 = vmatpush2.bf16.msra.mxu0 %v1255
    %1716 = vmatprep.subr.bf16.mxu0 %v1240
    %1717 = vmatpush2.bf16.msra.mxu0 %v1239
    %1718 = vmatprep.subr.bf16.mxu0 %v1224
    %1719 = vmatpush2.bf16.msra.mxu0 %v1223
    %1720 = vmatprep.subr.bf16.mxu0 %v1208
    %1721 = vmatpush2.bf16.msra.mxu0 %v1207
    %1722 = vmatprep.subr.bf16.mxu0 %v1192
    %1723 = vmatpush2.bf16.msra.mxu0 %v1191
    %1724 = vmatprep.mubr.bf16.mxu0 %v286
    %1725 = vmatmul.mubr.bf16.gmra.mxu0 %v285
    %v1726 = vpop.f32.mrf.mxu0
    %v1727 = vadd.f32 0.0, %v1726
    %v1728 = vpop.f32.mrf.mxu0
    %v1729 = vadd.f32 0.0, %v1728
    %v1730 = vpop.f32.mrf.mxu0
    %v1731 = vpop.f32.mrf.mxu0
    %1732 = vdwg.mxu0
    %1733 = vmatprep.subr.bf16.mxu0 %v1178
    %1734 = vmatpush1.bf16.msra.mxu0 %v1177
    %1735 = vmatprep.subr.bf16.mxu0 %v1162
    %1736 = vmatpush1.bf16.msra.mxu0 %v1161
    %1737 = vmatprep.subr.bf16.mxu0 %v1146
    %1738 = vmatpush1.bf16.msra.mxu0 %v1145
    %1739 = vmatprep.subr.bf16.mxu0 %v1130
    %1740 = vmatpush1.bf16.msra.mxu0 %v1129
    %1741 = vmatprep.subr.bf16.mxu0 %v1114
    %1742 = vmatpush1.bf16.msra.mxu0 %v1113
    %1743 = vmatprep.subr.bf16.mxu0 %v1098
    %1744 = vmatpush1.bf16.msra.mxu0 %v1097
    %1745 = vmatprep.subr.bf16.mxu0 %v1082
    %1746 = vmatpush1.bf16.msra.mxu0 %v1081
    %1747 = vmatprep.subr.bf16.mxu0 %v1066
    %1748 = vmatpush1.bf16.msra.mxu0 %v1065
    %1749 = vmatprep.subr.bf16.mxu0 %v1306
    %1750 = vmatpush2.bf16.msra.mxu0 %v1305
    %1751 = vmatprep.subr.bf16.mxu0 %v1290
    %1752 = vmatpush2.bf16.msra.mxu0 %v1289
    %1753 = vmatprep.subr.bf16.mxu0 %v1274
    %1754 = vmatpush2.bf16.msra.mxu0 %v1273
    %1755 = vmatprep.subr.bf16.mxu0 %v1258
    %1756 = vmatpush2.bf16.msra.mxu0 %v1257
    %1757 = vmatprep.subr.bf16.mxu0 %v1242
    %1758 = vmatpush2.bf16.msra.mxu0 %v1241
    %1759 = vmatprep.subr.bf16.mxu0 %v1226
    %1760 = vmatpush2.bf16.msra.mxu0 %v1225
    %1761 = vmatprep.subr.bf16.mxu0 %v1210
    %1762 = vmatpush2.bf16.msra.mxu0 %v1209
    %1763 = vmatprep.subr.bf16.mxu0 %v1194
    %1764 = vmatpush2.bf16.msra.mxu0 %v1193
    %1765 = vmatprep.mubr.bf16.mxu0 %v286
    %1766 = vmatmul.mubr.bf16.gmra.mxu0 %v285
    %v1767 = vpop.f32.mrf.mxu0
    %v1768 = vadd.f32 0.0, %v1767
    %v1769 = vpop.f32.mrf.mxu0
    %v1770 = vadd.f32 0.0, %v1769
    %v1771 = vpop.f32.mrf.mxu0
    %v1772 = vpop.f32.mrf.mxu0
    %1773 = vdwg.mxu0
    %1774 = vmatprep.subr.bf16.mxu0 %v1180
    %1775 = vmatpush1.bf16.msra.mxu0 %v1179
    %1776 = vmatprep.subr.bf16.mxu0 %v1164
    %1777 = vmatpush1.bf16.msra.mxu0 %v1163
    %1778 = vmatprep.subr.bf16.mxu0 %v1148
    %1779 = vmatpush1.bf16.msra.mxu0 %v1147
    %1780 = vmatprep.subr.bf16.mxu0 %v1132
    %1781 = vmatpush1.bf16.msra.mxu0 %v1131
    %1782 = vmatprep.subr.bf16.mxu0 %v1116
    %1783 = vmatpush1.bf16.msra.mxu0 %v1115
    %1784 = vmatprep.subr.bf16.mxu0 %v1100
    %1785 = vmatpush1.bf16.msra.mxu0 %v1099
    %1786 = vmatprep.subr.bf16.mxu0 %v1084
    %1787 = vmatpush1.bf16.msra.mxu0 %v1083
    %1788 = vmatprep.subr.bf16.mxu0 %v1068
    %1789 = vmatpush1.bf16.msra.mxu0 %v1067
    %1790 = vmatprep.subr.bf16.mxu0 %v1308
    %1791 = vmatpush2.bf16.msra.mxu0 %v1307
    %1792 = vmatprep.subr.bf16.mxu0 %v1292
    %1793 = vmatpush2.bf16.msra.mxu0 %v1291
    %1794 = vmatprep.subr.bf16.mxu0 %v1276
    %1795 = vmatpush2.bf16.msra.mxu0 %v1275
    %1796 = vmatprep.subr.bf16.mxu0 %v1260
    %1797 = vmatpush2.bf16.msra.mxu0 %v1259
    %1798 = vmatprep.subr.bf16.mxu0 %v1244
    %1799 = vmatpush2.bf16.msra.mxu0 %v1243
    %1800 = vmatprep.subr.bf16.mxu0 %v1228
    %1801 = vmatpush2.bf16.msra.mxu0 %v1227
    %1802 = vmatprep.subr.bf16.mxu0 %v1212
    %1803 = vmatpush2.bf16.msra.mxu0 %v1211
    %1804 = vmatprep.subr.bf16.mxu0 %v1196
    %1805 = vmatpush2.bf16.msra.mxu0 %v1195
    %1806 = vmatprep.mubr.bf16.mxu0 %v286
    %1807 = vmatmul.mubr.bf16.gmra.mxu0 %v285
    %v1808 = vpop.f32.mrf.mxu0
    %v1809 = vadd.f32 0.0, %v1808
    %v1810 = vpop.f32.mrf.mxu0
    %v1811 = vadd.f32 0.0, %v1810
    %v1812 = vpop.f32.mrf.mxu0
    %v1813 = vpop.f32.mrf.mxu0
    %1814 = vdwg.mxu0
    %1815 = vmatprep.subr.bf16.mxu0 %v1182
    %1816 = vmatpush1.bf16.msra.mxu0 %v1181
    %1817 = vmatprep.subr.bf16.mxu0 %v1166
    %1818 = vmatpush1.bf16.msra.mxu0 %v1165
    %1819 = vmatprep.subr.bf16.mxu0 %v1150
    %1820 = vmatpush1.bf16.msra.mxu0 %v1149
    %1821 = vmatprep.subr.bf16.mxu0 %v1134
    %1822 = vmatpush1.bf16.msra.mxu0 %v1133
    %1823 = vmatprep.subr.bf16.mxu0 %v1118
    %1824 = vmatpush1.bf16.msra.mxu0 %v1117
    %1825 = vmatprep.subr.bf16.mxu0 %v1102
    %1826 = vmatpush1.bf16.msra.mxu0 %v1101
    %1827 = vmatprep.subr.bf16.mxu0 %v1086
    %1828 = vmatpush1.bf16.msra.mxu0 %v1085
    %1829 = vmatprep.subr.bf16.mxu0 %v1070
    %1830 = vmatpush1.bf16.msra.mxu0 %v1069
    %1831 = vmatprep.subr.bf16.mxu0 %v1310
    %1832 = vmatpush2.bf16.msra.mxu0 %v1309
    %1833 = vmatprep.subr.bf16.mxu0 %v1294
    %1834 = vmatpush2.bf16.msra.mxu0 %v1293
    %1835 = vmatprep.subr.bf16.mxu0 %v1278
    %1836 = vmatpush2.bf16.msra.mxu0 %v1277
    %1837 = vmatprep.subr.bf16.mxu0 %v1262
    %1838 = vmatpush2.bf16.msra.mxu0 %v1261
    %1839 = vmatprep.subr.bf16.mxu0 %v1246
    %1840 = vmatpush2.bf16.msra.mxu0 %v1245
    %1841 = vmatprep.subr.bf16.mxu0 %v1230
    %1842 = vmatpush2.bf16.msra.mxu0 %v1229
    %1843 = vmatprep.subr.bf16.mxu0 %v1214
    %1844 = vmatpush2.bf16.msra.mxu0 %v1213
    %1845 = vmatprep.subr.bf16.mxu0 %v1198
    %1846 = vmatpush2.bf16.msra.mxu0 %v1197
    %1847 = vmatprep.mubr.bf16.mxu0 %v286
    %1848 = vmatmul.mubr.bf16.gmra.mxu0 %v285
    %v1849 = vpop.f32.mrf.mxu0
    %v1850 = vadd.f32 0.0, %v1849
    %v1851 = vpop.f32.mrf.mxu0
    %v1852 = vadd.f32 0.0, %v1851
    %v1853 = vpop.f32.mrf.mxu0
    %v1854 = vpop.f32.mrf.mxu0
    %1855 = vdwg.mxu0
    %1856 = vmatprep.subr.bf16.mxu0 %v1184
    %1857 = vmatpush1.bf16.msra.mxu0 %v1183
    %1858 = vmatprep.subr.bf16.mxu0 %v1168
    %1859 = vmatpush1.bf16.msra.mxu0 %v1167
    %1860 = vmatprep.subr.bf16.mxu0 %v1152
    %1861 = vmatpush1.bf16.msra.mxu0 %v1151
    %1862 = vmatprep.subr.bf16.mxu0 %v1136
    %1863 = vmatpush1.bf16.msra.mxu0 %v1135
    %1864 = vmatprep.subr.bf16.mxu0 %v1120
    %1865 = vmatpush1.bf16.msra.mxu0 %v1119
    %1866 = vmatprep.subr.bf16.mxu0 %v1104
    %1867 = vmatpush1.bf16.msra.mxu0 %v1103
    %1868 = vmatprep.subr.bf16.mxu0 %v1088
    %1869 = vmatpush1.bf16.msra.mxu0 %v1087
    %1870 = vmatprep.subr.bf16.mxu0 %v1072
    %1871 = vmatpush1.bf16.msra.mxu0 %v1071
    %1872 = vmatprep.subr.bf16.mxu0 %v1312
    %1873 = vmatpush2.bf16.msra.mxu0 %v1311
    %1874 = vmatprep.subr.bf16.mxu0 %v1296
    %1875 = vmatpush2.bf16.msra.mxu0 %v1295
    %1876 = vmatprep.subr.bf16.mxu0 %v1280
    %1877 = vmatpush2.bf16.msra.mxu0 %v1279
    %1878 = vmatprep.subr.bf16.mxu0 %v1264
    %1879 = vmatpush2.bf16.msra.mxu0 %v1263
    %1880 = vmatprep.subr.bf16.mxu0 %v1248
    %1881 = vmatpush2.bf16.msra.mxu0 %v1247
    %1882 = vmatprep.subr.bf16.mxu0 %v1232
    %1883 = vmatpush2.bf16.msra.mxu0 %v1231
    %1884 = vmatprep.subr.bf16.mxu0 %v1216
    %1885 = vmatpush2.bf16.msra.mxu0 %v1215
    %1886 = vmatprep.subr.bf16.mxu0 %v1200
    %1887 = vmatpush2.bf16.msra.mxu0 %v1199
    %1888 = vmatprep.mubr.bf16.mxu0 %v286
    %1889 = vmatmul.mubr.bf16.gmra.mxu0 %v285
    %v1890 = vpop.f32.mrf.mxu0
    %v1891 = vadd.f32 0.0, %v1890
    %v1892 = vpop.f32.mrf.mxu0
    %v1893 = vadd.f32 0.0, %v1892
    %v1894 = vpop.f32.mrf.mxu0
    %v1895 = vpop.f32.mrf.mxu0
    %1896 = vdwg.mxu0
    %1897 = vst [vmem:[%s2] sm:$0xff] %v1604
    %1898 = vst [vmem:[%s2 + $0x8] sm:$0xff] %v1606
    %1899 = vst [vmem:[%s2 + $0x10] sm:$0xff] %v1645
    %1900 = vst [vmem:[%s2 + $0x18] sm:$0xff] %v1647
    %1901 = vst [vmem:[%s2 + $0x20] sm:$0xff] %v1686
    %1902 = vst [vmem:[%s2 + $0x28] sm:$0xff] %v1688
    %1903 = vst [vmem:[%s2 + $0x30] sm:$0xff] %v1727
    %1904 = vst [vmem:[%s2 + $0x38] sm:$0xff] %v1729
    %1905 = vst [vmem:[%s2 + $0x40] sm:$0xff] %v1768
    %1906 = vst [vmem:[%s2 + $0x48] sm:$0xff] %v1770
    %1907 = vst [vmem:[%s2 + $0x50] sm:$0xff] %v1809
    %1908 = vst [vmem:[%s2 + $0x58] sm:$0xff] %v1811
    %1909 = vst [vmem:[%s2 + $0x60] sm:$0xff] %v1850
    %1910 = vst [vmem:[%s2 + $0x68] sm:$0xff] %v1852
    %1911 = vst [vmem:[%s2 + $0x70] sm:$0xff] %v1891
    %1912 = vst [vmem:[%s2 + $0x78] sm:$0xff] %v1893
    // Predicated region
    $region14: #{generator_forward.13} parent=1 // pred_check
      _
    $region15: #{generator_forward.13} parent=1 // pred_check_branch
      %1914 = sbr.rel (0) target = $region17
    $region16: #{generator_forward.13} parent=1 // pred_region
      _
    $region17: #{generator_forward.13} parent=1 // pred_fallthru
      _
    // Predicated region
    $region18: #{generator_forward.13} parent=1 // pred_check
      _
    $region19: #{generator_forward.13} parent=1 // pred_check_branch
      %1916 = sbr.rel (0) target = $region21
    $region20: #{generator_forward.13} parent=1 // pred_region
      _
    $region21: #{generator_forward.13} parent=1 // pred_fallthru
      _
    %1917 = vsyncpa [#allocation3], 1

// kernel: tile.58
$region0: #{tile.58}
  #allocation0 [shape = 's32[1]{0}', space=sflag, size = 0x4, scoped, tag = 'scoped memory for tile.58']
  %s0 = inlined_call_operand.vmem [shape: f32[64], index: 0, kind: input, shape index: {}]
  %s1 = inlined_call_operand.vmem [shape: f32[8,64], index: 1, kind: output, shape index: {}]
  // Predicated region
  $region2: #{tile.58} parent=0 // pred_check
    _
  $region3: #{tile.58} parent=0 // pred_check_branch
    %3 = sbr.rel (0) target = $region5
  $region4: #{tile.58} parent=0 // pred_region
    _
  $region5: #{tile.58} parent=0 // pred_fallthru
    _
  %v4 = vld [vmem:[%s0] ss:$0 sm:$0xff]
  %5 = vst [vmem:[%s1] sm:$0xff] %v4

// kernel: generator_forward.15
$region0: #{generator_forward.15}
  #allocation0 [shape = 'u32[]', space=smem, size = 0x4, offset = 0x4, fixed_abs, tag = 'smem constant byte address 0x4 - core index']
  #allocation1 [shape = 'u32[144,128]{1,0:T(1,128)}', space=vmem, size = 0x12000, scoped, tag = 'internal scratch']
  %s0 = inlined_call_operand.vmem [shape: bf16[56,512], index: 0, kind: input, shape index: {}]
  %s1 = inlined_call_operand.vmem [shape: bf16[512,256], index: 1, kind: input, shape index: {}]
  %s2 = inlined_call_operand.vmem [shape: f32[56,256], index: 2, kind: output, shape index: {}]
  %s3 = sld [smem:[#allocation0]]
  $region18: #{generator_forward.15} parent=0
    _
  %s5 = ssub.s32 1, %s3
  %s6 = scalar_select 0, %s5, %s3
  // Predicated region
  $region2: #{generator_forward.15} parent=0 // pred_check
    _
  $region3: #{generator_forward.15} parent=0 // pred_check_branch
    %8 = sbr.rel (0) target = $region5
  $region4: #{generator_forward.15} parent=0 // pred_region
    _
  $region5: #{generator_forward.15} parent=0 // pred_fallthru
    _
  // Predicated region
  $region6: #{generator_forward.15} parent=0 // pred_check
    _
  $region7: #{generator_forward.15} parent=0 // pred_check_branch
    %10 = sbr.rel (0) target = $region9
  $region8: #{generator_forward.15} parent=0 // pred_region
    _
  $region9: #{generator_forward.15} parent=0 // pred_fallthru
    _
  %v11 = vld [vmem:[%s0] sm:$0xff]
  %v12 = vld [vmem:[%s0 + $0x8] sm:$0xff]
  %v13 = vld [vmem:[%s0 + $0x10] sm:$0xff]
  %v14 = vld [vmem:[%s0 + $0x18] sm:$0xff]
  %v15 = vld [vmem:[%s0 + $0x20] sm:$0xff]
  %v16 = vld [vmem:[%s0 + $0x28] sm:$0xff]
  %v17 = vld [vmem:[%s0 + $0x30] sm:$0xff]
  %v18 = vld [vmem:[%s0 + $0x38] sm:$0xff]
  %v19 = vld [vmem:[%s0 + $0x40] sm:$0xff]
  %v20 = vld [vmem:[%s0 + $0x48] sm:$0xff]
  %v21 = vld [vmem:[%s0 + $0x50] sm:$0xff]
  %v22 = vld [vmem:[%s0 + $0x58] sm:$0xff]
  %v23 = vld [vmem:[%s0 + $0x60] sm:$0xff]
  %v24 = vld [vmem:[%s0 + $0x68] sm:$0xff]
  %v25 = vld [vmem:[%s1] sm:$0xff]
  %v26 = vld [vmem:[%s1 + $0x8] sm:$0xff]
  %v27 = vld [vmem:[%s1 + $0x10] sm:$0xff]
  %v28 = vld [vmem:[%s1 + $0x18] sm:$0xff]
  %v29 = vld [vmem:[%s1 + $0x20] sm:$0xff]
  %v30 = vld [vmem:[%s1 + $0x28] sm:$0xff]
  %v31 = vld [vmem:[%s1 + $0x30] sm:$0xff]
  %v32 = vld [vmem:[%s1 + $0x38] sm:$0xff]
  %v33 = vld [vmem:[%s1 + $0x40] sm:$0xff]
  %v34 = vld [vmem:[%s1 + $0x48] sm:$0xff]
  %v35 = vld [vmem:[%s1 + $0x50] sm:$0xff]
  %v36 = vld [vmem:[%s1 + $0x58] sm:$0xff]
  %v37 = vld [vmem:[%s1 + $0x60] sm:$0xff]
  %v38 = vld [vmem:[%s1 + $0x68] sm:$0xff]
  %v39 = vld [vmem:[%s1 + $0x70] sm:$0xff]
  %v40 = vld [vmem:[%s1 + $0x78] sm:$0xff]
  %v41 = vld [vmem:[%s1 + $0x80] sm:$0xff]
  %v42 = vld [vmem:[%s1 + $0x88] sm:$0xff]
  %v43 = vld [vmem:[%s1 + $0x90] sm:$0xff]
  %v44 = vld [vmem:[%s1 + $0x98] sm:$0xff]
  %v45 = vld [vmem:[%s1 + $0xa0] sm:$0xff]
  %v46 = vld [vmem:[%s1 + $0xa8] sm:$0xff]
  %v47 = vld [vmem:[%s1 + $0xb0] sm:$0xff]
  %v48 = vld [vmem:[%s1 + $0xb8] sm:$0xff]
  %v49 = vld [vmem:[%s1 + $0xc0] sm:$0xff]
  %v50 = vld [vmem:[%s1 + $0xc8] sm:$0xff]
  %v51 = vld [vmem:[%s1 + $0xd0] sm:$0xff]
  %v52 = vld [vmem:[%s1 + $0xd8] sm:$0xff]
  %v53 = vld [vmem:[%s1 + $0xe0] sm:$0xff]
  %v54 = vld [vmem:[%s1 + $0xe8] sm:$0xff]
  %v55 = vld [vmem:[%s1 + $0xf0] sm:$0xff]
  %v56 = vld [vmem:[%s1 + $0xf8] sm:$0xff]
  %v57 = vld [vmem:[%s1 + $0x100] sm:$0xff]
  %v58 = vld [vmem:[%s1 + $0x108] sm:$0xff]
  %v59 = vld [vmem:[%s1 + $0x110] sm:$0xff]
  %v60 = vld [vmem:[%s1 + $0x118] sm:$0xff]
  %v61 = vld [vmem:[%s1 + $0x120] sm:$0xff]
  %v62 = vld [vmem:[%s1 + $0x128] sm:$0xff]
  %v63 = vld [vmem:[%s1 + $0x130] sm:$0xff]
  %v64 = vld [vmem:[%s1 + $0x138] sm:$0xff]
  %v65 = vld [vmem:[%s1 + $0x140] sm:$0xff]
  %v66 = vld [vmem:[%s1 + $0x148] sm:$0xff]
  %v67 = vld [vmem:[%s1 + $0x150] sm:$0xff]
  %v68 = vld [vmem:[%s1 + $0x158] sm:$0xff]
  %v69 = vld [vmem:[%s1 + $0x160] sm:$0xff]
  %v70 = vld [vmem:[%s1 + $0x168] sm:$0xff]
  %v71 = vld [vmem:[%s1 + $0x170] sm:$0xff]
  %v72 = vld [vmem:[%s1 + $0x178] sm:$0xff]
  %v73 = vld [vmem:[%s1 + $0x180] sm:$0xff]
  %v74 = vld [vmem:[%s1 + $0x188] sm:$0xff]
  %v75 = vld [vmem:[%s1 + $0x190] sm:$0xff]
  %v76 = vld [vmem:[%s1 + $0x198] sm:$0xff]
  %v77 = vld [vmem:[%s1 + $0x1a0] sm:$0xff]
  %v78 = vld [vmem:[%s1 + $0x1a8] sm:$0xff]
  %v79 = vld [vmem:[%s1 + $0x1b0] sm:$0xff]
  %v80 = vld [vmem:[%s1 + $0x1b8] sm:$0xff]
  %v81 = vld [vmem:[%s1 + $0x1c0] sm:$0xff]
  %v82 = vld [vmem:[%s1 + $0x1c8] sm:$0xff]
  %v83 = vld [vmem:[%s1 + $0x1d0] sm:$0xff]
  %v84 = vld [vmem:[%s1 + $0x1d8] sm:$0xff]
  %v85 = vld [vmem:[%s1 + $0x1e0] sm:$0xff]
  %v86 = vld [vmem:[%s1 + $0x1e8] sm:$0xff]
  %v87 = vld [vmem:[%s1 + $0x1f0] sm:$0xff]
  %v88 = vld [vmem:[%s1 + $0x1f8] sm:$0xff]
  %v103 = vunpack.c.l.b16 %v11
  %v104 = vunpack.c.h.b16 %v11
  %v105 = vunpack.c.l.b16 %v12
  %v106 = vunpack.c.h.b16 %v12
  %v107 = vunpack.c.l.b16 %v13
  %v108 = vunpack.c.h.b16 %v13
  %v109 = vunpack.c.l.b16 %v14
  %v110 = vunpack.c.h.b16 %v14
  %v111 = vunpack.c.l.b16 %v15
  %v112 = vunpack.c.h.b16 %v15
  %v113 = vunpack.c.l.b16 %v16
  %v114 = vunpack.c.h.b16 %v16
  %v115 = vunpack.c.l.b16 %v17
  %v116 = vunpack.c.h.b16 %v17
  %v117 = vunpack.c.l.b16 %v18
  %v118 = vunpack.c.h.b16 %v18
  %v119 = vunpack.c.l.b16 %v19
  %v120 = vunpack.c.h.b16 %v19
  %v121 = vunpack.c.l.b16 %v20
  %v122 = vunpack.c.h.b16 %v20
  %v123 = vunpack.c.l.b16 %v21
  %v124 = vunpack.c.h.b16 %v21
  %v125 = vunpack.c.l.b16 %v22
  %v126 = vunpack.c.h.b16 %v22
  %v127 = vunpack.c.l.b16 %v23
  %v128 = vunpack.c.h.b16 %v23
  %v129 = vunpack.c.l.b16 %v24
  %v130 = vunpack.c.h.b16 %v24
  %v131 = vpack.c.b16 %v107, %v103
  %v132 = vpack.c.b16 %v108, %v104
  %v133 = vpack.c.b16 %v109, %v105
  %v134 = vpack.c.b16 %v110, %v106
  %v135 = vpack.c.b16 %v115, %v111
  %v136 = vpack.c.b16 %v116, %v112
  %v137 = vpack.c.b16 %v117, %v113
  %v138 = vpack.c.b16 %v118, %v114
  %v139 = vpack.c.b16 %v123, %v119
  %v140 = vpack.c.b16 %v124, %v120
  %v141 = vpack.c.b16 %v125, %v121
  %v142 = vpack.c.b16 %v126, %v122
  %v143 = vpack.c.b16 %v127, %v127
  %v144 = vpack.c.b16 %v128, %v128
  %v145 = vpack.c.b16 %v129, %v129
  %v146 = vpack.c.b16 %v130, %v130
  %v227 = vunpack.c.l.b16 %v25
  %v228 = vunpack.c.h.b16 %v25
  %v229 = vunpack.c.l.b16 %v26
  %v230 = vunpack.c.h.b16 %v26
  %v231 = vunpack.c.l.b16 %v27
  %v232 = vunpack.c.h.b16 %v27
  %v233 = vunpack.c.l.b16 %v28
  %v234 = vunpack.c.h.b16 %v28
  %v235 = vunpack.c.l.b16 %v29
  %v236 = vunpack.c.h.b16 %v29
  %v237 = vunpack.c.l.b16 %v30
  %v238 = vunpack.c.h.b16 %v30
  %v239 = vunpack.c.l.b16 %v31
  %v240 = vunpack.c.h.b16 %v31
  %v241 = vunpack.c.l.b16 %v32
  %v242 = vunpack.c.h.b16 %v32
  %v243 = vunpack.c.l.b16 %v33
  %v244 = vunpack.c.h.b16 %v33
  %v245 = vunpack.c.l.b16 %v34
  %v246 = vunpack.c.h.b16 %v34
  %v247 = vunpack.c.l.b16 %v35
  %v248 = vunpack.c.h.b16 %v35
  %v249 = vunpack.c.l.b16 %v36
  %v250 = vunpack.c.h.b16 %v36
  %v251 = vunpack.c.l.b16 %v37
  %v252 = vunpack.c.h.b16 %v37
  %v253 = vunpack.c.l.b16 %v38
  %v254 = vunpack.c.h.b16 %v38
  %v255 = vunpack.c.l.b16 %v39
  %v256 = vunpack.c.h.b16 %v39
  %v257 = vunpack.c.l.b16 %v40
  %v258 = vunpack.c.h.b16 %v40
  %v259 = vunpack.c.l.b16 %v41
  %v260 = vunpack.c.h.b16 %v41
  %v261 = vunpack.c.l.b16 %v42
  %v262 = vunpack.c.h.b16 %v42
  %v263 = vunpack.c.l.b16 %v43
  %v264 = vunpack.c.h.b16 %v43
  %v265 = vunpack.c.l.b16 %v44
  %v266 = vunpack.c.h.b16 %v44
  %v267 = vunpack.c.l.b16 %v45
  %v268 = vunpack.c.h.b16 %v45
  %v269 = vunpack.c.l.b16 %v46
  %v270 = vunpack.c.h.b16 %v46
  %v271 = vunpack.c.l.b16 %v47
  %v272 = vunpack.c.h.b16 %v47
  %v273 = vunpack.c.l.b16 %v48
  %v274 = vunpack.c.h.b16 %v48
  %v275 = vunpack.c.l.b16 %v49
  %v276 = vunpack.c.h.b16 %v49
  %v277 = vunpack.c.l.b16 %v50
  %v278 = vunpack.c.h.b16 %v50
  %v279 = vunpack.c.l.b16 %v51
  %v280 = vunpack.c.h.b16 %v51
  %v281 = vunpack.c.l.b16 %v52
  %v282 = vunpack.c.h.b16 %v52
  %v283 = vunpack.c.l.b16 %v53
  %v284 = vunpack.c.h.b16 %v53
  %v285 = vunpack.c.l.b16 %v54
  %v286 = vunpack.c.h.b16 %v54
  %v287 = vunpack.c.l.b16 %v55
  %v288 = vunpack.c.h.b16 %v55
  %v289 = vunpack.c.l.b16 %v56
  %v290 = vunpack.c.h.b16 %v56
  %v291 = vunpack.c.l.b16 %v57
  %v292 = vunpack.c.h.b16 %v57
  %v293 = vunpack.c.l.b16 %v58
  %v294 = vunpack.c.h.b16 %v58
  %v295 = vunpack.c.l.b16 %v59
  %v296 = vunpack.c.h.b16 %v59
  %v297 = vunpack.c.l.b16 %v60
  %v298 = vunpack.c.h.b16 %v60
  %v299 = vunpack.c.l.b16 %v61
  %v300 = vunpack.c.h.b16 %v61
  %v301 = vunpack.c.l.b16 %v62
  %v302 = vunpack.c.h.b16 %v62
  %v303 = vunpack.c.l.b16 %v63
  %v304 = vunpack.c.h.b16 %v63
  %v305 = vunpack.c.l.b16 %v64
  %v306 = vunpack.c.h.b16 %v64
  %v307 = vunpack.c.l.b16 %v65
  %v308 = vunpack.c.h.b16 %v65
  %v309 = vunpack.c.l.b16 %v66
  %v310 = vunpack.c.h.b16 %v66
  %v311 = vunpack.c.l.b16 %v67
  %v312 = vunpack.c.h.b16 %v67
  %v313 = vunpack.c.l.b16 %v68
  %v314 = vunpack.c.h.b16 %v68
  %v315 = vunpack.c.l.b16 %v69
  %v316 = vunpack.c.h.b16 %v69
  %v317 = vunpack.c.l.b16 %v70
  %v318 = vunpack.c.h.b16 %v70
  %v319 = vunpack.c.l.b16 %v71
  %v320 = vunpack.c.h.b16 %v71
  %v321 = vunpack.c.l.b16 %v72
  %v322 = vunpack.c.h.b16 %v72
  %v323 = vunpack.c.l.b16 %v73
  %v324 = vunpack.c.h.b16 %v73
  %v325 = vunpack.c.l.b16 %v74
  %v326 = vunpack.c.h.b16 %v74
  %v327 = vunpack.c.l.b16 %v75
  %v328 = vunpack.c.h.b16 %v75
  %v329 = vunpack.c.l.b16 %v76
  %v330 = vunpack.c.h.b16 %v76
  %v331 = vunpack.c.l.b16 %v77
  %v332 = vunpack.c.h.b16 %v77
  %v333 = vunpack.c.l.b16 %v78
  %v334 = vunpack.c.h.b16 %v78
  %v335 = vunpack.c.l.b16 %v79
  %v336 = vunpack.c.h.b16 %v79
  %v337 = vunpack.c.l.b16 %v80
  %v338 = vunpack.c.h.b16 %v80
  %v339 = vunpack.c.l.b16 %v81
  %v340 = vunpack.c.h.b16 %v81
  %v341 = vunpack.c.l.b16 %v82
  %v342 = vunpack.c.h.b16 %v82
  %v343 = vunpack.c.l.b16 %v83
  %v344 = vunpack.c.h.b16 %v83
  %v345 = vunpack.c.l.b16 %v84
  %v346 = vunpack.c.h.b16 %v84
  %v347 = vunpack.c.l.b16 %v85
  %v348 = vunpack.c.h.b16 %v85
  %v349 = vunpack.c.l.b16 %v86
  %v350 = vunpack.c.h.b16 %v86
  %v351 = vunpack.c.l.b16 %v87
  %v352 = vunpack.c.h.b16 %v87
  %v353 = vunpack.c.l.b16 %v88
  %v354 = vunpack.c.h.b16 %v88
  %v355 = vpack.c.b16 %v229, %v227
  %v356 = vpack.c.b16 %v230, %v228
  %v357 = vpack.c.b16 %v233, %v231
  %v358 = vpack.c.b16 %v234, %v232
  %v359 = vpack.c.b16 %v237, %v235
  %v360 = vpack.c.b16 %v238, %v236
  %v361 = vpack.c.b16 %v241, %v239
  %v362 = vpack.c.b16 %v242, %v240
  %v363 = vpack.c.b16 %v245, %v243
  %v364 = vpack.c.b16 %v246, %v244
  %v365 = vpack.c.b16 %v249, %v247
  %v366 = vpack.c.b16 %v250, %v248
  %v367 = vpack.c.b16 %v253, %v251
  %v368 = vpack.c.b16 %v254, %v252
  %v369 = vpack.c.b16 %v257, %v255
  %v370 = vpack.c.b16 %v258, %v256
  %v371 = vpack.c.b16 %v261, %v259
  %v372 = vpack.c.b16 %v262, %v260
  %v373 = vpack.c.b16 %v265, %v263
  %v374 = vpack.c.b16 %v266, %v264
  %v375 = vpack.c.b16 %v269, %v267
  %v376 = vpack.c.b16 %v270, %v268
  %v377 = vpack.c.b16 %v273, %v271
  %v378 = vpack.c.b16 %v274, %v272
  %v379 = vpack.c.b16 %v277, %v275
  %v380 = vpack.c.b16 %v278, %v276
  %v381 = vpack.c.b16 %v281, %v279
  %v382 = vpack.c.b16 %v282, %v280
  %v383 = vpack.c.b16 %v285, %v283
  %v384 = vpack.c.b16 %v286, %v284
  %v385 = vpack.c.b16 %v289, %v287
  %v386 = vpack.c.b16 %v290, %v288
  %v387 = vpack.c.b16 %v293, %v291
  %v388 = vpack.c.b16 %v294, %v292
  %v389 = vpack.c.b16 %v297, %v295
  %v390 = vpack.c.b16 %v298, %v296
  %v391 = vpack.c.b16 %v301, %v299
  %v392 = vpack.c.b16 %v302, %v300
  %v393 = vpack.c.b16 %v305, %v303
  %v394 = vpack.c.b16 %v306, %v304
  %v395 = vpack.c.b16 %v309, %v307
  %v396 = vpack.c.b16 %v310, %v308
  %v397 = vpack.c.b16 %v313, %v311
  %v398 = vpack.c.b16 %v314, %v312
  %v399 = vpack.c.b16 %v317, %v315
  %v400 = vpack.c.b16 %v318, %v316
  %v401 = vpack.c.b16 %v321, %v319
  %v402 = vpack.c.b16 %v322, %v320
  %v403 = vpack.c.b16 %v325, %v323
  %v404 = vpack.c.b16 %v326, %v324
  %v405 = vpack.c.b16 %v329, %v327
  %v406 = vpack.c.b16 %v330, %v328
  %v407 = vpack.c.b16 %v333, %v331
  %v408 = vpack.c.b16 %v334, %v332
  %v409 = vpack.c.b16 %v337, %v335
  %v410 = vpack.c.b16 %v338, %v336
  %v411 = vpack.c.b16 %v341, %v339
  %v412 = vpack.c.b16 %v342, %v340
  %v413 = vpack.c.b16 %v345, %v343
  %v414 = vpack.c.b16 %v346, %v344
  %v415 = vpack.c.b16 %v349, %v347
  %v416 = vpack.c.b16 %v350, %v348
  %v417 = vpack.c.b16 %v353, %v351
  %v418 = vpack.c.b16 %v354, %v352
  %483 = vmatprep.subr.bf16.mxu0 %v370
  %484 = vmatpush1.bf16.msra.mxu0 %v369
  %485 = vmatprep.subr.bf16.mxu0 %v368
  %486 = vmatpush1.bf16.msra.mxu0 %v367
  %487 = vmatprep.subr.bf16.mxu0 %v366
  %488 = vmatpush1.bf16.msra.mxu0 %v365
  %489 = vmatprep.subr.bf16.mxu0 %v364
  %490 = vmatpush1.bf16.msra.mxu0 %v363
  %491 = vmatprep.subr.bf16.mxu0 %v362
  %492 = vmatpush1.bf16.msra.mxu0 %v361
  %493 = vmatprep.subr.bf16.mxu0 %v360
  %494 = vmatpush1.bf16.msra.mxu0 %v359
  %495 = vmatprep.subr.bf16.mxu0 %v358
  %496 = vmatpush1.bf16.msra.mxu0 %v357
  %497 = vmatprep.subr.bf16.mxu0 %v356
  %498 = vmatpush1.bf16.msra.mxu0 %v355
  %499 = vmatprep.subr.bf16.mxu0 %v386
  %500 = vmatpush2.bf16.msra.mxu0 %v385
  %501 = vmatprep.subr.bf16.mxu0 %v384
  %502 = vmatpush2.bf16.msra.mxu0 %v383
  %503 = vmatprep.subr.bf16.mxu0 %v382
  %504 = vmatpush2.bf16.msra.mxu0 %v381
  %505 = vmatprep.subr.bf16.mxu0 %v380
  %506 = vmatpush2.bf16.msra.mxu0 %v379
  %507 = vmatprep.subr.bf16.mxu0 %v378
  %508 = vmatpush2.bf16.msra.mxu0 %v377
  %509 = vmatprep.subr.bf16.mxu0 %v376
  %510 = vmatpush2.bf16.msra.mxu0 %v375
  %511 = vmatprep.subr.bf16.mxu0 %v374
  %512 = vmatpush2.bf16.msra.mxu0 %v373
  %513 = vmatprep.subr.bf16.mxu0 %v372
  %514 = vmatpush2.bf16.msra.mxu0 %v371
  %515 = vmatprep.mubr.bf16.mxu0 %v132
  %516 = vmatmul.mubr.bf16.gmra.mxu0 %v131
  %v517 = vpop.f32.mrf.mxu0
  %v518 = vadd.f32 0.0, %v517
  %v519 = vpop.f32.mrf.mxu0
  %v520 = vadd.f32 0.0, %v519
  %v521 = vpop.f32.mrf.mxu0
  %v522 = vadd.f32 0.0, %v521
  %v523 = vpop.f32.mrf.mxu0
  %v524 = vadd.f32 0.0, %v523
  %525 = vmatprep.mubr.bf16.mxu0 %v136
  %526 = vmatmul.mubr.bf16.gmra.mxu0 %v135
  %v527 = vpop.f32.mrf.mxu0
  %v528 = vadd.f32 0.0, %v527
  %v529 = vpop.f32.mrf.mxu0
  %v530 = vadd.f32 0.0, %v529
  %v531 = vpop.f32.mrf.mxu0
  %v532 = vadd.f32 0.0, %v531
  %v533 = vpop.f32.mrf.mxu0
  %v534 = vadd.f32 0.0, %v533
  %535 = vmatprep.mubr.bf16.mxu0 %v140
  %536 = vmatmul.mubr.bf16.gmra.mxu0 %v139
  %v537 = vpop.f32.mrf.mxu0
  %v538 = vadd.f32 0.0, %v537
  %v539 = vpop.f32.mrf.mxu0
  %v540 = vadd.f32 0.0, %v539
  %v541 = vpop.f32.mrf.mxu0
  %v542 = vadd.f32 0.0, %v541
  %v543 = vpop.f32.mrf.mxu0
  %v544 = vadd.f32 0.0, %v543
  %545 = vmatprep.mubr.bf16.mxu0 %v144
  %546 = vmatmul.mubr.bf16.gmra.mxu0 %v143
  %v547 = vpop.f32.mrf.mxu0
  %v548 = vadd.f32 0.0, %v547
  %v549 = vpop.f32.mrf.mxu0
  %v550 = vadd.f32 0.0, %v549
  %v551 = vpop.f32.mrf.mxu0
  %v552 = vpop.f32.mrf.mxu0
  %553 = vdwg.mxu0
  %554 = vmatprep.subr.bf16.mxu0 %v402
  %555 = vmatpush1.bf16.msra.mxu0 %v401
  %556 = vmatprep.subr.bf16.mxu0 %v400
  %557 = vmatpush1.bf16.msra.mxu0 %v399
  %558 = vmatprep.subr.bf16.mxu0 %v398
  %559 = vmatpush1.bf16.msra.mxu0 %v397
  %560 = vmatprep.subr.bf16.mxu0 %v396
  %561 = vmatpush1.bf16.msra.mxu0 %v395
  %562 = vmatprep.subr.bf16.mxu0 %v394
  %563 = vmatpush1.bf16.msra.mxu0 %v393
  %564 = vmatprep.subr.bf16.mxu0 %v392
  %565 = vmatpush1.bf16.msra.mxu0 %v391
  %566 = vmatprep.subr.bf16.mxu0 %v390
  %567 = vmatpush1.bf16.msra.mxu0 %v389
  %568 = vmatprep.subr.bf16.mxu0 %v388
  %569 = vmatpush1.bf16.msra.mxu0 %v387
  %570 = vmatprep.subr.bf16.mxu0 %v418
  %571 = vmatpush2.bf16.msra.mxu0 %v417
  %572 = vmatprep.subr.bf16.mxu0 %v416
  %573 = vmatpush2.bf16.msra.mxu0 %v415
  %574 = vmatprep.subr.bf16.mxu0 %v414
  %575 = vmatpush2.bf16.msra.mxu0 %v413
  %576 = vmatprep.subr.bf16.mxu0 %v412
  %577 = vmatpush2.bf16.msra.mxu0 %v411
  %578 = vmatprep.subr.bf16.mxu0 %v410
  %579 = vmatpush2.bf16.msra.mxu0 %v409
  %580 = vmatprep.subr.bf16.mxu0 %v408
  %581 = vmatpush2.bf16.msra.mxu0 %v407
  %582 = vmatprep.subr.bf16.mxu0 %v406
  %583 = vmatpush2.bf16.msra.mxu0 %v405
  %584 = vmatprep.subr.bf16.mxu0 %v404
  %585 = vmatpush2.bf16.msra.mxu0 %v403
  %586 = vmatprep.mubr.bf16.mxu0 %v134
  %587 = vmatmul.mubr.bf16.gmra.mxu0 %v133
  %v588 = vpop.f32.mrf.mxu0
  %v589 = vadd.f32 %v518, %v588
  %v590 = vpop.f32.mrf.mxu0
  %v591 = vadd.f32 %v520, %v590
  %v592 = vpop.f32.mrf.mxu0
  %v593 = vadd.f32 %v522, %v592
  %v594 = vpop.f32.mrf.mxu0
  %v595 = vadd.f32 %v524, %v594
  %596 = vmatprep.mubr.bf16.mxu0 %v138
  %597 = vmatmul.mubr.bf16.gmra.mxu0 %v137
  %v598 = vpop.f32.mrf.mxu0
  %v599 = vadd.f32 %v528, %v598
  %v600 = vpop.f32.mrf.mxu0
  %v601 = vadd.f32 %v530, %v600
  %v602 = vpop.f32.mrf.mxu0
  %v603 = vadd.f32 %v532, %v602
  %v604 = vpop.f32.mrf.mxu0
  %v605 = vadd.f32 %v534, %v604
  %606 = vmatprep.mubr.bf16.mxu0 %v142
  %607 = vmatmul.mubr.bf16.gmra.mxu0 %v141
  %v608 = vpop.f32.mrf.mxu0
  %v609 = vadd.f32 %v538, %v608
  %v610 = vpop.f32.mrf.mxu0
  %v611 = vadd.f32 %v540, %v610
  %v612 = vpop.f32.mrf.mxu0
  %v613 = vadd.f32 %v542, %v612
  %v614 = vpop.f32.mrf.mxu0
  %v615 = vadd.f32 %v544, %v614
  %616 = vmatprep.mubr.bf16.mxu0 %v146
  %617 = vmatmul.mubr.bf16.gmra.mxu0 %v145
  %v618 = vpop.f32.mrf.mxu0
  %v619 = vadd.f32 %v548, %v618
  %v620 = vpop.f32.mrf.mxu0
  %v621 = vadd.f32 %v550, %v620
  %v622 = vpop.f32.mrf.mxu0
  %v623 = vpop.f32.mrf.mxu0
  %624 = vdwg.mxu0
  %625 = vst [vmem:[%s2] sm:$0xff] %v589
  %626 = vst [vmem:[%s2 + $0x8] sm:$0xff] %v591
  %627 = vst [vmem:[%s2 + $0x10] sm:$0xff] %v593
  %628 = vst [vmem:[%s2 + $0x18] sm:$0xff] %v595
  %629 = vst [vmem:[%s2 + $0x20] sm:$0xff] %v599
  %630 = vst [vmem:[%s2 + $0x28] sm:$0xff] %v601
  %631 = vst [vmem:[%s2 + $0x30] sm:$0xff] %v603
  %632 = vst [vmem:[%s2 + $0x38] sm:$0xff] %v605
  %633 = vst [vmem:[%s2 + $0x40] sm:$0xff] %v609
  %634 = vst [vmem:[%s2 + $0x48] sm:$0xff] %v611
  %635 = vst [vmem:[%s2 + $0x50] sm:$0xff] %v613
  %636 = vst [vmem:[%s2 + $0x58] sm:$0xff] %v615
  %637 = vst [vmem:[%s2 + $0x60] sm:$0xff] %v619
  %638 = vst [vmem:[%s2 + $0x68] sm:$0xff] %v621
  // Predicated region
  $region10: #{generator_forward.15} parent=0 // pred_check
    _
  $region11: #{generator_forward.15} parent=0 // pred_check_branch
    %640 = sbr.rel (0) target = $region13
  $region12: #{generator_forward.15} parent=0 // pred_region
    _
  $region13: #{generator_forward.15} parent=0 // pred_fallthru
    _
  // Predicated region
  $region14: #{generator_forward.15} parent=0 // pred_check
    _
  $region15: #{generator_forward.15} parent=0 // pred_check_branch
    %642 = sbr.rel (0) target = $region17
  $region16: #{generator_forward.15} parent=0 // pred_region
    _
  $region17: #{generator_forward.15} parent=0 // pred_fallthru
    _

// kernel: generator_forward.16
$region0: #{generator_forward.16}
  #allocation0 [shape = 'u32[]', space=smem, size = 0x4, offset = 0x4, fixed_abs, tag = 'smem constant byte address 0x4 - core index']
  #allocation1 [shape = 'u32[144,128]{1,0:T(1,128)}', space=vmem, size = 0x12000, scoped, tag = 'internal scratch']
  %s0 = inlined_call_operand.vmem [shape: f32[16,512], index: 0, kind: input, shape index: {}]
  %s1 = inlined_call_operand.vmem [shape: f32[1,512], index: 1, kind: input, shape index: {}]
  %s2 = inlined_call_operand.vmem [shape: f32[1,512], index: 2, kind: input, shape index: {}]
  %s3 = inlined_call_operand.vmem [shape: bf16[16,512], index: 3, kind: output, shape index: {}]
  %s4 = sld [smem:[#allocation0]]
  $region22: #{generator_forward.16} parent=0
    _
  %s6 = ssub.s32 1, %s4
  %s7 = scalar_select 0, %s6, %s4
  // Predicated region
  $region2: #{generator_forward.16} parent=0 // pred_check
    _
  $region3: #{generator_forward.16} parent=0 // pred_check_branch
    %9 = sbr.rel (0) target = $region5
  $region4: #{generator_forward.16} parent=0 // pred_region
    _
  $region5: #{generator_forward.16} parent=0 // pred_fallthru
    _
  // Predicated region
  $region6: #{generator_forward.16} parent=0 // pred_check
    _
  $region7: #{generator_forward.16} parent=0 // pred_check_branch
    %11 = sbr.rel (0) target = $region9
  $region8: #{generator_forward.16} parent=0 // pred_region
    _
  $region9: #{generator_forward.16} parent=0 // pred_fallthru
    _
  // Predicated region
  $region10: #{generator_forward.16} parent=0 // pred_check
    _
  $region11: #{generator_forward.16} parent=0 // pred_check_branch
    %13 = sbr.rel (0) target = $region13
  $region12: #{generator_forward.16} parent=0 // pred_region
    _
  $region13: #{generator_forward.16} parent=0 // pred_fallthru
    _
  %v14 = vld [vmem:[%s0] sm:$0xff]
  %v15 = vld [vmem:[%s0 + $0x8] sm:$0xff]
  %v16 = vld [vmem:[%s0 + $0x10] sm:$0xff]
  %v17 = vld [vmem:[%s0 + $0x18] sm:$0xff]
  %v18 = vld [vmem:[%s0 + $0x20] sm:$0xff]
  %v19 = vld [vmem:[%s0 + $0x28] sm:$0xff]
  %v20 = vld [vmem:[%s0 + $0x30] sm:$0xff]
  %v21 = vld [vmem:[%s0 + $0x38] sm:$0xff]
  %v22 = vld [vmem:[%s1] sm:$0xf]
  %v24 = vlaneseq
  %v25 = vshrl.u32 %v24, 7
  %v26 = vsub.s32 0, %v25
  %v27 = vrot.slane %v22, %v26
  %v28 = vlaneseq
  %v29 = vshrl.u32 %v28, 7
  %v30 = vsub.s32 1, %v29
  %v31 = vrot.slane %v22, %v30
  %v32 = vlaneseq
  %v33 = vshrl.u32 %v32, 7
  %v34 = vsub.s32 2, %v33
  %v35 = vrot.slane %v22, %v34
  %v36 = vlaneseq
  %v37 = vshrl.u32 %v36, 7
  %v38 = vsub.s32 3, %v37
  %v39 = vrot.slane %v22, %v38
  %v44 = vmul.f32 %v14, %v27
  %v45 = vmul.f32 %v15, %v31
  %v46 = vmul.f32 %v16, %v35
  %v47 = vmul.f32 %v17, %v39
  %v48 = vmul.f32 %v18, %v27
  %v49 = vmul.f32 %v19, %v31
  %v50 = vmul.f32 %v20, %v35
  %v51 = vmul.f32 %v21, %v39
  %v52 = vld [vmem:[%s2] sm:$0xf]
  %v54 = vlaneseq
  %v55 = vshrl.u32 %v54, 7
  %v56 = vsub.s32 0, %v55
  %v57 = vrot.slane %v52, %v56
  %v58 = vlaneseq
  %v59 = vshrl.u32 %v58, 7
  %v60 = vsub.s32 1, %v59
  %v61 = vrot.slane %v52, %v60
  %v62 = vlaneseq
  %v63 = vshrl.u32 %v62, 7
  %v64 = vsub.s32 2, %v63
  %v65 = vrot.slane %v52, %v64
  %v66 = vlaneseq
  %v67 = vshrl.u32 %v66, 7
  %v68 = vsub.s32 3, %v67
  %v69 = vrot.slane %v52, %v68
  %v74 = vadd.f32 %v44, %v57
  %v75 = vadd.f32 %v45, %v61
  %v76 = vadd.f32 %v46, %v65
  %v77 = vadd.f32 %v47, %v69
  %v78 = vadd.f32 %v48, %v57
  %v79 = vadd.f32 %v49, %v61
  %v80 = vadd.f32 %v50, %v65
  %v81 = vadd.f32 %v51, %v69
  %v82 = vmax.f32 %v74, 0.0
  %v83 = vmax.f32 %v75, 0.0
  %v84 = vmax.f32 %v76, 0.0
  %v85 = vmax.f32 %v77, 0.0
  %v86 = vmax.f32 %v78, 0.0
  %v87 = vmax.f32 %v79, 0.0
  %v88 = vmax.f32 %v80, 0.0
  %v89 = vmax.f32 %v81, 0.0
  %v90 = vpack.c.bf16 %v86, %v82
  %v91 = vpack.c.bf16 %v87, %v83
  %v92 = vpack.c.bf16 %v88, %v84
  %v93 = vpack.c.bf16 %v89, %v85
  %v98 = vunpack.c.l.b16 %v90
  %v99 = vunpack.c.l.b16 %v91
  %v100 = vunpack.c.l.b16 %v92
  %v101 = vunpack.c.l.b16 %v93
  %v102 = vunpack.c.h.b16 %v90
  %v103 = vunpack.c.h.b16 %v91
  %v104 = vunpack.c.h.b16 %v92
  %v105 = vunpack.c.h.b16 %v93
  %v106 = vpack.c.b16 %v99, %v98
  %v107 = vpack.c.b16 %v101, %v100
  %v108 = vpack.c.b16 %v103, %v102
  %v109 = vpack.c.b16 %v105, %v104
  %114 = vst [vmem:[%s3] sm:$0xff] %v106
  %115 = vst [vmem:[%s3 + $0x8] sm:$0xff] %v107
  %116 = vst [vmem:[%s3 + $0x10] sm:$0xff] %v108
  %117 = vst [vmem:[%s3 + $0x18] sm:$0xff] %v109
  // Predicated region
  $region14: #{generator_forward.16} parent=0 // pred_check
    _
  $region15: #{generator_forward.16} parent=0 // pred_check_branch
    %119 = sbr.rel (0) target = $region17
  $region16: #{generator_forward.16} parent=0 // pred_region
    _
  $region17: #{generator_forward.16} parent=0 // pred_fallthru
    _
  // Predicated region
  $region18: #{generator_forward.16} parent=0 // pred_check
    _
  $region19: #{generator_forward.16} parent=0 // pred_check_branch
    %121 = sbr.rel (0) target = $region21
  $region20: #{generator_forward.16} parent=0 // pred_region
    _
  $region21: #{generator_forward.16} parent=0 // pred_fallthru
    _

// kernel: generator_forward.17
$region0: #{generator_forward.17}
  #allocation0 [shape = 'u32[]', space=smem, size = 0x4, offset = 0x4, fixed_abs, tag = 'smem constant byte address 0x4 - core index']
  #allocation1 [shape = 'u32[144,128]{1,0:T(1,128)}', space=vmem, size = 0x12000, scoped, tag = 'internal scratch']
  %s0 = inlined_call_operand.vmem [shape: bf16[168,256], index: 0, kind: input, shape index: {}]
  %s1 = inlined_call_operand.vmem [shape: bf16[256,128], index: 1, kind: input, shape index: {}]
  %s2 = inlined_call_operand.vmem [shape: f32[168,128], index: 2, kind: output, shape index: {}]
  %s3 = sld [smem:[#allocation0]]
  $region18: #{generator_forward.17} parent=0
    _
  %s5 = ssub.s32 1, %s3
  %s6 = scalar_select 0, %s5, %s3
  // Predicated region
  $region2: #{generator_forward.17} parent=0 // pred_check
    _
  $region3: #{generator_forward.17} parent=0 // pred_check_branch
    %8 = sbr.rel (0) target = $region5
  $region4: #{generator_forward.17} parent=0 // pred_region
    _
  $region5: #{generator_forward.17} parent=0 // pred_fallthru
    _
  // Predicated region
  $region6: #{generator_forward.17} parent=0 // pred_check
    _
  $region7: #{generator_forward.17} parent=0 // pred_check_branch
    %10 = sbr.rel (0) target = $region9
  $region8: #{generator_forward.17} parent=0 // pred_region
    _
  $region9: #{generator_forward.17} parent=0 // pred_fallthru
    _
  %v12 = vld [vmem:[%s0] sm:$0xff]
  %v13 = vld [vmem:[%s0 + $0x8] sm:$0xff]
  %v14 = vld [vmem:[%s0 + $0x10] sm:$0xff]
  %v15 = vld [vmem:[%s0 + $0x18] sm:$0xff]
  %v16 = vld [vmem:[%s0 + $0x20] sm:$0xff]
  %v17 = vld [vmem:[%s0 + $0x28] sm:$0xff]
  %v18 = vld [vmem:[%s0 + $0x30] sm:$0xff]
  %v19 = vld [vmem:[%s0 + $0x38] sm:$0xff]
  %v20 = vld [vmem:[%s0 + $0x40] sm:$0xff]
  %v21 = vld [vmem:[%s0 + $0x48] sm:$0xff]
  %v22 = vld [vmem:[%s0 + $0x50] sm:$0xff]
  %v23 = vld [vmem:[%s0 + $0x58] sm:$0xff]
  %v24 = vld [vmem:[%s0 + $0x60] sm:$0xff]
  %v25 = vld [vmem:[%s0 + $0x68] sm:$0xff]
  %v26 = vld [vmem:[%s0 + $0x70] sm:$0xff]
  %v27 = vld [vmem:[%s0 + $0x78] sm:$0xff]
  %v28 = vld [vmem:[%s0 + $0x80] sm:$0xff]
  %v29 = vld [vmem:[%s0 + $0x88] sm:$0xff]
  %v30 = vld [vmem:[%s0 + $0x90] sm:$0xff]
  %v31 = vld [vmem:[%s0 + $0x98] sm:$0xff]
  %v32 = vld [vmem:[%s0 + $0xa0] sm:$0xff]
  %v33 = vld [vmem:[%s1] sm:$0xf]
  %v34 = vld [vmem:[%s1 + $0x4] sm:$0xf]
  %v35 = vld [vmem:[%s1 + $0x8] sm:$0xf]
  %v36 = vld [vmem:[%s1 + $0xc] sm:$0xf]
  %v37 = vld [vmem:[%s1 + $0x10] sm:$0xf]
  %v38 = vld [vmem:[%s1 + $0x14] sm:$0xf]
  %v39 = vld [vmem:[%s1 + $0x18] sm:$0xf]
  %v40 = vld [vmem:[%s1 + $0x1c] sm:$0xf]
  %v41 = vld [vmem:[%s1 + $0x20] sm:$0xf]
  %v42 = vld [vmem:[%s1 + $0x24] sm:$0xf]
  %v43 = vld [vmem:[%s1 + $0x28] sm:$0xf]
  %v44 = vld [vmem:[%s1 + $0x2c] sm:$0xf]
  %v45 = vld [vmem:[%s1 + $0x30] sm:$0xf]
  %v46 = vld [vmem:[%s1 + $0x34] sm:$0xf]
  %v47 = vld [vmem:[%s1 + $0x38] sm:$0xf]
  %v48 = vld [vmem:[%s1 + $0x3c] sm:$0xf]
  %v49 = vld [vmem:[%s1 + $0x40] sm:$0xf]
  %v50 = vld [vmem:[%s1 + $0x44] sm:$0xf]
  %v51 = vld [vmem:[%s1 + $0x48] sm:$0xf]
  %v52 = vld [vmem:[%s1 + $0x4c] sm:$0xf]
  %v53 = vld [vmem:[%s1 + $0x50] sm:$0xf]
  %v54 = vld [vmem:[%s1 + $0x54] sm:$0xf]
  %v55 = vld [vmem:[%s1 + $0x58] sm:$0xf]
  %v56 = vld [vmem:[%s1 + $0x5c] sm:$0xf]
  %v57 = vld [vmem:[%s1 + $0x60] sm:$0xf]
  %v58 = vld [vmem:[%s1 + $0x64] sm:$0xf]
  %v59 = vld [vmem:[%s1 + $0x68] sm:$0xf]
  %v60 = vld [vmem:[%s1 + $0x6c] sm:$0xf]
  %v61 = vld [vmem:[%s1 + $0x70] sm:$0xf]
  %v62 = vld [vmem:[%s1 + $0x74] sm:$0xf]
  %v63 = vld [vmem:[%s1 + $0x78] sm:$0xf]
  %v64 = vld [vmem:[%s1 + $0x7c] sm:$0xf]
  %v86 = vunpack.c.l.b16 %v12
  %v87 = vunpack.c.h.b16 %v12
  %v88 = vunpack.c.l.b16 %v13
  %v89 = vunpack.c.h.b16 %v13
  %v90 = vunpack.c.l.b16 %v14
  %v91 = vunpack.c.h.b16 %v14
  %v92 = vunpack.c.l.b16 %v15
  %v93 = vunpack.c.h.b16 %v15
  %v94 = vunpack.c.l.b16 %v16
  %v95 = vunpack.c.h.b16 %v16
  %v96 = vunpack.c.l.b16 %v17
  %v97 = vunpack.c.h.b16 %v17
  %v98 = vunpack.c.l.b16 %v18
  %v99 = vunpack.c.h.b16 %v18
  %v100 = vunpack.c.l.b16 %v19
  %v101 = vunpack.c.h.b16 %v19
  %v102 = vunpack.c.l.b16 %v20
  %v103 = vunpack.c.h.b16 %v20
  %v104 = vunpack.c.l.b16 %v21
  %v105 = vunpack.c.h.b16 %v21
  %v106 = vunpack.c.l.b16 %v22
  %v107 = vunpack.c.h.b16 %v22
  %v108 = vunpack.c.l.b16 %v23
  %v109 = vunpack.c.h.b16 %v23
  %v110 = vunpack.c.l.b16 %v24
  %v111 = vunpack.c.h.b16 %v24
  %v112 = vunpack.c.l.b16 %v25
  %v113 = vunpack.c.h.b16 %v25
  %v114 = vunpack.c.l.b16 %v26
  %v115 = vunpack.c.h.b16 %v26
  %v116 = vunpack.c.l.b16 %v27
  %v117 = vunpack.c.h.b16 %v27
  %v118 = vunpack.c.l.b16 %v28
  %v119 = vunpack.c.h.b16 %v28
  %v120 = vunpack.c.l.b16 %v29
  %v121 = vunpack.c.h.b16 %v29
  %v122 = vunpack.c.l.b16 %v30
  %v123 = vunpack.c.h.b16 %v30
  %v124 = vunpack.c.l.b16 %v31
  %v125 = vunpack.c.h.b16 %v31
  %v126 = vunpack.c.l.b16 %v32
  %v127 = vunpack.c.h.b16 %v32
  %v128 = vpack.c.b16 %v88, %v86
  %v129 = vpack.c.b16 %v89, %v87
  %v130 = vpack.c.b16 %v92, %v90
  %v131 = vpack.c.b16 %v93, %v91
  %v132 = vpack.c.b16 %v96, %v94
  %v133 = vpack.c.b16 %v97, %v95
  %v134 = vpack.c.b16 %v100, %v98
  %v135 = vpack.c.b16 %v101, %v99
  %v136 = vpack.c.b16 %v104, %v102
  %v137 = vpack.c.b16 %v105, %v103
  %v138 = vpack.c.b16 %v108, %v106
  %v139 = vpack.c.b16 %v109, %v107
  %v140 = vpack.c.b16 %v112, %v110
  %v141 = vpack.c.b16 %v113, %v111
  %v142 = vpack.c.b16 %v116, %v114
  %v143 = vpack.c.b16 %v117, %v115
  %v144 = vpack.c.b16 %v120, %v118
  %v145 = vpack.c.b16 %v121, %v119
  %v146 = vpack.c.b16 %v124, %v122
  %v147 = vpack.c.b16 %v125, %v123
  %v148 = vpack.c.b16 %v126, %v126
  %v149 = vpack.c.b16 %v127, %v127
  %v204 = vunpack.c.l.b16 %v33
  %v205 = vunpack.c.l.b16 %v34
  %v206 = vunpack.c.l.b16 %v35
  %v207 = vunpack.c.l.b16 %v36
  %v208 = vunpack.c.l.b16 %v37
  %v209 = vunpack.c.l.b16 %v38
  %v210 = vunpack.c.l.b16 %v39
  %v211 = vunpack.c.l.b16 %v40
  %v212 = vunpack.c.l.b16 %v41
  %v213 = vunpack.c.l.b16 %v42
  %v214 = vunpack.c.l.b16 %v43
  %v215 = vunpack.c.l.b16 %v44
  %v216 = vunpack.c.l.b16 %v45
  %v217 = vunpack.c.l.b16 %v46
  %v218 = vunpack.c.l.b16 %v47
  %v219 = vunpack.c.l.b16 %v48
  %v220 = vunpack.c.l.b16 %v49
  %v221 = vunpack.c.l.b16 %v50
  %v222 = vunpack.c.l.b16 %v51
  %v223 = vunpack.c.l.b16 %v52
  %v224 = vunpack.c.l.b16 %v53
  %v225 = vunpack.c.l.b16 %v54
  %v226 = vunpack.c.l.b16 %v55
  %v227 = vunpack.c.l.b16 %v56
  %v228 = vunpack.c.l.b16 %v57
  %v229 = vunpack.c.l.b16 %v58
  %v230 = vunpack.c.l.b16 %v59
  %v231 = vunpack.c.l.b16 %v60
  %v232 = vunpack.c.l.b16 %v61
  %v233 = vunpack.c.l.b16 %v62
  %v234 = vunpack.c.l.b16 %v63
  %v235 = vunpack.c.l.b16 %v64
  %v236 = vpack.c.b16 %v205, %v204
  %v237 = vpack.c.b16 %v207, %v206
  %v238 = vpack.c.b16 %v209, %v208
  %v239 = vpack.c.b16 %v211, %v210
  %v240 = vpack.c.b16 %v213, %v212
  %v241 = vpack.c.b16 %v215, %v214
  %v242 = vpack.c.b16 %v217, %v216
  %v243 = vpack.c.b16 %v219, %v218
  %v244 = vpack.c.b16 %v221, %v220
  %v245 = vpack.c.b16 %v223, %v222
  %v246 = vpack.c.b16 %v225, %v224
  %v247 = vpack.c.b16 %v227, %v226
  %v248 = vpack.c.b16 %v229, %v228
  %v249 = vpack.c.b16 %v231, %v230
  %v250 = vpack.c.b16 %v233, %v232
  %v251 = vpack.c.b16 %v235, %v234
  %268 = vmatprep.subr.bf16.mxu0 0
  %269 = vmatpush1.bf16.msra.mxu0 %v243
  %270 = vmatprep.subr.bf16.mxu0 0
  %271 = vmatpush1.bf16.msra.mxu0 %v242
  %272 = vmatprep.subr.bf16.mxu0 0
  %273 = vmatpush1.bf16.msra.mxu0 %v241
  %274 = vmatprep.subr.bf16.mxu0 0
  %275 = vmatpush1.bf16.msra.mxu0 %v240
  %276 = vmatprep.subr.bf16.mxu0 0
  %277 = vmatpush1.bf16.msra.mxu0 %v239
  %278 = vmatprep.subr.bf16.mxu0 0
  %279 = vmatpush1.bf16.msra.mxu0 %v238
  %280 = vmatprep.subr.bf16.mxu0 0
  %281 = vmatpush1.bf16.msra.mxu0 %v237
  %282 = vmatprep.subr.bf16.mxu0 0
  %283 = vmatpush1.bf16.msra.mxu0 %v236
  %284 = vmatprep.subr.bf16.mxu0 0
  %285 = vmatpush2.bf16.msra.mxu0 %v251
  %286 = vmatprep.subr.bf16.mxu0 0
  %287 = vmatpush2.bf16.msra.mxu0 %v250
  %288 = vmatprep.subr.bf16.mxu0 0
  %289 = vmatpush2.bf16.msra.mxu0 %v249
  %290 = vmatprep.subr.bf16.mxu0 0
  %291 = vmatpush2.bf16.msra.mxu0 %v248
  %292 = vmatprep.subr.bf16.mxu0 0
  %293 = vmatpush2.bf16.msra.mxu0 %v247
  %294 = vmatprep.subr.bf16.mxu0 0
  %295 = vmatpush2.bf16.msra.mxu0 %v246
  %296 = vmatprep.subr.bf16.mxu0 0
  %297 = vmatpush2.bf16.msra.mxu0 %v245
  %298 = vmatprep.subr.bf16.mxu0 0
  %299 = vmatpush2.bf16.msra.mxu0 %v244
  %300 = vmatprep.mubr.bf16.mxu0 %v129
  %301 = vmatmul.mubr.bf16.gmra.mxu0 %v128
  %v302 = vpop.f32.mrf.mxu0
  %v303 = vadd.f32 0.0, %v302
  %v304 = vpop.f32.mrf.mxu0
  %v305 = vpop.f32.mrf.mxu0
  %v306 = vadd.f32 0.0, %v305
  %v307 = vpop.f32.mrf.mxu0
  %308 = vmatprep.mubr.bf16.mxu0 %v131
  %309 = vmatmul.mubr.bf16.gmra.mxu0 %v130
  %v310 = vpop.f32.mrf.mxu0
  %v311 = vadd.f32 0.0, %v310
  %v312 = vpop.f32.mrf.mxu0
  %v313 = vpop.f32.mrf.mxu0
  %v314 = vadd.f32 0.0, %v313
  %v315 = vpop.f32.mrf.mxu0
  %316 = vmatprep.mubr.bf16.mxu0 %v133
  %317 = vmatmul.mubr.bf16.gmra.mxu0 %v132
  %v318 = vpop.f32.mrf.mxu0
  %v319 = vadd.f32 0.0, %v318
  %v320 = vpop.f32.mrf.mxu0
  %v321 = vpop.f32.mrf.mxu0
  %v322 = vadd.f32 0.0, %v321
  %v323 = vpop.f32.mrf.mxu0
  %324 = vmatprep.mubr.bf16.mxu0 %v135
  %325 = vmatmul.mubr.bf16.gmra.mxu0 %v134
  %v326 = vpop.f32.mrf.mxu0
  %v327 = vadd.f32 0.0, %v326
  %v328 = vpop.f32.mrf.mxu0
  %v329 = vpop.f32.mrf.mxu0
  %v330 = vadd.f32 0.0, %v329
  %v331 = vpop.f32.mrf.mxu0
  %332 = vmatprep.mubr.bf16.mxu0 %v137
  %333 = vmatmul.mubr.bf16.gmra.mxu0 %v136
  %v334 = vpop.f32.mrf.mxu0
  %v335 = vadd.f32 0.0, %v334
  %v336 = vpop.f32.mrf.mxu0
  %v337 = vpop.f32.mrf.mxu0
  %v338 = vadd.f32 0.0, %v337
  %v339 = vpop.f32.mrf.mxu0
  %340 = vmatprep.mubr.bf16.mxu0 %v139
  %341 = vmatmul.mubr.bf16.gmra.mxu0 %v138
  %v342 = vpop.f32.mrf.mxu0
  %v343 = vadd.f32 0.0, %v342
  %v344 = vpop.f32.mrf.mxu0
  %v345 = vpop.f32.mrf.mxu0
  %v346 = vadd.f32 0.0, %v345
  %v347 = vpop.f32.mrf.mxu0
  %348 = vmatprep.mubr.bf16.mxu0 %v141
  %349 = vmatmul.mubr.bf16.gmra.mxu0 %v140
  %v350 = vpop.f32.mrf.mxu0
  %v351 = vadd.f32 0.0, %v350
  %v352 = vpop.f32.mrf.mxu0
  %v353 = vpop.f32.mrf.mxu0
  %v354 = vadd.f32 0.0, %v353
  %v355 = vpop.f32.mrf.mxu0
  %356 = vmatprep.mubr.bf16.mxu0 %v143
  %357 = vmatmul.mubr.bf16.gmra.mxu0 %v142
  %v358 = vpop.f32.mrf.mxu0
  %v359 = vadd.f32 0.0, %v358
  %v360 = vpop.f32.mrf.mxu0
  %v361 = vpop.f32.mrf.mxu0
  %v362 = vadd.f32 0.0, %v361
  %v363 = vpop.f32.mrf.mxu0
  %364 = vmatprep.mubr.bf16.mxu0 %v145
  %365 = vmatmul.mubr.bf16.gmra.mxu0 %v144
  %v366 = vpop.f32.mrf.mxu0
  %v367 = vadd.f32 0.0, %v366
  %v368 = vpop.f32.mrf.mxu0
  %v369 = vpop.f32.mrf.mxu0
  %v370 = vadd.f32 0.0, %v369
  %v371 = vpop.f32.mrf.mxu0
  %372 = vmatprep.mubr.bf16.mxu0 %v147
  %373 = vmatmul.mubr.bf16.gmra.mxu0 %v146
  %v374 = vpop.f32.mrf.mxu0
  %v375 = vadd.f32 0.0, %v374
  %v376 = vpop.f32.mrf.mxu0
  %v377 = vpop.f32.mrf.mxu0
  %v378 = vadd.f32 0.0, %v377
  %v379 = vpop.f32.mrf.mxu0
  %380 = vmatprep.mubr.bf16.mxu0 %v149
  %381 = vmatmul.mubr.bf16.gmra.mxu0 %v148
  %v382 = vpop.f32.mrf.mxu0
  %v383 = vadd.f32 0.0, %v382
  %v384 = vpop.f32.mrf.mxu0
  %v385 = vpop.f32.mrf.mxu0
  %v386 = vpop.f32.mrf.mxu0
  %387 = vdwg.mxu0
  %388 = vst [vmem:[%s2] sm:$0xff] %v303
  %389 = vst [vmem:[%s2 + $0x8] sm:$0xff] %v306
  %390 = vst [vmem:[%s2 + $0x10] sm:$0xff] %v311
  %391 = vst [vmem:[%s2 + $0x18] sm:$0xff] %v314
  %392 = vst [vmem:[%s2 + $0x20] sm:$0xff] %v319
  %393 = vst [vmem:[%s2 + $0x28] sm:$0xff] %v322
  %394 = vst [vmem:[%s2 + $0x30] sm:$0xff] %v327
  %395 = vst [vmem:[%s2 + $0x38] sm:$0xff] %v330
  %396 = vst [vmem:[%s2 + $0x40] sm:$0xff] %v335
  %397 = vst [vmem:[%s2 + $0x48] sm:$0xff] %v338
  %398 = vst [vmem:[%s2 + $0x50] sm:$0xff] %v343
  %399 = vst [vmem:[%s2 + $0x58] sm:$0xff] %v346
  %400 = vst [vmem:[%s2 + $0x60] sm:$0xff] %v351
  %401 = vst [vmem:[%s2 + $0x68] sm:$0xff] %v354
  %402 = vst [vmem:[%s2 + $0x70] sm:$0xff] %v359
  %403 = vst [vmem:[%s2 + $0x78] sm:$0xff] %v362
  %404 = vst [vmem:[%s2 + $0x80] sm:$0xff] %v367
  %405 = vst [vmem:[%s2 + $0x88] sm:$0xff] %v370
  %406 = vst [vmem:[%s2 + $0x90] sm:$0xff] %v375
  %407 = vst [vmem:[%s2 + $0x98] sm:$0xff] %v378
  %408 = vst [vmem:[%s2 + $0xa0] sm:$0xff] %v383
  // Predicated region
  $region10: #{generator_forward.17} parent=0 // pred_check
    _
  $region11: #{generator_forward.17} parent=0 // pred_check_branch
    %410 = sbr.rel (0) target = $region13
  $region12: #{generator_forward.17} parent=0 // pred_region
    _
  $region13: #{generator_forward.17} parent=0 // pred_fallthru
    _
  // Predicated region
  $region14: #{generator_forward.17} parent=0 // pred_check
    _
  $region15: #{generator_forward.17} parent=0 // pred_check_branch
    %412 = sbr.rel (0) target = $region17
  $region16: #{generator_forward.17} parent=0 // pred_region
    _
  $region17: #{generator_forward.17} parent=0 // pred_fallthru
    _

// kernel: tile.68
$region0: #{tile.68}
  #allocation0 [shape = 's32[1]{0}', space=sflag, size = 0x4, scoped, tag = 'scoped memory for tile.68']
  %s0 = inlined_call_operand.vmem [shape: f32[32], index: 0, kind: input, shape index: {}]
  %s1 = inlined_call_operand.vmem [shape: f32[16,32], index: 1, kind: output, shape index: {}]
  // Predicated region
  $region2: #{tile.68} parent=0 // pred_check
    _
  $region3: #{tile.68} parent=0 // pred_check_branch
    %3 = sbr.rel (0) target = $region5
  $region4: #{tile.68} parent=0 // pred_region
    _
  $region5: #{tile.68} parent=0 // pred_fallthru
    _
  %v4 = vld [vmem:[%s0] ss:$0 sm:$0xff]
  %5 = vst [vmem:[%s1] sm:$0xff] %v4
  %s6 = scalar_lea.vmem %s1, 8
  %7 = vst [vmem:[%s6] sm:$0xff] %v4

// kernel: generator_forward.18
$region0: #{generator_forward.18}
  #allocation0 [shape = 'u32[]', space=smem, size = 0x4, offset = 0x4, fixed_abs, tag = 'smem constant byte address 0x4 - core index']
  #allocation1 [shape = 'u32[144,128]{1,0:T(1,128)}', space=vmem, size = 0x12000, scoped, tag = 'internal scratch']
  %s0 = inlined_call_operand.vmem [shape: f32[32,512], index: 0, kind: input, shape index: {}]
  %s1 = inlined_call_operand.vmem [shape: f32[1,512], index: 1, kind: input, shape index: {}]
  %s2 = inlined_call_operand.vmem [shape: f32[1,512], index: 2, kind: input, shape index: {}]
  %s3 = inlined_call_operand.vmem [shape: bf16[32,512], index: 3, kind: output, shape index: {}]
  %s4 = sld [smem:[#allocation0]]
  $region22: #{generator_forward.18} parent=0
    _
  %s6 = ssub.s32 1, %s4
  %s7 = scalar_select 0, %s6, %s4
  // Predicated region
  $region2: #{generator_forward.18} parent=0 // pred_check
    _
  $region3: #{generator_forward.18} parent=0 // pred_check_branch
    %9 = sbr.rel (0) target = $region5
  $region4: #{generator_forward.18} parent=0 // pred_region
    _
  $region5: #{generator_forward.18} parent=0 // pred_fallthru
    _
  // Predicated region
  $region6: #{generator_forward.18} parent=0 // pred_check
    _
  $region7: #{generator_forward.18} parent=0 // pred_check_branch
    %11 = sbr.rel (0) target = $region9
  $region8: #{generator_forward.18} parent=0 // pred_region
    _
  $region9: #{generator_forward.18} parent=0 // pred_fallthru
    _
  // Predicated region
  $region10: #{generator_forward.18} parent=0 // pred_check
    _
  $region11: #{generator_forward.18} parent=0 // pred_check_branch
    %13 = sbr.rel (0) target = $region13
  $region12: #{generator_forward.18} parent=0 // pred_region
    _
  $region13: #{generator_forward.18} parent=0 // pred_fallthru
    _
  %v14 = vld [vmem:[%s0] sm:$0xff]
  %v15 = vld [vmem:[%s0 + $0x8] sm:$0xff]
  %v16 = vld [vmem:[%s0 + $0x10] sm:$0xff]
  %v17 = vld [vmem:[%s0 + $0x18] sm:$0xff]
  %v18 = vld [vmem:[%s0 + $0x20] sm:$0xff]
  %v19 = vld [vmem:[%s0 + $0x28] sm:$0xff]
  %v20 = vld [vmem:[%s0 + $0x30] sm:$0xff]
  %v21 = vld [vmem:[%s0 + $0x38] sm:$0xff]
  %v22 = vld [vmem:[%s0 + $0x40] sm:$0xff]
  %v23 = vld [vmem:[%s0 + $0x48] sm:$0xff]
  %v24 = vld [vmem:[%s0 + $0x50] sm:$0xff]
  %v25 = vld [vmem:[%s0 + $0x58] sm:$0xff]
  %v26 = vld [vmem:[%s0 + $0x60] sm:$0xff]
  %v27 = vld [vmem:[%s0 + $0x68] sm:$0xff]
  %v28 = vld [vmem:[%s0 + $0x70] sm:$0xff]
  %v29 = vld [vmem:[%s0 + $0x78] sm:$0xff]
  %v30 = vld [vmem:[%s1] sm:$0xf]
  %v32 = vlaneseq
  %v33 = vshrl.u32 %v32, 7
  %v34 = vsub.s32 0, %v33
  %v35 = vrot.slane %v30, %v34
  %v36 = vlaneseq
  %v37 = vshrl.u32 %v36, 7
  %v38 = vsub.s32 1, %v37
  %v39 = vrot.slane %v30, %v38
  %v40 = vlaneseq
  %v41 = vshrl.u32 %v40, 7
  %v42 = vsub.s32 2, %v41
  %v43 = vrot.slane %v30, %v42
  %v44 = vlaneseq
  %v45 = vshrl.u32 %v44, 7
  %v46 = vsub.s32 3, %v45
  %v47 = vrot.slane %v30, %v46
  %v52 = vmul.f32 %v14, %v35
  %v53 = vmul.f32 %v15, %v39
  %v54 = vmul.f32 %v16, %v43
  %v55 = vmul.f32 %v17, %v47
  %v56 = vmul.f32 %v18, %v35
  %v57 = vmul.f32 %v19, %v39
  %v58 = vmul.f32 %v20, %v43
  %v59 = vmul.f32 %v21, %v47
  %v60 = vmul.f32 %v22, %v35
  %v61 = vmul.f32 %v23, %v39
  %v62 = vmul.f32 %v24, %v43
  %v63 = vmul.f32 %v25, %v47
  %v64 = vmul.f32 %v26, %v35
  %v65 = vmul.f32 %v27, %v39
  %v66 = vmul.f32 %v28, %v43
  %v67 = vmul.f32 %v29, %v47
  %v68 = vld [vmem:[%s2] sm:$0xf]
  %v70 = vlaneseq
  %v71 = vshrl.u32 %v70, 7
  %v72 = vsub.s32 0, %v71
  %v73 = vrot.slane %v68, %v72
  %v74 = vlaneseq
  %v75 = vshrl.u32 %v74, 7
  %v76 = vsub.s32 1, %v75
  %v77 = vrot.slane %v68, %v76
  %v78 = vlaneseq
  %v79 = vshrl.u32 %v78, 7
  %v80 = vsub.s32 2, %v79
  %v81 = vrot.slane %v68, %v80
  %v82 = vlaneseq
  %v83 = vshrl.u32 %v82, 7
  %v84 = vsub.s32 3, %v83
  %v85 = vrot.slane %v68, %v84
  %v90 = vadd.f32 %v52, %v73
  %v91 = vadd.f32 %v53, %v77
  %v92 = vadd.f32 %v54, %v81
  %v93 = vadd.f32 %v55, %v85
  %v94 = vadd.f32 %v56, %v73
  %v95 = vadd.f32 %v57, %v77
  %v96 = vadd.f32 %v58, %v81
  %v97 = vadd.f32 %v59, %v85
  %v98 = vadd.f32 %v60, %v73
  %v99 = vadd.f32 %v61, %v77
  %v100 = vadd.f32 %v62, %v81
  %v101 = vadd.f32 %v63, %v85
  %v102 = vadd.f32 %v64, %v73
  %v103 = vadd.f32 %v65, %v77
  %v104 = vadd.f32 %v66, %v81
  %v105 = vadd.f32 %v67, %v85
  %v106 = vmax.f32 %v90, 0.0
  %v107 = vmax.f32 %v91, 0.0
  %v108 = vmax.f32 %v92, 0.0
  %v109 = vmax.f32 %v93, 0.0
  %v110 = vmax.f32 %v94, 0.0
  %v111 = vmax.f32 %v95, 0.0
  %v112 = vmax.f32 %v96, 0.0
  %v113 = vmax.f32 %v97, 0.0
  %v114 = vmax.f32 %v98, 0.0
  %v115 = vmax.f32 %v99, 0.0
  %v116 = vmax.f32 %v100, 0.0
  %v117 = vmax.f32 %v101, 0.0
  %v118 = vmax.f32 %v102, 0.0
  %v119 = vmax.f32 %v103, 0.0
  %v120 = vmax.f32 %v104, 0.0
  %v121 = vmax.f32 %v105, 0.0
  %v122 = vpack.c.bf16 %v110, %v106
  %v123 = vpack.c.bf16 %v111, %v107
  %v124 = vpack.c.bf16 %v112, %v108
  %v125 = vpack.c.bf16 %v113, %v109
  %v126 = vpack.c.bf16 %v118, %v114
  %v127 = vpack.c.bf16 %v119, %v115
  %v128 = vpack.c.bf16 %v120, %v116
  %v129 = vpack.c.bf16 %v121, %v117
  %v138 = vunpack.c.l.b16 %v122
  %v139 = vunpack.c.l.b16 %v123
  %v140 = vunpack.c.l.b16 %v124
  %v141 = vunpack.c.l.b16 %v125
  %v142 = vunpack.c.h.b16 %v122
  %v143 = vunpack.c.h.b16 %v123
  %v144 = vunpack.c.h.b16 %v124
  %v145 = vunpack.c.h.b16 %v125
  %v146 = vunpack.c.l.b16 %v126
  %v147 = vunpack.c.l.b16 %v127
  %v148 = vunpack.c.l.b16 %v128
  %v149 = vunpack.c.l.b16 %v129
  %v150 = vunpack.c.h.b16 %v126
  %v151 = vunpack.c.h.b16 %v127
  %v152 = vunpack.c.h.b16 %v128
  %v153 = vunpack.c.h.b16 %v129
  %v154 = vpack.c.b16 %v139, %v138
  %v155 = vpack.c.b16 %v141, %v140
  %v156 = vpack.c.b16 %v143, %v142
  %v157 = vpack.c.b16 %v145, %v144
  %v158 = vpack.c.b16 %v147, %v146
  %v159 = vpack.c.b16 %v149, %v148
  %v160 = vpack.c.b16 %v151, %v150
  %v161 = vpack.c.b16 %v153, %v152
  %170 = vst [vmem:[%s3] sm:$0xff] %v154
  %171 = vst [vmem:[%s3 + $0x8] sm:$0xff] %v155
  %172 = vst [vmem:[%s3 + $0x10] sm:$0xff] %v156
  %173 = vst [vmem:[%s3 + $0x18] sm:$0xff] %v157
  %174 = vst [vmem:[%s3 + $0x20] sm:$0xff] %v158
  %175 = vst [vmem:[%s3 + $0x28] sm:$0xff] %v159
  %176 = vst [vmem:[%s3 + $0x30] sm:$0xff] %v160
  %177 = vst [vmem:[%s3 + $0x38] sm:$0xff] %v161
  // Predicated region
  $region14: #{generator_forward.18} parent=0 // pred_check
    _
  $region15: #{generator_forward.18} parent=0 // pred_check_branch
    %179 = sbr.rel (0) target = $region17
  $region16: #{generator_forward.18} parent=0 // pred_region
    _
  $region17: #{generator_forward.18} parent=0 // pred_fallthru
    _
  // Predicated region
  $region18: #{generator_forward.18} parent=0 // pred_check
    _
  $region19: #{generator_forward.18} parent=0 // pred_check_branch
    %181 = sbr.rel (0) target = $region21
  $region20: #{generator_forward.18} parent=0 // pred_region
    _
  $region21: #{generator_forward.18} parent=0 // pred_fallthru
    _

// kernel: generator_forward.19
$region0: #{generator_forward.19}
  #allocation0 [shape = 'u32[]', space=smem, size = 0x4, offset = 0x4, fixed_abs, tag = 'smem constant byte address 0x4 - core index']
  #allocation1 [shape = 'u32[144,128]{1,0:T(1,128)}', space=vmem, size = 0x12000, scoped, tag = 'internal scratch']
  %s0 = inlined_call_operand.vmem [shape: bf16[768,128], index: 0, kind: input, shape index: {}]
  %s1 = inlined_call_operand.vmem [shape: bf16[128,128], index: 1, kind: input, shape index: {}]
  %s2 = inlined_call_operand.vmem [shape: f32[768,128], index: 2, kind: output, shape index: {}]
  %s3 = sld [smem:[#allocation0]]
  $region41: #{generator_forward.19} parent=0
    _
  %s5 = ssub.s32 1, %s3
  %s6 = scalar_select 0, %s5, %s3
  loop: start=0, step=1, limit=5
  $region2: #{generator_forward.19} parent=0 // loop_pre_header
    _
  $region3: #{generator_forward.19} parent=0 // loop_header
    %s8 = sphi 0, %s12
    %p9 = scmp.ge.s32.totalorder %s8, 5
    %s18 = sphi 0, %s20
    %s21 = sphi 0, %s18
    %s22 = sphi 0, %s21
    %s38 = sphi 0, %s22
    %s42 = sphi 0, %s42
    %s44 = sphi 0, %s42
    %s45 = sphi 0, %s44
    %s59 = sphi 0, %s45
    %s65 = sphi 0, %s67
    %s68 = sphi 0, %s65
    %s69 = sphi 0, %s68
    %s85 = sphi 0, %s69
  $region4: #{generator_forward.19} parent=0 // loop_header_branch
    %11 = sbr.rel (%p9) target = $region8
  $region5: #{generator_forward.19} parent=0 // loop_body
    %s13 = ssub.s32 %s8, 1
    %s14 = ssub.s32 %s8, 2
    %s15 = sadd.s32 %s8, 1
    %s16 = ssub.s32 %s8, %s15
    %p17 = scmp.eq.s32.totalorder %s16, 0
    %s19 = sadd.s32 %s18, 1
    %s20 = scalar_select %p17, %s18, %s19
    %p23 = pneg %p17
    %p24 = scmp.eq.s32.totalorder %s8, 2
    %p25 = por %p23, %p24
    %p26 = scmp.ne.s32.totalorder %s18, %s21
    %p27 = scmp.eq.s32.totalorder %s8, 0
    %p28 = por %p26, %p27
    %p29 = scmp.ne.s32.totalorder %s18, %s21
    %p30 = scmp.eq.s32.totalorder %s13, 2
    %p31 = por %p29, %p30
    %p32 = scmp.ne.s32.totalorder %s21, %s22
    %p33 = scmp.eq.s32.totalorder %s13, 0
    %p34 = por %p32, %p33
    %p35 = scmp.ne.s32.totalorder %s21, %s22
    %p36 = scmp.eq.s32.totalorder %s14, 2
    %p37 = por %p35, %p36
    %p39 = scmp.ne.s32.totalorder %s22, %s38
    %p40 = scmp.eq.s32.totalorder %s14, 0
    %p41 = por %p39, %p40
    %s43 = sadd.s32 %s42, 1
    %p46 = scmp.eq.s32.totalorder %s8, 2
    %p47 = scmp.ne.s32.totalorder %s42, %s44
    %p48 = scmp.eq.s32.totalorder %s8, 0
    %p49 = por %p47, %p48
    %p50 = scmp.ne.s32.totalorder %s42, %s44
    %p51 = scmp.eq.s32.totalorder %s13, 2
    %p52 = por %p50, %p51
    %p53 = scmp.ne.s32.totalorder %s44, %s45
    %p54 = scmp.eq.s32.totalorder %s13, 0
    %p55 = por %p53, %p54
    %p56 = scmp.ne.s32.totalorder %s44, %s45
    %p57 = scmp.eq.s32.totalorder %s14, 2
    %p58 = por %p56, %p57
    %p60 = scmp.ne.s32.totalorder %s45, %s59
    %p61 = scmp.eq.s32.totalorder %s14, 0
    %p62 = por %p60, %p61
    %s63 = ssub.s32 %s8, %s15
    %p64 = scmp.eq.s32.totalorder %s63, 0
    %s66 = sadd.s32 %s65, 1
    %s67 = scalar_select %p64, %s65, %s66
    %p70 = pneg %p64
    %p71 = scmp.eq.s32.totalorder %s8, 2
    %p72 = por %p70, %p71
    %p73 = scmp.ne.s32.totalorder %s65, %s68
    %p74 = scmp.eq.s32.totalorder %s8, 0
    %p75 = por %p73, %p74
    %p76 = scmp.ne.s32.totalorder %s65, %s68
    %p77 = scmp.eq.s32.totalorder %s13, 2
    %p78 = por %p76, %p77
    %p79 = scmp.ne.s32.totalorder %s68, %s69
    %p80 = scmp.eq.s32.totalorder %s13, 0
    %p81 = por %p79, %p80
    %p82 = scmp.ne.s32.totalorder %s68, %s69
    %p83 = scmp.eq.s32.totalorder %s14, 2
    %p84 = por %p82, %p83
    %p86 = scmp.ne.s32.totalorder %s69, %s85
    %p87 = scmp.eq.s32.totalorder %s14, 0
    %p88 = por %p86, %p87
    %p89 = scmp.le.s32.totalorder 1, %s8
    %p90 = scmp.lt.s32.totalorder %s8, 4
    %p91 = pnand %p89, %p90
    %p92 = pneg %p91
    // Predicated region
    $region9: #{generator_forward.19} parent=5 // pred_check
      _
    $region10: #{generator_forward.19} parent=5 // pred_check_branch
      %94 = sbr.rel (%p91) target = $region12
    $region11: #{generator_forward.19} parent=5 // pred_region
      %s95 = ssub.s32 %s8, 1
      // Predicated region
      $region13: #{generator_forward.19} parent=11 // pred_check
        %p96 = pneg %p55
      $region14: #{generator_forward.19} parent=11 // pred_check_branch
        %98 = sbr.rel (%p96) target = $region16
      $region15: #{generator_forward.19} parent=11 // pred_region
        _
      $region16: #{generator_forward.19} parent=11 // pred_fallthru
        _
    $region12: #{generator_forward.19} parent=5 // pred_fallthru
      _
    %p99 = scmp.lt.s32.totalorder %s8, 3
    // Predicated region
    $region17: #{generator_forward.19} parent=5 // pred_check
      %p100 = pneg %p99
    $region18: #{generator_forward.19} parent=5 // pred_check_branch
      %102 = sbr.rel (%p100) target = $region20
    $region19: #{generator_forward.19} parent=5 // pred_region
      // Predicated region
      $region21: #{generator_forward.19} parent=19 // pred_check
        %p103 = pneg %p28
      $region22: #{generator_forward.19} parent=19 // pred_check_branch
        %105 = sbr.rel (%p103) target = $region24
      $region23: #{generator_forward.19} parent=19 // pred_region
        %s106 = smul.u32 32, %s8
        %p107 = scmp.lt.s32.totalorder %s106, 95
        %s108 = scalar_select %p107, %s106, 95
        %s109 = smul.addr %s108, 4
        %s110 = scalar_lea.vmem %s0, %s109
        %s111 = smul.u32 32, %s8
      $region24: #{generator_forward.19} parent=19 // pred_fallthru
        _
    $region20: #{generator_forward.19} parent=5 // pred_fallthru
      _
    %p112 = scmp.le.s32.totalorder 1, %s8
    %p113 = scmp.lt.s32.totalorder %s8, 4
    %p114 = pnand %p112, %p113
    %p115 = pneg %p114
    // Predicated region
    $region25: #{generator_forward.19} parent=5 // pred_check
      _
    $region26: #{generator_forward.19} parent=5 // pred_check_branch
      %117 = sbr.rel (%p114) target = $region28
    $region27: #{generator_forward.19} parent=5 // pred_region
      %s118 = ssub.s32 %s8, 1
      %s119 = smul.u32 32, %s13
      %p120 = scmp.lt.s32.totalorder %s119, 95
      %s121 = scalar_select %p120, %s119, 95
      %s122 = smul.addr %s121, 4
      %s123 = scalar_lea.vmem %s0, %s122
      %p124 = pneg %p34
      %p125 = pneg %p31
      %p126 = pneg %p55
      %p127 = pneg %p52
      %p128 = pneg %p81
      %p129 = pneg %p78
      %s130 = smul.u32 32, %s13
      %p131 = scmp.lt.s32.totalorder %s130, 95
      %s132 = scalar_select %p131, %s130, 95
      %s133 = smul.addr %s132, 8
      %s134 = scalar_lea.vmem %s2, %s133
      %s135 = smul.u32 32, %s13
      %p136 = scmp.lt.s32.totalorder %s135, 95
      %s137 = scalar_select %p136, %s135, 95
      %s138 = smul.addr %s137, 4
      %s139 = scalar_lea.vmem %s0, %s138
      %s140 = smul.u32 32, %s13
      %s141 = smul.u32 32, %s13
      %p142 = scmp.lt.s32.totalorder %s141, 95
      %s143 = scalar_select %p142, %s141, 95
      %s144 = smul.addr %s143, 8
      %s145 = scalar_lea.vmem %s2, %s144
      %s146 = smul.u32 32, %s13
      %v148 = vld [vmem:[%s139] sm:$0xf]
      %v149 = vld [vmem:[%s139 + $0x4] sm:$0xf]
      %v150 = vld [vmem:[%s139 + $0x8] sm:$0xf]
      %v151 = vld [vmem:[%s139 + $0xc] sm:$0xf]
      %v152 = vld [vmem:[%s139 + $0x10] sm:$0xf]
      %v153 = vld [vmem:[%s139 + $0x14] sm:$0xf]
      %v154 = vld [vmem:[%s139 + $0x18] sm:$0xf]
      %v155 = vld [vmem:[%s139 + $0x1c] sm:$0xf]
      %v156 = vld [vmem:[%s139 + $0x20] sm:$0xf]
      %v157 = vld [vmem:[%s139 + $0x24] sm:$0xf]
      %v158 = vld [vmem:[%s139 + $0x28] sm:$0xf]
      %v159 = vld [vmem:[%s139 + $0x2c] sm:$0xf]
      %v160 = vld [vmem:[%s139 + $0x30] sm:$0xf]
      %v161 = vld [vmem:[%s139 + $0x34] sm:$0xf]
      %v162 = vld [vmem:[%s139 + $0x38] sm:$0xf]
      %v163 = vld [vmem:[%s139 + $0x3c] sm:$0xf]
      %v164 = vld [vmem:[%s139 + $0x40] sm:$0xf]
      %v165 = vld [vmem:[%s139 + $0x44] sm:$0xf]
      %v166 = vld [vmem:[%s139 + $0x48] sm:$0xf]
      %v167 = vld [vmem:[%s139 + $0x4c] sm:$0xf]
      %v168 = vld [vmem:[%s139 + $0x50] sm:$0xf]
      %v169 = vld [vmem:[%s139 + $0x54] sm:$0xf]
      %v170 = vld [vmem:[%s139 + $0x58] sm:$0xf]
      %v171 = vld [vmem:[%s139 + $0x5c] sm:$0xf]
      %v172 = vld [vmem:[%s139 + $0x60] sm:$0xf]
      %v173 = vld [vmem:[%s139 + $0x64] sm:$0xf]
      %v174 = vld [vmem:[%s139 + $0x68] sm:$0xf]
      %v175 = vld [vmem:[%s139 + $0x6c] sm:$0xf]
      %v176 = vld [vmem:[%s139 + $0x70] sm:$0xf]
      %v177 = vld [vmem:[%s139 + $0x74] sm:$0xf]
      %v178 = vld [vmem:[%s139 + $0x78] sm:$0xf]
      %v179 = vld [vmem:[%s139 + $0x7c] sm:$0xf]
      %v180 = vld [vmem:[%s1] sm:$0xf]
      %v181 = vld [vmem:[%s1 + $0x4] sm:$0xf]
      %v182 = vld [vmem:[%s1 + $0x8] sm:$0xf]
      %v183 = vld [vmem:[%s1 + $0xc] sm:$0xf]
      %v184 = vld [vmem:[%s1 + $0x10] sm:$0xf]
      %v185 = vld [vmem:[%s1 + $0x14] sm:$0xf]
      %v186 = vld [vmem:[%s1 + $0x18] sm:$0xf]
      %v187 = vld [vmem:[%s1 + $0x1c] sm:$0xf]
      %v188 = vld [vmem:[%s1 + $0x20] sm:$0xf]
      %v189 = vld [vmem:[%s1 + $0x24] sm:$0xf]
      %v190 = vld [vmem:[%s1 + $0x28] sm:$0xf]
      %v191 = vld [vmem:[%s1 + $0x2c] sm:$0xf]
      %v192 = vld [vmem:[%s1 + $0x30] sm:$0xf]
      %v193 = vld [vmem:[%s1 + $0x34] sm:$0xf]
      %v194 = vld [vmem:[%s1 + $0x38] sm:$0xf]
      %v195 = vld [vmem:[%s1 + $0x3c] sm:$0xf]
      %v228 = vunpack.c.l.b16 %v148
      %v229 = vunpack.c.l.b16 %v149
      %v230 = vunpack.c.l.b16 %v150
      %v231 = vunpack.c.l.b16 %v151
      %v232 = vunpack.c.l.b16 %v152
      %v233 = vunpack.c.l.b16 %v153
      %v234 = vunpack.c.l.b16 %v154
      %v235 = vunpack.c.l.b16 %v155
      %v236 = vunpack.c.l.b16 %v156
      %v237 = vunpack.c.l.b16 %v157
      %v238 = vunpack.c.l.b16 %v158
      %v239 = vunpack.c.l.b16 %v159
      %v240 = vunpack.c.l.b16 %v160
      %v241 = vunpack.c.l.b16 %v161
      %v242 = vunpack.c.l.b16 %v162
      %v243 = vunpack.c.l.b16 %v163
      %v244 = vunpack.c.l.b16 %v164
      %v245 = vunpack.c.l.b16 %v165
      %v246 = vunpack.c.l.b16 %v166
      %v247 = vunpack.c.l.b16 %v167
      %v248 = vunpack.c.l.b16 %v168
      %v249 = vunpack.c.l.b16 %v169
      %v250 = vunpack.c.l.b16 %v170
      %v251 = vunpack.c.l.b16 %v171
      %v252 = vunpack.c.l.b16 %v172
      %v253 = vunpack.c.l.b16 %v173
      %v254 = vunpack.c.l.b16 %v174
      %v255 = vunpack.c.l.b16 %v175
      %v256 = vunpack.c.l.b16 %v176
      %v257 = vunpack.c.l.b16 %v177
      %v258 = vunpack.c.l.b16 %v178
      %v259 = vunpack.c.l.b16 %v179
      %v260 = vpack.c.b16 %v229, %v228
      %v261 = vpack.c.b16 %v231, %v230
      %v262 = vpack.c.b16 %v233, %v232
      %v263 = vpack.c.b16 %v235, %v234
      %v264 = vpack.c.b16 %v237, %v236
      %v265 = vpack.c.b16 %v239, %v238
      %v266 = vpack.c.b16 %v241, %v240
      %v267 = vpack.c.b16 %v243, %v242
      %v268 = vpack.c.b16 %v245, %v244
      %v269 = vpack.c.b16 %v247, %v246
      %v270 = vpack.c.b16 %v249, %v248
      %v271 = vpack.c.b16 %v251, %v250
      %v272 = vpack.c.b16 %v253, %v252
      %v273 = vpack.c.b16 %v255, %v254
      %v274 = vpack.c.b16 %v257, %v256
      %v275 = vpack.c.b16 %v259, %v258
      %v308 = vunpack.c.l.b16 %v180
      %v309 = vunpack.c.l.b16 %v181
      %v310 = vunpack.c.l.b16 %v182
      %v311 = vunpack.c.l.b16 %v183
      %v312 = vunpack.c.l.b16 %v184
      %v313 = vunpack.c.l.b16 %v185
      %v314 = vunpack.c.l.b16 %v186
      %v315 = vunpack.c.l.b16 %v187
      %v316 = vunpack.c.l.b16 %v188
      %v317 = vunpack.c.l.b16 %v189
      %v318 = vunpack.c.l.b16 %v190
      %v319 = vunpack.c.l.b16 %v191
      %v320 = vunpack.c.l.b16 %v192
      %v321 = vunpack.c.l.b16 %v193
      %v322 = vunpack.c.l.b16 %v194
      %v323 = vunpack.c.l.b16 %v195
      %v324 = vpack.c.b16 %v309, %v308
      %v325 = vpack.c.b16 %v311, %v310
      %v326 = vpack.c.b16 %v313, %v312
      %v327 = vpack.c.b16 %v315, %v314
      %v328 = vpack.c.b16 %v317, %v316
      %v329 = vpack.c.b16 %v319, %v318
      %v330 = vpack.c.b16 %v321, %v320
      %v331 = vpack.c.b16 %v323, %v322
      %340 = vmatprep.subr.bf16.mxu0 0
      %341 = vmatpush1.bf16.msra.mxu0 %v331
      %342 = vmatprep.subr.bf16.mxu0 0
      %343 = vmatpush1.bf16.msra.mxu0 %v330
      %344 = vmatprep.subr.bf16.mxu0 0
      %345 = vmatpush1.bf16.msra.mxu0 %v329
      %346 = vmatprep.subr.bf16.mxu0 0
      %347 = vmatpush1.bf16.msra.mxu0 %v328
      %348 = vmatprep.subr.bf16.mxu0 0
      %349 = vmatpush1.bf16.msra.mxu0 %v327
      %350 = vmatprep.subr.bf16.mxu0 0
      %351 = vmatpush1.bf16.msra.mxu0 %v326
      %352 = vmatprep.subr.bf16.mxu0 0
      %353 = vmatpush1.bf16.msra.mxu0 %v325
      %354 = vmatprep.subr.bf16.mxu0 0
      %355 = vmatpush1.bf16.msra.mxu0 %v324
      %356 = vmatprep.subr.bf16.mxu0 0
      %357 = vmatpush2.bf16.msra.mxu0 0
      %358 = vmatprep.subr.bf16.mxu0 0
      %359 = vmatpush2.bf16.msra.mxu0 0
      %360 = vmatprep.subr.bf16.mxu0 0
      %361 = vmatpush2.bf16.msra.mxu0 0
      %362 = vmatprep.subr.bf16.mxu0 0
      %363 = vmatpush2.bf16.msra.mxu0 0
      %364 = vmatprep.subr.bf16.mxu0 0
      %365 = vmatpush2.bf16.msra.mxu0 0
      %366 = vmatprep.subr.bf16.mxu0 0
      %367 = vmatpush2.bf16.msra.mxu0 0
      %368 = vmatprep.subr.bf16.mxu0 0
      %369 = vmatpush2.bf16.msra.mxu0 0
      %370 = vmatprep.subr.bf16.mxu0 0
      %371 = vmatpush2.bf16.msra.mxu0 0
      %372 = vmatprep.mubr.bf16.mxu0 0
      %373 = vmatmul.mubr.bf16.gmra.mxu0 %v260
      %v374 = vpop.f32.mrf.mxu0
      %v375 = vadd.f32 0.0, %v374
      %v376 = vpop.f32.mrf.mxu0
      %v377 = vpop.f32.mrf.mxu0
      %v378 = vadd.f32 0.0, %v377
      %v379 = vpop.f32.mrf.mxu0
      %380 = vmatprep.mubr.bf16.mxu0 0
      %381 = vmatmul.mubr.bf16.gmra.mxu0 %v261
      %v382 = vpop.f32.mrf.mxu0
      %v383 = vadd.f32 0.0, %v382
      %v384 = vpop.f32.mrf.mxu0
      %v385 = vpop.f32.mrf.mxu0
      %v386 = vadd.f32 0.0, %v385
      %v387 = vpop.f32.mrf.mxu0
      %388 = vmatprep.mubr.bf16.mxu0 0
      %389 = vmatmul.mubr.bf16.gmra.mxu0 %v262
      %v390 = vpop.f32.mrf.mxu0
      %v391 = vadd.f32 0.0, %v390
      %v392 = vpop.f32.mrf.mxu0
      %v393 = vpop.f32.mrf.mxu0
      %v394 = vadd.f32 0.0, %v393
      %v395 = vpop.f32.mrf.mxu0
      %396 = vmatprep.mubr.bf16.mxu0 0
      %397 = vmatmul.mubr.bf16.gmra.mxu0 %v263
      %v398 = vpop.f32.mrf.mxu0
      %v399 = vadd.f32 0.0, %v398
      %v400 = vpop.f32.mrf.mxu0
      %v401 = vpop.f32.mrf.mxu0
      %v402 = vadd.f32 0.0, %v401
      %v403 = vpop.f32.mrf.mxu0
      %404 = vmatprep.mubr.bf16.mxu0 0
      %405 = vmatmul.mubr.bf16.gmra.mxu0 %v264
      %v406 = vpop.f32.mrf.mxu0
      %v407 = vadd.f32 0.0, %v406
      %v408 = vpop.f32.mrf.mxu0
      %v409 = vpop.f32.mrf.mxu0
      %v410 = vadd.f32 0.0, %v409
      %v411 = vpop.f32.mrf.mxu0
      %412 = vmatprep.mubr.bf16.mxu0 0
      %413 = vmatmul.mubr.bf16.gmra.mxu0 %v265
      %v414 = vpop.f32.mrf.mxu0
      %v415 = vadd.f32 0.0, %v414
      %v416 = vpop.f32.mrf.mxu0
      %v417 = vpop.f32.mrf.mxu0
      %v418 = vadd.f32 0.0, %v417
      %v419 = vpop.f32.mrf.mxu0
      %420 = vmatprep.mubr.bf16.mxu0 0
      %421 = vmatmul.mubr.bf16.gmra.mxu0 %v266
      %v422 = vpop.f32.mrf.mxu0
      %v423 = vadd.f32 0.0, %v422
      %v424 = vpop.f32.mrf.mxu0
      %v425 = vpop.f32.mrf.mxu0
      %v426 = vadd.f32 0.0, %v425
      %v427 = vpop.f32.mrf.mxu0
      %428 = vmatprep.mubr.bf16.mxu0 0
      %429 = vmatmul.mubr.bf16.gmra.mxu0 %v267
      %v430 = vpop.f32.mrf.mxu0
      %v431 = vadd.f32 0.0, %v430
      %v432 = vpop.f32.mrf.mxu0
      %v433 = vpop.f32.mrf.mxu0
      %v434 = vadd.f32 0.0, %v433
      %v435 = vpop.f32.mrf.mxu0
      %436 = vmatprep.mubr.bf16.mxu0 0
      %437 = vmatmul.mubr.bf16.gmra.mxu0 %v268
      %v438 = vpop.f32.mrf.mxu0
      %v439 = vadd.f32 0.0, %v438
      %v440 = vpop.f32.mrf.mxu0
      %v441 = vpop.f32.mrf.mxu0
      %v442 = vadd.f32 0.0, %v441
      %v443 = vpop.f32.mrf.mxu0
      %444 = vmatprep.mubr.bf16.mxu0 0
      %445 = vmatmul.mubr.bf16.gmra.mxu0 %v269
      %v446 = vpop.f32.mrf.mxu0
      %v447 = vadd.f32 0.0, %v446
      %v448 = vpop.f32.mrf.mxu0
      %v449 = vpop.f32.mrf.mxu0
      %v450 = vadd.f32 0.0, %v449
      %v451 = vpop.f32.mrf.mxu0
      %452 = vmatprep.mubr.bf16.mxu0 0
      %453 = vmatmul.mubr.bf16.gmra.mxu0 %v270
      %v454 = vpop.f32.mrf.mxu0
      %v455 = vadd.f32 0.0, %v454
      %v456 = vpop.f32.mrf.mxu0
      %v457 = vpop.f32.mrf.mxu0
      %v458 = vadd.f32 0.0, %v457
      %v459 = vpop.f32.mrf.mxu0
      %460 = vmatprep.mubr.bf16.mxu0 0
      %461 = vmatmul.mubr.bf16.gmra.mxu0 %v271
      %v462 = vpop.f32.mrf.mxu0
      %v463 = vadd.f32 0.0, %v462
      %v464 = vpop.f32.mrf.mxu0
      %v465 = vpop.f32.mrf.mxu0
      %v466 = vadd.f32 0.0, %v465
      %v467 = vpop.f32.mrf.mxu0
      %468 = vmatprep.mubr.bf16.mxu0 0
      %469 = vmatmul.mubr.bf16.gmra.mxu0 %v272
      %v470 = vpop.f32.mrf.mxu0
      %v471 = vadd.f32 0.0, %v470
      %v472 = vpop.f32.mrf.mxu0
      %v473 = vpop.f32.mrf.mxu0
      %v474 = vadd.f32 0.0, %v473
      %v475 = vpop.f32.mrf.mxu0
      %476 = vmatprep.mubr.bf16.mxu0 0
      %477 = vmatmul.mubr.bf16.gmra.mxu0 %v273
      %v478 = vpop.f32.mrf.mxu0
      %v479 = vadd.f32 0.0, %v478
      %v480 = vpop.f32.mrf.mxu0
      %v481 = vpop.f32.mrf.mxu0
      %v482 = vadd.f32 0.0, %v481
      %v483 = vpop.f32.mrf.mxu0
      %484 = vmatprep.mubr.bf16.mxu0 0
      %485 = vmatmul.mubr.bf16.gmra.mxu0 %v274
      %v486 = vpop.f32.mrf.mxu0
      %v487 = vadd.f32 0.0, %v486
      %v488 = vpop.f32.mrf.mxu0
      %v489 = vpop.f32.mrf.mxu0
      %v490 = vadd.f32 0.0, %v489
      %v491 = vpop.f32.mrf.mxu0
      %492 = vmatprep.mubr.bf16.mxu0 0
      %493 = vmatmul.mubr.bf16.gmra.mxu0 %v275
      %v494 = vpop.f32.mrf.mxu0
      %v495 = vadd.f32 0.0, %v494
      %v496 = vpop.f32.mrf.mxu0
      %v497 = vpop.f32.mrf.mxu0
      %v498 = vadd.f32 0.0, %v497
      %v499 = vpop.f32.mrf.mxu0
      %500 = vdwg.mxu0
      %501 = vst [vmem:[%s145] sm:$0xff] %v375
      %502 = vst [vmem:[%s145 + $0x8] sm:$0xff] %v378
      %503 = vst [vmem:[%s145 + $0x10] sm:$0xff] %v383
      %504 = vst [vmem:[%s145 + $0x18] sm:$0xff] %v386
      %505 = vst [vmem:[%s145 + $0x20] sm:$0xff] %v391
      %506 = vst [vmem:[%s145 + $0x28] sm:$0xff] %v394
      %507 = vst [vmem:[%s145 + $0x30] sm:$0xff] %v399
      %508 = vst [vmem:[%s145 + $0x38] sm:$0xff] %v402
      %509 = vst [vmem:[%s145 + $0x40] sm:$0xff] %v407
      %510 = vst [vmem:[%s145 + $0x48] sm:$0xff] %v410
      %511 = vst [vmem:[%s145 + $0x50] sm:$0xff] %v415
      %512 = vst [vmem:[%s145 + $0x58] sm:$0xff] %v418
      %513 = vst [vmem:[%s145 + $0x60] sm:$0xff] %v423
      %514 = vst [vmem:[%s145 + $0x68] sm:$0xff] %v426
      %515 = vst [vmem:[%s145 + $0x70] sm:$0xff] %v431
      %516 = vst [vmem:[%s145 + $0x78] sm:$0xff] %v434
      %517 = vst [vmem:[%s145 + $0x80] sm:$0xff] %v439
      %518 = vst [vmem:[%s145 + $0x88] sm:$0xff] %v442
      %519 = vst [vmem:[%s145 + $0x90] sm:$0xff] %v447
      %520 = vst [vmem:[%s145 + $0x98] sm:$0xff] %v450
      %521 = vst [vmem:[%s145 + $0xa0] sm:$0xff] %v455
      %522 = vst [vmem:[%s145 + $0xa8] sm:$0xff] %v458
      %523 = vst [vmem:[%s145 + $0xb0] sm:$0xff] %v463
      %524 = vst [vmem:[%s145 + $0xb8] sm:$0xff] %v466
      %525 = vst [vmem:[%s145 + $0xc0] sm:$0xff] %v471
      %526 = vst [vmem:[%s145 + $0xc8] sm:$0xff] %v474
      %527 = vst [vmem:[%s145 + $0xd0] sm:$0xff] %v479
      %528 = vst [vmem:[%s145 + $0xd8] sm:$0xff] %v482
      %529 = vst [vmem:[%s145 + $0xe0] sm:$0xff] %v487
      %530 = vst [vmem:[%s145 + $0xe8] sm:$0xff] %v490
      %531 = vst [vmem:[%s145 + $0xf0] sm:$0xff] %v495
      %532 = vst [vmem:[%s145 + $0xf8] sm:$0xff] %v498
      %s533 = smul.u32 32, %s13
      %p534 = scmp.lt.s32.totalorder %s533, 95
      %s535 = scalar_select %p534, %s533, 95
      %s536 = smul.addr %s535, 8
      %s537 = scalar_lea.vmem %s2, %s536
      // Predicated region
      $region29: #{generator_forward.19} parent=27 // pred_check
        %p538 = pneg %p78
      $region30: #{generator_forward.19} parent=27 // pred_check_branch
        %540 = sbr.rel (%p538) target = $region32
      $region31: #{generator_forward.19} parent=27 // pred_region
        %s541 = smul.u32 32, %s13
      $region32: #{generator_forward.19} parent=27 // pred_fallthru
        _
    $region28: #{generator_forward.19} parent=5 // pred_fallthru
      _
    %p542 = scmp.le.s32.totalorder 2, %s8
    // Predicated region
    $region33: #{generator_forward.19} parent=5 // pred_check
      %p543 = pneg %p542
    $region34: #{generator_forward.19} parent=5 // pred_check_branch
      %545 = sbr.rel (%p543) target = $region36
    $region35: #{generator_forward.19} parent=5 // pred_region
      %s546 = ssub.s32 %s8, 2
      // Predicated region
      $region37: #{generator_forward.19} parent=35 // pred_check
        %p547 = pneg %p84
      $region38: #{generator_forward.19} parent=35 // pred_check_branch
        %549 = sbr.rel (%p547) target = $region40
      $region39: #{generator_forward.19} parent=35 // pred_region
        %s550 = smul.u32 32, %s14
        %p551 = scmp.lt.s32.totalorder %s550, 95
        %s552 = scalar_select %p551, %s550, 95
        %s553 = smul.addr %s552, 8
        %s554 = scalar_lea.vmem %s2, %s553
      $region40: #{generator_forward.19} parent=35 // pred_fallthru
        _
    $region36: #{generator_forward.19} parent=5 // pred_fallthru
      _
  $region6: #{generator_forward.19} parent=0 // loop_footer
    %s12 = sadd.s32 1, %s8
  $region7: #{generator_forward.19} parent=0 // loop_footer_branch
    %7 = sbr.rel target = $region3
  $region8: #{generator_forward.19} parent=0 // loop_exit
    _

// kernel: tile.78
$region0: #{tile.78}
  #allocation0 [shape = 's32[1]{0}', space=sflag, size = 0x4, scoped, tag = 'scoped memory for tile.78']
  %s0 = inlined_call_operand.vmem [shape: f32[16], index: 0, kind: input, shape index: {}]
  %s1 = inlined_call_operand.vmem [shape: f32[32,16], index: 1, kind: output, shape index: {}]
  // Predicated region
  $region2: #{tile.78} parent=0 // pred_check
    _
  $region3: #{tile.78} parent=0 // pred_check_branch
    %3 = sbr.rel (0) target = $region5
  $region4: #{tile.78} parent=0 // pred_region
    _
  $region5: #{tile.78} parent=0 // pred_fallthru
    _
  %v4 = vld [vmem:[%s0] ss:$0 sm:$0xff]
  %5 = vst [vmem:[%s1] sm:$0xff] %v4
  %s6 = scalar_lea.vmem %s1, 8
  %7 = vst [vmem:[%s6] sm:$0xff] %v4
  %s8 = scalar_lea.vmem %s1, 16
  %9 = vst [vmem:[%s8] sm:$0xff] %v4
  %s10 = scalar_lea.vmem %s1, 24
  %11 = vst [vmem:[%s10] sm:$0xff] %v4

// kernel: generator_forward.20
$region0: #{generator_forward.20}
  #allocation0 [shape = 'u32[]', space=smem, size = 0x4, offset = 0x4, fixed_abs, tag = 'smem constant byte address 0x4 - core index']
  #allocation1 [shape = 'u32[144,128]{1,0:T(1,128)}', space=vmem, size = 0x12000, scoped, tag = 'internal scratch']
  %s0 = inlined_call_operand.vmem [shape: f32[64,512], index: 0, kind: input, shape index: {}]
  %s1 = inlined_call_operand.vmem [shape: f32[1,512], index: 1, kind: input, shape index: {}]
  %s2 = inlined_call_operand.vmem [shape: f32[1,512], index: 2, kind: input, shape index: {}]
  %s3 = inlined_call_operand.vmem [shape: bf16[64,512], index: 3, kind: output, shape index: {}]
  %s4 = sld [smem:[#allocation0]]
  $region22: #{generator_forward.20} parent=0
    _
  %s6 = ssub.s32 1, %s4
  %s7 = scalar_select 0, %s6, %s4
  // Predicated region
  $region2: #{generator_forward.20} parent=0 // pred_check
    _
  $region3: #{generator_forward.20} parent=0 // pred_check_branch
    %9 = sbr.rel (0) target = $region5
  $region4: #{generator_forward.20} parent=0 // pred_region
    _
  $region5: #{generator_forward.20} parent=0 // pred_fallthru
    _
  // Predicated region
  $region6: #{generator_forward.20} parent=0 // pred_check
    _
  $region7: #{generator_forward.20} parent=0 // pred_check_branch
    %11 = sbr.rel (0) target = $region9
  $region8: #{generator_forward.20} parent=0 // pred_region
    _
  $region9: #{generator_forward.20} parent=0 // pred_fallthru
    _
  // Predicated region
  $region10: #{generator_forward.20} parent=0 // pred_check
    _
  $region11: #{generator_forward.20} parent=0 // pred_check_branch
    %13 = sbr.rel (0) target = $region13
  $region12: #{generator_forward.20} parent=0 // pred_region
    _
  $region13: #{generator_forward.20} parent=0 // pred_fallthru
    _
  %v14 = vld [vmem:[%s0] sm:$0xff]
  %v15 = vld [vmem:[%s0 + $0x8] sm:$0xff]
  %v16 = vld [vmem:[%s0 + $0x10] sm:$0xff]
  %v17 = vld [vmem:[%s0 + $0x18] sm:$0xff]
  %v18 = vld [vmem:[%s0 + $0x20] sm:$0xff]
  %v19 = vld [vmem:[%s0 + $0x28] sm:$0xff]
  %v20 = vld [vmem:[%s0 + $0x30] sm:$0xff]
  %v21 = vld [vmem:[%s0 + $0x38] sm:$0xff]
  %v22 = vld [vmem:[%s0 + $0x40] sm:$0xff]
  %v23 = vld [vmem:[%s0 + $0x48] sm:$0xff]
  %v24 = vld [vmem:[%s0 + $0x50] sm:$0xff]
  %v25 = vld [vmem:[%s0 + $0x58] sm:$0xff]
  %v26 = vld [vmem:[%s0 + $0x60] sm:$0xff]
  %v27 = vld [vmem:[%s0 + $0x68] sm:$0xff]
  %v28 = vld [vmem:[%s0 + $0x70] sm:$0xff]
  %v29 = vld [vmem:[%s0 + $0x78] sm:$0xff]
  %v30 = vld [vmem:[%s0 + $0x80] sm:$0xff]
  %v31 = vld [vmem:[%s0 + $0x88] sm:$0xff]
  %v32 = vld [vmem:[%s0 + $0x90] sm:$0xff]
  %v33 = vld [vmem:[%s0 + $0x98] sm:$0xff]
  %v34 = vld [vmem:[%s0 + $0xa0] sm:$0xff]
  %v35 = vld [vmem:[%s0 + $0xa8] sm:$0xff]
  %v36 = vld [vmem:[%s0 + $0xb0] sm:$0xff]
  %v37 = vld [vmem:[%s0 + $0xb8] sm:$0xff]
  %v38 = vld [vmem:[%s0 + $0xc0] sm:$0xff]
  %v39 = vld [vmem:[%s0 + $0xc8] sm:$0xff]
  %v40 = vld [vmem:[%s0 + $0xd0] sm:$0xff]
  %v41 = vld [vmem:[%s0 + $0xd8] sm:$0xff]
  %v42 = vld [vmem:[%s0 + $0xe0] sm:$0xff]
  %v43 = vld [vmem:[%s0 + $0xe8] sm:$0xff]
  %v44 = vld [vmem:[%s0 + $0xf0] sm:$0xff]
  %v45 = vld [vmem:[%s0 + $0xf8] sm:$0xff]
  %v46 = vld [vmem:[%s1] sm:$0xf]
  %v48 = vlaneseq
  %v49 = vshrl.u32 %v48, 7
  %v50 = vsub.s32 0, %v49
  %v51 = vrot.slane %v46, %v50
  %v52 = vlaneseq
  %v53 = vshrl.u32 %v52, 7
  %v54 = vsub.s32 1, %v53
  %v55 = vrot.slane %v46, %v54
  %v56 = vlaneseq
  %v57 = vshrl.u32 %v56, 7
  %v58 = vsub.s32 2, %v57
  %v59 = vrot.slane %v46, %v58
  %v60 = vlaneseq
  %v61 = vshrl.u32 %v60, 7
  %v62 = vsub.s32 3, %v61
  %v63 = vrot.slane %v46, %v62
  %v68 = vmul.f32 %v14, %v51
  %v69 = vmul.f32 %v15, %v55
  %v70 = vmul.f32 %v16, %v59
  %v71 = vmul.f32 %v17, %v63
  %v72 = vmul.f32 %v18, %v51
  %v73 = vmul.f32 %v19, %v55
  %v74 = vmul.f32 %v20, %v59
  %v75 = vmul.f32 %v21, %v63
  %v76 = vmul.f32 %v22, %v51
  %v77 = vmul.f32 %v23, %v55
  %v78 = vmul.f32 %v24, %v59
  %v79 = vmul.f32 %v25, %v63
  %v80 = vmul.f32 %v26, %v51
  %v81 = vmul.f32 %v27, %v55
  %v82 = vmul.f32 %v28, %v59
  %v83 = vmul.f32 %v29, %v63
  %v84 = vmul.f32 %v30, %v51
  %v85 = vmul.f32 %v31, %v55
  %v86 = vmul.f32 %v32, %v59
  %v87 = vmul.f32 %v33, %v63
  %v88 = vmul.f32 %v34, %v51
  %v89 = vmul.f32 %v35, %v55
  %v90 = vmul.f32 %v36, %v59
  %v91 = vmul.f32 %v37, %v63
  %v92 = vmul.f32 %v38, %v51
  %v93 = vmul.f32 %v39, %v55
  %v94 = vmul.f32 %v40, %v59
  %v95 = vmul.f32 %v41, %v63
  %v96 = vmul.f32 %v42, %v51
  %v97 = vmul.f32 %v43, %v55
  %v98 = vmul.f32 %v44, %v59
  %v99 = vmul.f32 %v45, %v63
  %v100 = vld [vmem:[%s2] sm:$0xf]
  %v102 = vlaneseq
  %v103 = vshrl.u32 %v102, 7
  %v104 = vsub.s32 0, %v103
  %v105 = vrot.slane %v100, %v104
  %v106 = vlaneseq
  %v107 = vshrl.u32 %v106, 7
  %v108 = vsub.s32 1, %v107
  %v109 = vrot.slane %v100, %v108
  %v110 = vlaneseq
  %v111 = vshrl.u32 %v110, 7
  %v112 = vsub.s32 2, %v111
  %v113 = vrot.slane %v100, %v112
  %v114 = vlaneseq
  %v115 = vshrl.u32 %v114, 7
  %v116 = vsub.s32 3, %v115
  %v117 = vrot.slane %v100, %v116
  %v122 = vadd.f32 %v68, %v105
  %v123 = vadd.f32 %v69, %v109
  %v124 = vadd.f32 %v70, %v113
  %v125 = vadd.f32 %v71, %v117
  %v126 = vadd.f32 %v72, %v105
  %v127 = vadd.f32 %v73, %v109
  %v128 = vadd.f32 %v74, %v113
  %v129 = vadd.f32 %v75, %v117
  %v130 = vadd.f32 %v76, %v105
  %v131 = vadd.f32 %v77, %v109
  %v132 = vadd.f32 %v78, %v113
  %v133 = vadd.f32 %v79, %v117
  %v134 = vadd.f32 %v80, %v105
  %v135 = vadd.f32 %v81, %v109
  %v136 = vadd.f32 %v82, %v113
  %v137 = vadd.f32 %v83, %v117
  %v138 = vadd.f32 %v84, %v105
  %v139 = vadd.f32 %v85, %v109
  %v140 = vadd.f32 %v86, %v113
  %v141 = vadd.f32 %v87, %v117
  %v142 = vadd.f32 %v88, %v105
  %v143 = vadd.f32 %v89, %v109
  %v144 = vadd.f32 %v90, %v113
  %v145 = vadd.f32 %v91, %v117
  %v146 = vadd.f32 %v92, %v105
  %v147 = vadd.f32 %v93, %v109
  %v148 = vadd.f32 %v94, %v113
  %v149 = vadd.f32 %v95, %v117
  %v150 = vadd.f32 %v96, %v105
  %v151 = vadd.f32 %v97, %v109
  %v152 = vadd.f32 %v98, %v113
  %v153 = vadd.f32 %v99, %v117
  %v154 = vmax.f32 %v122, 0.0
  %v155 = vmax.f32 %v123, 0.0
  %v156 = vmax.f32 %v124, 0.0
  %v157 = vmax.f32 %v125, 0.0
  %v158 = vmax.f32 %v126, 0.0
  %v159 = vmax.f32 %v127, 0.0
  %v160 = vmax.f32 %v128, 0.0
  %v161 = vmax.f32 %v129, 0.0
  %v162 = vmax.f32 %v130, 0.0
  %v163 = vmax.f32 %v131, 0.0
  %v164 = vmax.f32 %v132, 0.0
  %v165 = vmax.f32 %v133, 0.0
  %v166 = vmax.f32 %v134, 0.0
  %v167 = vmax.f32 %v135, 0.0
  %v168 = vmax.f32 %v136, 0.0
  %v169 = vmax.f32 %v137, 0.0
  %v170 = vmax.f32 %v138, 0.0
  %v171 = vmax.f32 %v139, 0.0
  %v172 = vmax.f32 %v140, 0.0
  %v173 = vmax.f32 %v141, 0.0
  %v174 = vmax.f32 %v142, 0.0
  %v175 = vmax.f32 %v143, 0.0
  %v176 = vmax.f32 %v144, 0.0
  %v177 = vmax.f32 %v145, 0.0
  %v178 = vmax.f32 %v146, 0.0
  %v179 = vmax.f32 %v147, 0.0
  %v180 = vmax.f32 %v148, 0.0
  %v181 = vmax.f32 %v149, 0.0
  %v182 = vmax.f32 %v150, 0.0
  %v183 = vmax.f32 %v151, 0.0
  %v184 = vmax.f32 %v152, 0.0
  %v185 = vmax.f32 %v153, 0.0
  %v186 = vpack.c.bf16 %v158, %v154
  %v187 = vpack.c.bf16 %v159, %v155
  %v188 = vpack.c.bf16 %v160, %v156
  %v189 = vpack.c.bf16 %v161, %v157
  %v190 = vpack.c.bf16 %v166, %v162
  %v191 = vpack.c.bf16 %v167, %v163
  %v192 = vpack.c.bf16 %v168, %v164
  %v193 = vpack.c.bf16 %v169, %v165
  %v194 = vpack.c.bf16 %v174, %v170
  %v195 = vpack.c.bf16 %v175, %v171
  %v196 = vpack.c.bf16 %v176, %v172
  %v197 = vpack.c.bf16 %v177, %v173
  %v198 = vpack.c.bf16 %v182, %v178
  %v199 = vpack.c.bf16 %v183, %v179
  %v200 = vpack.c.bf16 %v184, %v180
  %v201 = vpack.c.bf16 %v185, %v181
  %v218 = vunpack.c.l.b16 %v186
  %v219 = vunpack.c.l.b16 %v187
  %v220 = vunpack.c.l.b16 %v188
  %v221 = vunpack.c.l.b16 %v189
  %v222 = vunpack.c.h.b16 %v186
  %v223 = vunpack.c.h.b16 %v187
  %v224 = vunpack.c.h.b16 %v188
  %v225 = vunpack.c.h.b16 %v189
  %v226 = vunpack.c.l.b16 %v190
  %v227 = vunpack.c.l.b16 %v191
  %v228 = vunpack.c.l.b16 %v192
  %v229 = vunpack.c.l.b16 %v193
  %v230 = vunpack.c.h.b16 %v190
  %v231 = vunpack.c.h.b16 %v191
  %v232 = vunpack.c.h.b16 %v192
  %v233 = vunpack.c.h.b16 %v193
  %v234 = vunpack.c.l.b16 %v194
  %v235 = vunpack.c.l.b16 %v195
  %v236 = vunpack.c.l.b16 %v196
  %v237 = vunpack.c.l.b16 %v197
  %v238 = vunpack.c.h.b16 %v194
  %v239 = vunpack.c.h.b16 %v195
  %v240 = vunpack.c.h.b16 %v196
  %v241 = vunpack.c.h.b16 %v197
  %v242 = vunpack.c.l.b16 %v198
  %v243 = vunpack.c.l.b16 %v199
  %v244 = vunpack.c.l.b16 %v200
  %v245 = vunpack.c.l.b16 %v201
  %v246 = vunpack.c.h.b16 %v198
  %v247 = vunpack.c.h.b16 %v199
  %v248 = vunpack.c.h.b16 %v200
  %v249 = vunpack.c.h.b16 %v201
  %v250 = vpack.c.b16 %v219, %v218
  %v251 = vpack.c.b16 %v221, %v220
  %v252 = vpack.c.b16 %v223, %v222
  %v253 = vpack.c.b16 %v225, %v224
  %v254 = vpack.c.b16 %v227, %v226
  %v255 = vpack.c.b16 %v229, %v228
  %v256 = vpack.c.b16 %v231, %v230
  %v257 = vpack.c.b16 %v233, %v232
  %v258 = vpack.c.b16 %v235, %v234
  %v259 = vpack.c.b16 %v237, %v236
  %v260 = vpack.c.b16 %v239, %v238
  %v261 = vpack.c.b16 %v241, %v240
  %v262 = vpack.c.b16 %v243, %v242
  %v263 = vpack.c.b16 %v245, %v244
  %v264 = vpack.c.b16 %v247, %v246
  %v265 = vpack.c.b16 %v249, %v248
  %282 = vst [vmem:[%s3] sm:$0xff] %v250
  %283 = vst [vmem:[%s3 + $0x8] sm:$0xff] %v251
  %284 = vst [vmem:[%s3 + $0x10] sm:$0xff] %v252
  %285 = vst [vmem:[%s3 + $0x18] sm:$0xff] %v253
  %286 = vst [vmem:[%s3 + $0x20] sm:$0xff] %v254
  %287 = vst [vmem:[%s3 + $0x28] sm:$0xff] %v255
  %288 = vst [vmem:[%s3 + $0x30] sm:$0xff] %v256
  %289 = vst [vmem:[%s3 + $0x38] sm:$0xff] %v257
  %290 = vst [vmem:[%s3 + $0x40] sm:$0xff] %v258
  %291 = vst [vmem:[%s3 + $0x48] sm:$0xff] %v259
  %292 = vst [vmem:[%s3 + $0x50] sm:$0xff] %v260
  %293 = vst [vmem:[%s3 + $0x58] sm:$0xff] %v261
  %294 = vst [vmem:[%s3 + $0x60] sm:$0xff] %v262
  %295 = vst [vmem:[%s3 + $0x68] sm:$0xff] %v263
  %296 = vst [vmem:[%s3 + $0x70] sm:$0xff] %v264
  %297 = vst [vmem:[%s3 + $0x78] sm:$0xff] %v265
  // Predicated region
  $region14: #{generator_forward.20} parent=0 // pred_check
    _
  $region15: #{generator_forward.20} parent=0 // pred_check_branch
    %299 = sbr.rel (0) target = $region17
  $region16: #{generator_forward.20} parent=0 // pred_region
    _
  $region17: #{generator_forward.20} parent=0 // pred_fallthru
    _
  // Predicated region
  $region18: #{generator_forward.20} parent=0 // pred_check
    _
  $region19: #{generator_forward.20} parent=0 // pred_check_branch
    %301 = sbr.rel (0) target = $region21
  $region20: #{generator_forward.20} parent=0 // pred_region
    _
  $region21: #{generator_forward.20} parent=0 // pred_fallthru
    _

// kernel: generator_forward.21
$region0: #{generator_forward.21}
  #allocation0 [shape = 'u32[]', space=smem, size = 0x4, offset = 0x4, fixed_abs, tag = 'smem constant byte address 0x4 - core index']
  #allocation1 [shape = 'u32[144,128]{1,0:T(1,128)}', space=vmem, size = 0x12000, scoped, tag = 'internal scratch']
  %s0 = inlined_call_operand.vmem [shape: bf16[2304,128], index: 0, kind: input, shape index: {}]
  %s1 = inlined_call_operand.vmem [shape: bf16[128,128], index: 1, kind: input, shape index: {}]
  %s2 = inlined_call_operand.vmem [shape: f32[1,128], index: 2, kind: input, shape index: {}]
  %s3 = inlined_call_operand.vmem [shape: f32[2304,128], index: 3, kind: output, shape index: {}]
  %s4 = sld [smem:[#allocation0]]
  $region45: #{generator_forward.21} parent=0
    _
  %s6 = ssub.s32 1, %s4
  %s7 = scalar_select 0, %s6, %s4
  loop: start=0, step=1, limit=11
  $region2: #{generator_forward.21} parent=0 // loop_pre_header
    _
  $region3: #{generator_forward.21} parent=0 // loop_header
    %s9 = sphi 0, %s13
    %p10 = scmp.ge.s32.totalorder %s9, 11
    %s19 = sphi 0, %s21
    %s22 = sphi 0, %s19
    %s23 = sphi 0, %s22
    %s39 = sphi 0, %s23
    %s43 = sphi 0, %s43
    %s45 = sphi 0, %s43
    %s46 = sphi 0, %s45
    %s60 = sphi 0, %s46
    %s64 = sphi 0, %s64
    %s66 = sphi 0, %s64
    %s67 = sphi 0, %s66
    %s81 = sphi 0, %s67
    %s87 = sphi 0, %s89
    %s90 = sphi 0, %s87
    %s91 = sphi 0, %s90
    %s107 = sphi 0, %s91
  $region4: #{generator_forward.21} parent=0 // loop_header_branch
    %12 = sbr.rel (%p10) target = $region8
  $region5: #{generator_forward.21} parent=0 // loop_body
    %s14 = ssub.s32 %s9, 1
    %s15 = ssub.s32 %s9, 2
    %s16 = sadd.s32 %s9, 1
    %s17 = ssub.s32 %s9, %s16
    %p18 = scmp.eq.s32.totalorder %s17, 0
    %s20 = sadd.s32 %s19, 1
    %s21 = scalar_select %p18, %s19, %s20
    %p24 = pneg %p18
    %p25 = scmp.eq.s32.totalorder %s9, 8
    %p26 = por %p24, %p25
    %p27 = scmp.ne.s32.totalorder %s19, %s22
    %p28 = scmp.eq.s32.totalorder %s9, 0
    %p29 = por %p27, %p28
    %p30 = scmp.ne.s32.totalorder %s19, %s22
    %p31 = scmp.eq.s32.totalorder %s14, 8
    %p32 = por %p30, %p31
    %p33 = scmp.ne.s32.totalorder %s22, %s23
    %p34 = scmp.eq.s32.totalorder %s14, 0
    %p35 = por %p33, %p34
    %p36 = scmp.ne.s32.totalorder %s22, %s23
    %p37 = scmp.eq.s32.totalorder %s15, 8
    %p38 = por %p36, %p37
    %p40 = scmp.ne.s32.totalorder %s23, %s39
    %p41 = scmp.eq.s32.totalorder %s15, 0
    %p42 = por %p40, %p41
    %s44 = sadd.s32 %s43, 1
    %p47 = scmp.eq.s32.totalorder %s9, 8
    %p48 = scmp.ne.s32.totalorder %s43, %s45
    %p49 = scmp.eq.s32.totalorder %s9, 0
    %p50 = por %p48, %p49
    %p51 = scmp.ne.s32.totalorder %s43, %s45
    %p52 = scmp.eq.s32.totalorder %s14, 8
    %p53 = por %p51, %p52
    %p54 = scmp.ne.s32.totalorder %s45, %s46
    %p55 = scmp.eq.s32.totalorder %s14, 0
    %p56 = por %p54, %p55
    %p57 = scmp.ne.s32.totalorder %s45, %s46
    %p58 = scmp.eq.s32.totalorder %s15, 8
    %p59 = por %p57, %p58
    %p61 = scmp.ne.s32.totalorder %s46, %s60
    %p62 = scmp.eq.s32.totalorder %s15, 0
    %p63 = por %p61, %p62
    %s65 = sadd.s32 %s64, 1
    %p68 = scmp.eq.s32.totalorder %s9, 8
    %p69 = scmp.ne.s32.totalorder %s64, %s66
    %p70 = scmp.eq.s32.totalorder %s9, 0
    %p71 = por %p69, %p70
    %p72 = scmp.ne.s32.totalorder %s64, %s66
    %p73 = scmp.eq.s32.totalorder %s14, 8
    %p74 = por %p72, %p73
    %p75 = scmp.ne.s32.totalorder %s66, %s67
    %p76 = scmp.eq.s32.totalorder %s14, 0
    %p77 = por %p75, %p76
    %p78 = scmp.ne.s32.totalorder %s66, %s67
    %p79 = scmp.eq.s32.totalorder %s15, 8
    %p80 = por %p78, %p79
    %p82 = scmp.ne.s32.totalorder %s67, %s81
    %p83 = scmp.eq.s32.totalorder %s15, 0
    %p84 = por %p82, %p83
    %s85 = ssub.s32 %s9, %s16
    %p86 = scmp.eq.s32.totalorder %s85, 0
    %s88 = sadd.s32 %s87, 1
    %s89 = scalar_select %p86, %s87, %s88
    %p92 = pneg %p86
    %p93 = scmp.eq.s32.totalorder %s9, 8
    %p94 = por %p92, %p93
    %p95 = scmp.ne.s32.totalorder %s87, %s90
    %p96 = scmp.eq.s32.totalorder %s9, 0
    %p97 = por %p95, %p96
    %p98 = scmp.ne.s32.totalorder %s87, %s90
    %p99 = scmp.eq.s32.totalorder %s14, 8
    %p100 = por %p98, %p99
    %p101 = scmp.ne.s32.totalorder %s90, %s91
    %p102 = scmp.eq.s32.totalorder %s14, 0
    %p103 = por %p101, %p102
    %p104 = scmp.ne.s32.totalorder %s90, %s91
    %p105 = scmp.eq.s32.totalorder %s15, 8
    %p106 = por %p104, %p105
    %p108 = scmp.ne.s32.totalorder %s91, %s107
    %p109 = scmp.eq.s32.totalorder %s15, 0
    %p110 = por %p108, %p109
    %p111 = scmp.le.s32.totalorder 1, %s9
    %p112 = scmp.lt.s32.totalorder %s9, 10
    %p113 = pnand %p111, %p112
    %p114 = pneg %p113
    // Predicated region
    $region9: #{generator_forward.21} parent=5 // pred_check
      _
    $region10: #{generator_forward.21} parent=5 // pred_check_branch
      %116 = sbr.rel (%p113) target = $region12
    $region11: #{generator_forward.21} parent=5 // pred_region
      %s117 = ssub.s32 %s9, 1
      // Predicated region
      $region13: #{generator_forward.21} parent=11 // pred_check
        %p118 = pneg %p56
      $region14: #{generator_forward.21} parent=11 // pred_check_branch
        %120 = sbr.rel (%p118) target = $region16
      $region15: #{generator_forward.21} parent=11 // pred_region
        _
      $region16: #{generator_forward.21} parent=11 // pred_fallthru
        _
      // Predicated region
      $region17: #{generator_forward.21} parent=11 // pred_check
        %p121 = pneg %p77
      $region18: #{generator_forward.21} parent=11 // pred_check_branch
        %123 = sbr.rel (%p121) target = $region20
      $region19: #{generator_forward.21} parent=11 // pred_region
        _
      $region20: #{generator_forward.21} parent=11 // pred_fallthru
        _
    $region12: #{generator_forward.21} parent=5 // pred_fallthru
      _
    %p124 = scmp.lt.s32.totalorder %s9, 9
    // Predicated region
    $region21: #{generator_forward.21} parent=5 // pred_check
      %p125 = pneg %p124
    $region22: #{generator_forward.21} parent=5 // pred_check_branch
      %127 = sbr.rel (%p125) target = $region24
    $region23: #{generator_forward.21} parent=5 // pred_region
      // Predicated region
      $region25: #{generator_forward.21} parent=23 // pred_check
        %p128 = pneg %p29
      $region26: #{generator_forward.21} parent=23 // pred_check_branch
        %130 = sbr.rel (%p128) target = $region28
      $region27: #{generator_forward.21} parent=23 // pred_region
        %s131 = smul.u32 32, %s9
        %p132 = scmp.lt.s32.totalorder %s131, 287
        %s133 = scalar_select %p132, %s131, 287
        %s134 = smul.addr %s133, 4
        %s135 = scalar_lea.vmem %s0, %s134
        %s136 = smul.u32 32, %s9
      $region28: #{generator_forward.21} parent=23 // pred_fallthru
        _
    $region24: #{generator_forward.21} parent=5 // pred_fallthru
      _
    %p137 = scmp.le.s32.totalorder 1, %s9
    %p138 = scmp.lt.s32.totalorder %s9, 10
    %p139 = pnand %p137, %p138
    %p140 = pneg %p139
    // Predicated region
    $region29: #{generator_forward.21} parent=5 // pred_check
      _
    $region30: #{generator_forward.21} parent=5 // pred_check_branch
      %142 = sbr.rel (%p139) target = $region32
    $region31: #{generator_forward.21} parent=5 // pred_region
      %s143 = ssub.s32 %s9, 1
      %s144 = smul.u32 32, %s14
      %p145 = scmp.lt.s32.totalorder %s144, 287
      %s146 = scalar_select %p145, %s144, 287
      %s147 = smul.addr %s146, 4
      %s148 = scalar_lea.vmem %s0, %s147
      %p149 = pneg %p35
      %p150 = pneg %p32
      %p151 = pneg %p56
      %p152 = pneg %p53
      %p153 = pneg %p77
      %p154 = pneg %p74
      %p155 = pneg %p103
      %p156 = pneg %p100
      %s157 = smul.u32 32, %s14
      %p158 = scmp.lt.s32.totalorder %s157, 287
      %s159 = scalar_select %p158, %s157, 287
      %s160 = smul.addr %s159, 8
      %s161 = scalar_lea.vmem %s3, %s160
      %s162 = smul.u32 32, %s14
      %p163 = scmp.lt.s32.totalorder %s162, 287
      %s164 = scalar_select %p163, %s162, 287
      %s165 = smul.addr %s164, 4
      %s166 = scalar_lea.vmem %s0, %s165
      %s167 = smul.u32 32, %s14
      %s168 = smul.u32 32, %s14
      %p169 = scmp.lt.s32.totalorder %s168, 287
      %s170 = scalar_select %p169, %s168, 287
      %s171 = smul.addr %s170, 8
      %s172 = scalar_lea.vmem %s3, %s171
      %s173 = smul.u32 32, %s14
      %v175 = vld [vmem:[%s166] sm:$0xf]
      %v176 = vld [vmem:[%s166 + $0x4] sm:$0xf]
      %v177 = vld [vmem:[%s166 + $0x8] sm:$0xf]
      %v178 = vld [vmem:[%s166 + $0xc] sm:$0xf]
      %v179 = vld [vmem:[%s166 + $0x10] sm:$0xf]
      %v180 = vld [vmem:[%s166 + $0x14] sm:$0xf]
      %v181 = vld [vmem:[%s166 + $0x18] sm:$0xf]
      %v182 = vld [vmem:[%s166 + $0x1c] sm:$0xf]
      %v183 = vld [vmem:[%s166 + $0x20] sm:$0xf]
      %v184 = vld [vmem:[%s166 + $0x24] sm:$0xf]
      %v185 = vld [vmem:[%s166 + $0x28] sm:$0xf]
      %v186 = vld [vmem:[%s166 + $0x2c] sm:$0xf]
      %v187 = vld [vmem:[%s166 + $0x30] sm:$0xf]
      %v188 = vld [vmem:[%s166 + $0x34] sm:$0xf]
      %v189 = vld [vmem:[%s166 + $0x38] sm:$0xf]
      %v190 = vld [vmem:[%s166 + $0x3c] sm:$0xf]
      %v191 = vld [vmem:[%s166 + $0x40] sm:$0xf]
      %v192 = vld [vmem:[%s166 + $0x44] sm:$0xf]
      %v193 = vld [vmem:[%s166 + $0x48] sm:$0xf]
      %v194 = vld [vmem:[%s166 + $0x4c] sm:$0xf]
      %v195 = vld [vmem:[%s166 + $0x50] sm:$0xf]
      %v196 = vld [vmem:[%s166 + $0x54] sm:$0xf]
      %v197 = vld [vmem:[%s166 + $0x58] sm:$0xf]
      %v198 = vld [vmem:[%s166 + $0x5c] sm:$0xf]
      %v199 = vld [vmem:[%s166 + $0x60] sm:$0xf]
      %v200 = vld [vmem:[%s166 + $0x64] sm:$0xf]
      %v201 = vld [vmem:[%s166 + $0x68] sm:$0xf]
      %v202 = vld [vmem:[%s166 + $0x6c] sm:$0xf]
      %v203 = vld [vmem:[%s166 + $0x70] sm:$0xf]
      %v204 = vld [vmem:[%s166 + $0x74] sm:$0xf]
      %v205 = vld [vmem:[%s166 + $0x78] sm:$0xf]
      %v206 = vld [vmem:[%s166 + $0x7c] sm:$0xf]
      %v207 = vld [vmem:[%s1] sm:$0xf]
      %v208 = vld [vmem:[%s1 + $0x4] sm:$0xf]
      %v209 = vld [vmem:[%s1 + $0x8] sm:$0xf]
      %v210 = vld [vmem:[%s1 + $0xc] sm:$0xf]
      %v211 = vld [vmem:[%s1 + $0x10] sm:$0xf]
      %v212 = vld [vmem:[%s1 + $0x14] sm:$0xf]
      %v213 = vld [vmem:[%s1 + $0x18] sm:$0xf]
      %v214 = vld [vmem:[%s1 + $0x1c] sm:$0xf]
      %v215 = vld [vmem:[%s1 + $0x20] sm:$0xf]
      %v216 = vld [vmem:[%s1 + $0x24] sm:$0xf]
      %v217 = vld [vmem:[%s1 + $0x28] sm:$0xf]
      %v218 = vld [vmem:[%s1 + $0x2c] sm:$0xf]
      %v219 = vld [vmem:[%s1 + $0x30] sm:$0xf]
      %v220 = vld [vmem:[%s1 + $0x34] sm:$0xf]
      %v221 = vld [vmem:[%s1 + $0x38] sm:$0xf]
      %v222 = vld [vmem:[%s1 + $0x3c] sm:$0xf]
      %v223 = vld [vmem:[%s2] sm:$0x1]
      %v225 = vlaneseq
      %v226 = vshrl.u32 %v225, 7
      %v227 = vsub.s32 0, %v226
      %v228 = vrot.slane %v223, %v227
      %v262 = vunpack.c.l.b16 %v175
      %v263 = vunpack.c.l.b16 %v176
      %v264 = vunpack.c.l.b16 %v177
      %v265 = vunpack.c.l.b16 %v178
      %v266 = vunpack.c.l.b16 %v179
      %v267 = vunpack.c.l.b16 %v180
      %v268 = vunpack.c.l.b16 %v181
      %v269 = vunpack.c.l.b16 %v182
      %v270 = vunpack.c.l.b16 %v183
      %v271 = vunpack.c.l.b16 %v184
      %v272 = vunpack.c.l.b16 %v185
      %v273 = vunpack.c.l.b16 %v186
      %v274 = vunpack.c.l.b16 %v187
      %v275 = vunpack.c.l.b16 %v188
      %v276 = vunpack.c.l.b16 %v189
      %v277 = vunpack.c.l.b16 %v190
      %v278 = vunpack.c.l.b16 %v191
      %v279 = vunpack.c.l.b16 %v192
      %v280 = vunpack.c.l.b16 %v193
      %v281 = vunpack.c.l.b16 %v194
      %v282 = vunpack.c.l.b16 %v195
      %v283 = vunpack.c.l.b16 %v196
      %v284 = vunpack.c.l.b16 %v197
      %v285 = vunpack.c.l.b16 %v198
      %v286 = vunpack.c.l.b16 %v199
      %v287 = vunpack.c.l.b16 %v200
      %v288 = vunpack.c.l.b16 %v201
      %v289 = vunpack.c.l.b16 %v202
      %v290 = vunpack.c.l.b16 %v203
      %v291 = vunpack.c.l.b16 %v204
      %v292 = vunpack.c.l.b16 %v205
      %v293 = vunpack.c.l.b16 %v206
      %v294 = vpack.c.b16 %v263, %v262
      %v295 = vpack.c.b16 %v265, %v264
      %v296 = vpack.c.b16 %v267, %v266
      %v297 = vpack.c.b16 %v269, %v268
      %v298 = vpack.c.b16 %v271, %v270
      %v299 = vpack.c.b16 %v273, %v272
      %v300 = vpack.c.b16 %v275, %v274
      %v301 = vpack.c.b16 %v277, %v276
      %v302 = vpack.c.b16 %v279, %v278
      %v303 = vpack.c.b16 %v281, %v280
      %v304 = vpack.c.b16 %v283, %v282
      %v305 = vpack.c.b16 %v285, %v284
      %v306 = vpack.c.b16 %v287, %v286
      %v307 = vpack.c.b16 %v289, %v288
      %v308 = vpack.c.b16 %v291, %v290
      %v309 = vpack.c.b16 %v293, %v292
      %v342 = vunpack.c.l.b16 %v207
      %v343 = vunpack.c.l.b16 %v208
      %v344 = vunpack.c.l.b16 %v209
      %v345 = vunpack.c.l.b16 %v210
      %v346 = vunpack.c.l.b16 %v211
      %v347 = vunpack.c.l.b16 %v212
      %v348 = vunpack.c.l.b16 %v213
      %v349 = vunpack.c.l.b16 %v214
      %v350 = vunpack.c.l.b16 %v215
      %v351 = vunpack.c.l.b16 %v216
      %v352 = vunpack.c.l.b16 %v217
      %v353 = vunpack.c.l.b16 %v218
      %v354 = vunpack.c.l.b16 %v219
      %v355 = vunpack.c.l.b16 %v220
      %v356 = vunpack.c.l.b16 %v221
      %v357 = vunpack.c.l.b16 %v222
      %v358 = vpack.c.b16 %v343, %v342
      %v359 = vpack.c.b16 %v345, %v344
      %v360 = vpack.c.b16 %v347, %v346
      %v361 = vpack.c.b16 %v349, %v348
      %v362 = vpack.c.b16 %v351, %v350
      %v363 = vpack.c.b16 %v353, %v352
      %v364 = vpack.c.b16 %v355, %v354
      %v365 = vpack.c.b16 %v357, %v356
      %374 = vmatprep.subr.bf16.mxu0 0
      %375 = vmatpush1.bf16.msra.mxu0 %v365
      %376 = vmatprep.subr.bf16.mxu0 0
      %377 = vmatpush1.bf16.msra.mxu0 %v364
      %378 = vmatprep.subr.bf16.mxu0 0
      %379 = vmatpush1.bf16.msra.mxu0 %v363
      %380 = vmatprep.subr.bf16.mxu0 0
      %381 = vmatpush1.bf16.msra.mxu0 %v362
      %382 = vmatprep.subr.bf16.mxu0 0
      %383 = vmatpush1.bf16.msra.mxu0 %v361
      %384 = vmatprep.subr.bf16.mxu0 0
      %385 = vmatpush1.bf16.msra.mxu0 %v360
      %386 = vmatprep.subr.bf16.mxu0 0
      %387 = vmatpush1.bf16.msra.mxu0 %v359
      %388 = vmatprep.subr.bf16.mxu0 0
      %389 = vmatpush1.bf16.msra.mxu0 %v358
      %390 = vmatprep.subr.bf16.mxu0 0
      %391 = vmatpush2.bf16.msra.mxu0 0
      %392 = vmatprep.subr.bf16.mxu0 0
      %393 = vmatpush2.bf16.msra.mxu0 0
      %394 = vmatprep.subr.bf16.mxu0 0
      %395 = vmatpush2.bf16.msra.mxu0 0
      %396 = vmatprep.subr.bf16.mxu0 0
      %397 = vmatpush2.bf16.msra.mxu0 0
      %398 = vmatprep.subr.bf16.mxu0 0
      %399 = vmatpush2.bf16.msra.mxu0 0
      %400 = vmatprep.subr.bf16.mxu0 0
      %401 = vmatpush2.bf16.msra.mxu0 0
      %402 = vmatprep.subr.bf16.mxu0 0
      %403 = vmatpush2.bf16.msra.mxu0 0
      %404 = vmatprep.subr.bf16.mxu0 0
      %405 = vmatpush2.bf16.msra.mxu0 0
      %406 = vmatprep.mubr.bf16.mxu0 0
      %407 = vmatmul.mubr.bf16.gmra.mxu0 %v294
      %v408 = vpop.f32.mrf.mxu0
      %v409 = vadd.f32 %v228, %v408
      %v410 = vpop.f32.mrf.mxu0
      %v411 = vpop.f32.mrf.mxu0
      %v412 = vadd.f32 %v228, %v411
      %v413 = vpop.f32.mrf.mxu0
      %414 = vmatprep.mubr.bf16.mxu0 0
      %415 = vmatmul.mubr.bf16.gmra.mxu0 %v295
      %v416 = vpop.f32.mrf.mxu0
      %v417 = vadd.f32 %v228, %v416
      %v418 = vpop.f32.mrf.mxu0
      %v419 = vpop.f32.mrf.mxu0
      %v420 = vadd.f32 %v228, %v419
      %v421 = vpop.f32.mrf.mxu0
      %422 = vmatprep.mubr.bf16.mxu0 0
      %423 = vmatmul.mubr.bf16.gmra.mxu0 %v296
      %v424 = vpop.f32.mrf.mxu0
      %v425 = vadd.f32 %v228, %v424
      %v426 = vpop.f32.mrf.mxu0
      %v427 = vpop.f32.mrf.mxu0
      %v428 = vadd.f32 %v228, %v427
      %v429 = vpop.f32.mrf.mxu0
      %430 = vmatprep.mubr.bf16.mxu0 0
      %431 = vmatmul.mubr.bf16.gmra.mxu0 %v297
      %v432 = vpop.f32.mrf.mxu0
      %v433 = vadd.f32 %v228, %v432
      %v434 = vpop.f32.mrf.mxu0
      %v435 = vpop.f32.mrf.mxu0
      %v436 = vadd.f32 %v228, %v435
      %v437 = vpop.f32.mrf.mxu0
      %438 = vmatprep.mubr.bf16.mxu0 0
      %439 = vmatmul.mubr.bf16.gmra.mxu0 %v298
      %v440 = vpop.f32.mrf.mxu0
      %v441 = vadd.f32 %v228, %v440
      %v442 = vpop.f32.mrf.mxu0
      %v443 = vpop.f32.mrf.mxu0
      %v444 = vadd.f32 %v228, %v443
      %v445 = vpop.f32.mrf.mxu0
      %446 = vmatprep.mubr.bf16.mxu0 0
      %447 = vmatmul.mubr.bf16.gmra.mxu0 %v299
      %v448 = vpop.f32.mrf.mxu0
      %v449 = vadd.f32 %v228, %v448
      %v450 = vpop.f32.mrf.mxu0
      %v451 = vpop.f32.mrf.mxu0
      %v452 = vadd.f32 %v228, %v451
      %v453 = vpop.f32.mrf.mxu0
      %454 = vmatprep.mubr.bf16.mxu0 0
      %455 = vmatmul.mubr.bf16.gmra.mxu0 %v300
      %v456 = vpop.f32.mrf.mxu0
      %v457 = vadd.f32 %v228, %v456
      %v458 = vpop.f32.mrf.mxu0
      %v459 = vpop.f32.mrf.mxu0
      %v460 = vadd.f32 %v228, %v459
      %v461 = vpop.f32.mrf.mxu0
      %462 = vmatprep.mubr.bf16.mxu0 0
      %463 = vmatmul.mubr.bf16.gmra.mxu0 %v301
      %v464 = vpop.f32.mrf.mxu0
      %v465 = vadd.f32 %v228, %v464
      %v466 = vpop.f32.mrf.mxu0
      %v467 = vpop.f32.mrf.mxu0
      %v468 = vadd.f32 %v228, %v467
      %v469 = vpop.f32.mrf.mxu0
      %470 = vmatprep.mubr.bf16.mxu0 0
      %471 = vmatmul.mubr.bf16.gmra.mxu0 %v302
      %v472 = vpop.f32.mrf.mxu0
      %v473 = vadd.f32 %v228, %v472
      %v474 = vpop.f32.mrf.mxu0
      %v475 = vpop.f32.mrf.mxu0
      %v476 = vadd.f32 %v228, %v475
      %v477 = vpop.f32.mrf.mxu0
      %478 = vmatprep.mubr.bf16.mxu0 0
      %479 = vmatmul.mubr.bf16.gmra.mxu0 %v303
      %v480 = vpop.f32.mrf.mxu0
      %v481 = vadd.f32 %v228, %v480
      %v482 = vpop.f32.mrf.mxu0
      %v483 = vpop.f32.mrf.mxu0
      %v484 = vadd.f32 %v228, %v483
      %v485 = vpop.f32.mrf.mxu0
      %486 = vmatprep.mubr.bf16.mxu0 0
      %487 = vmatmul.mubr.bf16.gmra.mxu0 %v304
      %v488 = vpop.f32.mrf.mxu0
      %v489 = vadd.f32 %v228, %v488
      %v490 = vpop.f32.mrf.mxu0
      %v491 = vpop.f32.mrf.mxu0
      %v492 = vadd.f32 %v228, %v491
      %v493 = vpop.f32.mrf.mxu0
      %494 = vmatprep.mubr.bf16.mxu0 0
      %495 = vmatmul.mubr.bf16.gmra.mxu0 %v305
      %v496 = vpop.f32.mrf.mxu0
      %v497 = vadd.f32 %v228, %v496
      %v498 = vpop.f32.mrf.mxu0
      %v499 = vpop.f32.mrf.mxu0
      %v500 = vadd.f32 %v228, %v499
      %v501 = vpop.f32.mrf.mxu0
      %502 = vmatprep.mubr.bf16.mxu0 0
      %503 = vmatmul.mubr.bf16.gmra.mxu0 %v306
      %v504 = vpop.f32.mrf.mxu0
      %v505 = vadd.f32 %v228, %v504
      %v506 = vpop.f32.mrf.mxu0
      %v507 = vpop.f32.mrf.mxu0
      %v508 = vadd.f32 %v228, %v507
      %v509 = vpop.f32.mrf.mxu0
      %510 = vmatprep.mubr.bf16.mxu0 0
      %511 = vmatmul.mubr.bf16.gmra.mxu0 %v307
      %v512 = vpop.f32.mrf.mxu0
      %v513 = vadd.f32 %v228, %v512
      %v514 = vpop.f32.mrf.mxu0
      %v515 = vpop.f32.mrf.mxu0
      %v516 = vadd.f32 %v228, %v515
      %v517 = vpop.f32.mrf.mxu0
      %518 = vmatprep.mubr.bf16.mxu0 0
      %519 = vmatmul.mubr.bf16.gmra.mxu0 %v308
      %v520 = vpop.f32.mrf.mxu0
      %v521 = vadd.f32 %v228, %v520
      %v522 = vpop.f32.mrf.mxu0
      %v523 = vpop.f32.mrf.mxu0
      %v524 = vadd.f32 %v228, %v523
      %v525 = vpop.f32.mrf.mxu0
      %526 = vmatprep.mubr.bf16.mxu0 0
      %527 = vmatmul.mubr.bf16.gmra.mxu0 %v309
      %v528 = vpop.f32.mrf.mxu0
      %v529 = vadd.f32 %v228, %v528
      %v530 = vpop.f32.mrf.mxu0
      %v531 = vpop.f32.mrf.mxu0
      %v532 = vadd.f32 %v228, %v531
      %v533 = vpop.f32.mrf.mxu0
      %534 = vdwg.mxu0
      %v535 = vtanh.pop %v409
      %v536 = vtanh.pop %v412
      %v537 = vtanh.pop %v417
      %v538 = vtanh.pop %v420
      %v539 = vtanh.pop %v425
      %v540 = vtanh.pop %v428
      %v541 = vtanh.pop %v433
      %v542 = vtanh.pop %v436
      %v543 = vtanh.pop %v441
      %v544 = vtanh.pop %v444
      %v545 = vtanh.pop %v449
      %v546 = vtanh.pop %v452
      %v547 = vtanh.pop %v457
      %v548 = vtanh.pop %v460
      %v549 = vtanh.pop %v465
      %v550 = vtanh.pop %v468
      %v551 = vtanh.pop %v473
      %v552 = vtanh.pop %v476
      %v553 = vtanh.pop %v481
      %v554 = vtanh.pop %v484
      %v555 = vtanh.pop %v489
      %v556 = vtanh.pop %v492
      %v557 = vtanh.pop %v497
      %v558 = vtanh.pop %v500
      %v559 = vtanh.pop %v505
      %v560 = vtanh.pop %v508
      %v561 = vtanh.pop %v513
      %v562 = vtanh.pop %v516
      %v563 = vtanh.pop %v521
      %v564 = vtanh.pop %v524
      %v565 = vtanh.pop %v529
      %v566 = vtanh.pop %v532
      %567 = vst [vmem:[%s172] sm:$0xff] %v535
      %568 = vst [vmem:[%s172 + $0x8] sm:$0xff] %v536
      %569 = vst [vmem:[%s172 + $0x10] sm:$0xff] %v537
      %570 = vst [vmem:[%s172 + $0x18] sm:$0xff] %v538
      %571 = vst [vmem:[%s172 + $0x20] sm:$0xff] %v539
      %572 = vst [vmem:[%s172 + $0x28] sm:$0xff] %v540
      %573 = vst [vmem:[%s172 + $0x30] sm:$0xff] %v541
      %574 = vst [vmem:[%s172 + $0x38] sm:$0xff] %v542
      %575 = vst [vmem:[%s172 + $0x40] sm:$0xff] %v543
      %576 = vst [vmem:[%s172 + $0x48] sm:$0xff] %v544
      %577 = vst [vmem:[%s172 + $0x50] sm:$0xff] %v545
      %578 = vst [vmem:[%s172 + $0x58] sm:$0xff] %v546
      %579 = vst [vmem:[%s172 + $0x60] sm:$0xff] %v547
      %580 = vst [vmem:[%s172 + $0x68] sm:$0xff] %v548
      %581 = vst [vmem:[%s172 + $0x70] sm:$0xff] %v549
      %582 = vst [vmem:[%s172 + $0x78] sm:$0xff] %v550
      %583 = vst [vmem:[%s172 + $0x80] sm:$0xff] %v551
      %584 = vst [vmem:[%s172 + $0x88] sm:$0xff] %v552
      %585 = vst [vmem:[%s172 + $0x90] sm:$0xff] %v553
      %586 = vst [vmem:[%s172 + $0x98] sm:$0xff] %v554
      %587 = vst [vmem:[%s172 + $0xa0] sm:$0xff] %v555
      %588 = vst [vmem:[%s172 + $0xa8] sm:$0xff] %v556
      %589 = vst [vmem:[%s172 + $0xb0] sm:$0xff] %v557
      %590 = vst [vmem:[%s172 + $0xb8] sm:$0xff] %v558
      %591 = vst [vmem:[%s172 + $0xc0] sm:$0xff] %v559
      %592 = vst [vmem:[%s172 + $0xc8] sm:$0xff] %v560
      %593 = vst [vmem:[%s172 + $0xd0] sm:$0xff] %v561
      %594 = vst [vmem:[%s172 + $0xd8] sm:$0xff] %v562
      %595 = vst [vmem:[%s172 + $0xe0] sm:$0xff] %v563
      %596 = vst [vmem:[%s172 + $0xe8] sm:$0xff] %v564
      %597 = vst [vmem:[%s172 + $0xf0] sm:$0xff] %v565
      %598 = vst [vmem:[%s172 + $0xf8] sm:$0xff] %v566
      %s599 = smul.u32 32, %s14
      %p600 = scmp.lt.s32.totalorder %s599, 287
      %s601 = scalar_select %p600, %s599, 287
      %s602 = smul.addr %s601, 8
      %s603 = scalar_lea.vmem %s3, %s602
      // Predicated region
      $region33: #{generator_forward.21} parent=31 // pred_check
        %p604 = pneg %p100
      $region34: #{generator_forward.21} parent=31 // pred_check_branch
        %606 = sbr.rel (%p604) target = $region36
      $region35: #{generator_forward.21} parent=31 // pred_region
        %s607 = smul.u32 32, %s14
      $region36: #{generator_forward.21} parent=31 // pred_fallthru
        _
    $region32: #{generator_forward.21} parent=5 // pred_fallthru
      _
    %p608 = scmp.le.s32.totalorder 2, %s9
    // Predicated region
    $region37: #{generator_forward.21} parent=5 // pred_check
      %p609 = pneg %p608
    $region38: #{generator_forward.21} parent=5 // pred_check_branch
      %611 = sbr.rel (%p609) target = $region40
    $region39: #{generator_forward.21} parent=5 // pred_region
      %s612 = ssub.s32 %s9, 2
      // Predicated region
      $region41: #{generator_forward.21} parent=39 // pred_check
        %p613 = pneg %p106
      $region42: #{generator_forward.21} parent=39 // pred_check_branch
        %615 = sbr.rel (%p613) target = $region44
      $region43: #{generator_forward.21} parent=39 // pred_region
        %s616 = smul.u32 32, %s15
        %p617 = scmp.lt.s32.totalorder %s616, 287
        %s618 = scalar_select %p617, %s616, 287
        %s619 = smul.addr %s618, 8
        %s620 = scalar_lea.vmem %s3, %s619
      $region44: #{generator_forward.21} parent=39 // pred_fallthru
        _
    $region40: #{generator_forward.21} parent=5 // pred_fallthru
      _
  $region6: #{generator_forward.21} parent=0 // loop_footer
    %s13 = sadd.s32 1, %s9
  $region7: #{generator_forward.21} parent=0 // loop_footer_branch
    %8 = sbr.rel target = $region3
  $region8: #{generator_forward.21} parent=0 // loop_exit
    _

</llo_original>
